<compile_context>
chip_gen: v5e
topology: v5e:2x2
jax: 0.10.0
libtpu: 0.0.40
codegen_flags: <defaults>
</compile_context>

<pallas_src>
import functools

import jax
import jax.numpy as jnp
from jax.experimental import pallas as pl
from jax.experimental.pallas import tpu as pltpu

HIDDEN_DIM = 256          # fixed in the torch module
HIDDEN_LAYER_DIM = 256    # fixed in the torch module
NUM_HIDDEN_LAYERS = 6     # fixed in the torch module (plus one input layer)


def _round_up(n, m):
  return -(-n // m) * m


def _pad_axis_to(x, target, axis):
  pad = target - x.shape[axis]
  if pad <= 0:
    return x
  widths = [(0, 0)] * x.ndim
  widths[axis] = (0, pad)
  return jnp.pad(x, widths)


def _vmem_limit_bytes():
  """Generation-aware VMEM limit: ~105 MiB on v5e/v6e (128 MiB physical),
  ~52 MiB on v7x (64 MiB physical)."""
  try:
    cap = pltpu.get_tpu_info().vmem_capacity_bytes
  except Exception:          # conservative fallback if the query is unavailable
    cap = 64 * 1024 * 1024
  return max(32 * 1024 * 1024, min(int(cap * 0.82), cap - (8 << 20)))


def _plan_tiles(n_pad, g_pad, out_pad, vmem_limit):
  """Pick (tm, tk) as large as the VMEM budget allows; multiples of 256."""
  hd, hld = HIDDEN_DIM, HIDDEN_LAYER_DIM
  fixed = (2 * n_pad * hd * 2                          # resident ping-pong H (bf16)
           + g_pad * hd * 4                            # pooled accumulator
           + 2 * (hd * hd * 2 + hd * 4)                # double-buffered W_l / b_l
           + 2 * g_pad * out_pad * 4                   # output block (dbl-buffered)
           + (hd * hld + hld + hld * out_pad + out_pad) * 4  # run_scoped head
           + (6 << 20))                                # compiler-internal headroom
  budget = vmem_limit - fixed
  for tm in (512, 256):
    if n_pad % tm:
      continue
    for tk in (n_pad, 4096, 2048, 1024, 512, 256):
      if tk > n_pad or n_pad % tk:
        continue
      need = (2 * tm * tk * 2          # double-buffered A tile (bf16)
              + tm * hd * 4            # f32 row-tile accumulator
              + 2 * g_pad * tm * 2)    # double-buffered P tile (bf16)
      if need <= budget:
        return tm, tk
  return 256, 256


# ---------------------------------------------------------------------------
# Fused Pallas kernel: conv stack + global_mean_pool + MLP head
# ---------------------------------------------------------------------------
def _fused_gcn_kernel(a_ref, x0_hbm, w_ref, b_ref, p_ref,
                      w1_hbm, b1_hbm, w2_hbm, b2_hbm,
                      out_ref,
                      acc_ref, pooled_ref, h_ref, copy_sem,
                      *, tm, tk, n_pad, out_pad):
  hd, hld = HIDDEN_DIM, HIDDEN_LAYER_DIM
  l = pl.program_id(0)            # conv layer
  i = pl.program_id(1)            # output row tile
  k = pl.program_id(2)            # reduction tile over nodes
  nl = pl.num_programs(0)
  ni = pl.num_programs(1)
  nk = pl.num_programs(2)

  # One-time prologue: DMA the (padded, bf16) input node features from HBM
  # into ping-pong buffer 0 of the resident H scratch.
  @pl.when((l == 0) & (i == 0) & (k == 0))
  def _():
    cp = pltpu.make_async_copy(x0_hbm, h_ref.at[pl.ds(0, n_pad)], copy_sem)
    cp.start()
    cp.wait()

  src_base = (l % 2) * n_pad      # rows of h_ref holding layer l's input H
  dst_base = n_pad - src_base     # rows of h_ref receiving layer l's output H

  @pl.when(k == 0)
  def _():
    acc_ref[...] = jnp.zeros_like(acc_ref)

  # acc += A_hat[i-tile, k-tile] @ H_in[k-tile]   (bf16 MXU, f32 accumulation)
  h_in = h_ref[pl.ds(pl.multiple_of(src_base + k * tk, tk), tk), :]
  acc_ref[...] += jnp.dot(a_ref[...], h_in, preferred_element_type=jnp.float32)

  row = pl.multiple_of(i * tm, tm)
  is_k_last = k == nk - 1
  is_last_layer = l == nl - 1

  @pl.when(is_k_last)
  def _():
    # Layer epilogue for this row tile: H_out = ReLU((A_hat @ H) @ W_l + b_l)
    hw = jnp.dot(acc_ref[...].astype(jnp.bfloat16), w_ref[...],
                 preferred_element_type=jnp.float32) + b_ref[...]
    h_ref[pl.ds(pl.multiple_of(dst_base + row, tm), tm), :] = (
        jnp.maximum(hw, 0.0).astype(h_ref.dtype))

  @pl.when(is_k_last & is_last_layer & (i == 0))
  def _():
    pooled_ref[...] = jnp.zeros_like(pooled_ref)

  @pl.when(is_k_last & is_last_layer)
  def _():
    # Fused global_mean_pool: pooled += P[:, i-tile] @ H_out[i-tile]
    h_tile = h_ref[pl.ds(pl.multiple_of(dst_base + row, tm), tm), :]
    pooled_ref[...] += jnp.dot(p_ref[...], h_tile,
                               preferred_element_type=jnp.float32)

  @pl.when(is_k_last & is_last_layer & (i == ni - 1))
  def _():
    # Fused readout MLP (runs exactly once): the head weights live in HBM and
    # are DMA'd into run_scoped VMEM only here, so they never occupy
    # double-buffered VMEM for the rest of the kernel.
    def head(w1_v, b1_v, w2_v, b2_v):
      for src, dst in ((w1_hbm, w1_v), (b1_hbm, b1_v),
                       (w2_hbm, w2_v), (b2_hbm, b2_v)):
        cp = pltpu.make_async_copy(src, dst, copy_sem)
        cp.start()
        cp.wait()
      h1 = jnp.maximum(
          jnp.dot(pooled_ref[...], w1_v[...],
                  preferred_element_type=jnp.float32) + b1_v[...], 0.0)
      out_ref[...] = (jnp.dot(h1, w2_v[...],
                              preferred_element_type=jnp.float32) + b2_v[...])

    pl.run_scoped(head,
                  pltpu.VMEM((hd, hld), jnp.float32),
                  pltpu.VMEM((1, hld), jnp.float32),
                  pltpu.VMEM((hld, out_pad), jnp.float32),
                  pltpu.VMEM((1, out_pad), jnp.float32))


# ---------------------------------------------------------------------------
# Graph preprocessing helpers (plain JAX, fused into the single jit below)
# ---------------------------------------------------------------------------
def normalized_adjacency(adj):
  # A_hat = D^-1/2 (A + I) D^-1/2
  n = adj.shape[0]
  a = adj + jnp.eye(n, dtype=jnp.float32)
  deg = jnp.sum(a, axis=1)
  dinv = jnp.where(deg > 0, 1.0 / jnp.sqrt(deg), 0.0)
  return a * dinv[:, None] * dinv[None, :]


def pooling_matrix(batch, num_graphs, num_nodes):
  # P[g, i] = 1/|graph g|  if node i in graph g  (global_mean_pool)
  onehot = (batch[None, :] == jnp.arange(num_graphs)[:, None]).astype(jnp.float32)
  counts = jnp.maximum(jnp.sum(onehot, axis=1, keepdims=True), 1.0)
  return onehot / counts


# ---------------------------------------------------------------------------
# Model wrapper: one jit over preprocessing + the single fused pallas_call
# ---------------------------------------------------------------------------
@functools.partial(jax.jit,
                   static_argnames=("num_graphs", "output_dim", "tm", "tk"))
def orthogonal_gcn_forward(params, x, adj, batch, num_graphs, output_dim,
                           tm=None, tk=None):
  n, d_in = x.shape
  # TODO(synk): stacked-weight fusion assumes input_dim <= HIDDEN_DIM (true for
  # typical graph-regression inputs); larger input dims would need a separate
  # first-layer kernel.
  assert d_in <= HIDDEN_DIM
  num_layers = len(params["conv"])
  hd, hld = HIDDEN_DIM, HIDDEN_LAYER_DIM

  # Pad nodes to a multiple of 512 so the big-tile regime is always available.
  n_pad = max(512, _round_up(n, 512))
  g_pad = max(8, _round_up(num_graphs, 8))
  out_pad = max(128, _round_up(output_dim, 128))

  vmem_limit = _vmem_limit_bytes()
  auto_tm, auto_tk = _plan_tiles(n_pad, g_pad, out_pad, vmem_limit)
  tm = auto_tm if tm is None else tm
  tk = auto_tk if tk is None else tk
  ni, nk = n_pad // tm, n_pad // tk

  a_hat = normalized_adjacency(adj)
  p = pooling_matrix(batch, num_graphs, n)

  # Explicit zero padding: padded A_hat / P columns are exact zeros so padded
  # node rows (which become ReLU(b)) never contaminate real rows / pooling.
  a_p = _pad_axis_to(_pad_axis_to(a_hat, n_pad, 0), n_pad, 1).astype(jnp.bfloat16)
  x_p = _pad_axis_to(_pad_axis_to(x, n_pad, 0), hd, 1).astype(jnp.bfloat16)
  p_p = _pad_axis_to(_pad_axis_to(p, g_pad, 0), n_pad, 1).astype(jnp.bfloat16)

  # Stack conv weights once (layer 0's W zero-row-padded up to HIDDEN_DIM).
  w_stack = jnp.stack([_pad_axis_to(w, hd, 0).astype(jnp.bfloat16)
                       for (w, _) in params["conv"]])          # [L, hd, hd] bf16
  b_stack = jnp.stack([b for (_, b) in params["conv"]])        # [L, 1,  hd] f32

  w1, b1 = params["hidden_w"], params["hidden_b"]
  w2 = _pad_axis_to(params["out_w"], out_pad, 1)
  b2 = _pad_axis_to(params["out_b"], out_pad, 1)

  flops = (num_layers * (2 * n_pad * n_pad * hd + 2 * n_pad * hd * hd)
           + 2 * g_pad * n_pad * hd + 2 * g_pad * hd * hld
           + 2 * g_pad * hld * out_pad)
  bytes_accessed = (num_layers * n_pad * n_pad * 2      # A_hat stream per layer
                    + n_pad * hd * 2                    # x0 (DMA'd once)
                    + num_layers * (hd * hd * 2 + hd * 4)
                    + g_pad * n_pad * 2                 # P (streamed once)
                    + (hd * hld + hld * out_pad) * 4
                    + g_pad * out_pad * 4)

  last_layer = num_layers - 1
  kernel = functools.partial(_fused_gcn_kernel, tm=tm, tk=tk, n_pad=n_pad,
                             out_pad=out_pad)

  out = pl.pallas_call(
      kernel,
      out_shape=jax.ShapeDtypeStruct((g_pad, out_pad), jnp.float32),
      grid_spec=pltpu.PrefetchScalarGridSpec(
          num_scalar_prefetch=0,
          grid=(num_layers, ni, nk),
          in_specs=[
              pl.BlockSpec((tm, tk), lambda l, i, k: (i, k)),           # A_hat
              pl.BlockSpec(memory_space=pl.ANY),                        # x0 (HBM)
              pl.BlockSpec((None, hd, hd), lambda l, i, k: (l, 0, 0)),  # W_l
              pl.BlockSpec((None, 1, hd), lambda l, i, k: (l, 0, 0)),   # b_l
              # P tile only advances on the last layer -> no per-layer re-stream
              pl.BlockSpec((g_pad, tm),
                           lambda l, i, k: (0, jnp.where(l == last_layer, i, 0))),
              pl.BlockSpec(memory_space=pl.ANY),                        # W1 (HBM)
              pl.BlockSpec(memory_space=pl.ANY),                        # b1 (HBM)
              pl.BlockSpec(memory_space=pl.ANY),                        # W2 (HBM)
              pl.BlockSpec(memory_space=pl.ANY),                        # b2 (HBM)
          ],
          out_specs=pl.BlockSpec((g_pad, out_pad), lambda l, i, k: (0, 0)),
          scratch_shapes=[
              pltpu.VMEM((tm, hd), jnp.float32),          # f32 accumulator
              pltpu.VMEM((g_pad, hd), jnp.float32),       # pooled accumulator
              pltpu.VMEM((2 * n_pad, hd), jnp.bfloat16),  # ping-pong H buffer
              pltpu.SemaphoreType.DMA(()),                # prologue/head DMA sem
          ]),
      compiler_params=pltpu.CompilerParams(
          # Every grid axis carries a data dependency through the resident
          # H / accumulators, so all axes are sequential by design.
          # TODO(synk): v7x dual-TensorCore sharding would require H/pooled in
          # shared memory plus core barriers.
          dimension_semantics=("arbitrary", "arbitrary", "arbitrary"),
          vmem_limit_bytes=vmem_limit),
      cost_estimate=pl.CostEstimate(flops=flops, transcendentals=0,
                                    bytes_accessed=bytes_accessed),
  )(a_p, x_p, w_stack, b_stack, p_p, w1, b1, w2, b2)

  return jnp.squeeze(out[:num_graphs, :output_dim])


# ---------------------------------------------------------------------------
# Parameter init + pure-JAX references
# ---------------------------------------------------------------------------
def init_params(key, input_dim, output_dim):
  dims = [input_dim] + [HIDDEN_DIM] * (NUM_HIDDEN_LAYERS + 1)
  params = {"conv": []}
  for i in range(len(dims) - 1):
    key, kw = jax.random.split(key)
    scale = (2.0 / (dims[i] + dims[i + 1])) ** 0.5
    w = scale * jax.random.normal(kw, (dims[i], dims[i + 1]), jnp.float32)
    b = jnp.zeros((1, dims[i + 1]), jnp.float32)
    params["conv"].append((w, b))
  key, k1, k2 = jax.random.split(key, 3)
  params["hidden_w"] = (2.0 / (HIDDEN_DIM + HIDDEN_LAYER_DIM)) ** 0.5 * \
      jax.random.normal(k1, (HIDDEN_DIM, HIDDEN_LAYER_DIM), jnp.float32)
  params["hidden_b"] = jnp.zeros((1, HIDDEN_LAYER_DIM), jnp.float32)
  params["out_w"] = (2.0 / (HIDDEN_LAYER_DIM + output_dim)) ** 0.5 * \
      jax.random.normal(k2, (HIDDEN_LAYER_DIM, output_dim), jnp.float32)
  params["out_b"] = jnp.zeros((1, output_dim), jnp.float32)
  return params


def reference_forward_f32(params, x, adj, batch, num_graphs, output_dim):
  a_hat = normalized_adjacency(adj)
  p = pooling_matrix(batch, num_graphs, x.shape[0])
  h = x
  for (w, b) in params["conv"]:
    h = jnp.maximum(a_hat @ h @ w + b, 0.0)
  pooled = p @ h
  h1 = jnp.maximum(pooled @ params["hidden_w"] + params["hidden_b"], 0.0)
  out = h1 @ params["out_w"] + params["out_b"]
  return jnp.squeeze(out[:, :output_dim])


def reference_forward_mixed(params, x, adj, batch, num_graphs, output_dim):
  # Mirrors the kernel's bf16/f32 mixed-precision choices.
  a_hat = normalized_adjacency(adj).astype(jnp.bfloat16)
  p = pooling_matrix(batch, num_graphs, x.shape[0]).astype(jnp.bfloat16)
  h = x.astype(jnp.bfloat16)
  for (w, b) in params["conv"]:
    agg = jnp.dot(a_hat, h, preferred_element_type=jnp.float32)
    hw = jnp.dot(agg.astype(jnp.bfloat16), w.astype(jnp.bfloat16),
                 preferred_element_type=jnp.float32) + b
    h = jnp.maximum(hw, 0.0).astype(jnp.bfloat16)
  pooled = jnp.dot(p, h, preferred_element_type=jnp.float32)
  h1 = jnp.maximum(pooled @ params["hidden_w"] + params["hidden_b"], 0.0)
  out = h1 @ params["out_w"] + params["out_b"]
  return jnp.squeeze(out[:, :output_dim])


if __name__ == "__main__":
  key = jax.random.PRNGKey(0)

  # Small synthetic graph batch: 4 graphs x 40 nodes -> N=160 pads to 512 with
  # auto-chosen big tiles (tm=tk=512 -> grid collapses to one step per layer).
  num_graphs = 4
  nodes_per_graph = 40
  n_nodes = num_graphs * nodes_per_graph
  input_dim = 8
  output_dim = 1

  key, kx, ka = jax.random.split(key, 3)
  x = jax.random.normal(kx, (n_nodes, input_dim), jnp.float32)
  batch = jnp.repeat(jnp.arange(num_graphs), nodes_per_graph)

  # Block-diagonal random symmetric adjacency (no cross-graph edges).
  rand = jax.random.uniform(ka, (n_nodes, n_nodes))
  same_graph = (batch[:, None] == batch[None, :]).astype(jnp.float32)
  adj = ((rand + rand.T) * 0.5 > 0.6).astype(jnp.float32) * same_graph
  adj = adj * (1.0 - jnp.eye(n_nodes, dtype=jnp.float32))

  params = init_params(jax.random.PRNGKey(0), input_dim, output_dim)

  out = orthogonal_gcn_forward(params, x, adj, batch,
                               num_graphs=num_graphs, output_dim=output_dim)
  out = jax.block_until_ready(out)

  ref_mixed = reference_forward_mixed(params, x, adj, batch, num_graphs,
                                      output_dim)
  ref_f32 = reference_forward_f32(params, x, adj, batch, num_graphs,
                                  output_dim)

  assert out.shape == ref_f32.shape == (num_graphs,)
  assert jnp.allclose(out, ref_mixed, atol=1e-2, rtol=1e-2), (out, ref_mixed)
  assert jnp.allclose(out, ref_f32, atol=5e-2, rtol=5e-2), (out, ref_f32)

  print("KERNEL_OK")
</pallas_src>

<mosaic_0001>
module attributes {stable_mosaic.version = 11 : i64} {
  func.func @_fused_gcn_kernel(%arg0: i32, %arg1: i32, %arg2: i32, %arg3: memref<512x512xbf16, #tpu.memory_space<vmem>>, %arg4: memref<512x256xbf16, #tpu.memory_space<any>>, %arg5: memref<1x256x256xbf16, #tpu.memory_space<vmem>>, %arg6: memref<1x1x256xf32, #tpu.memory_space<vmem>>, %arg7: memref<8x512xbf16, #tpu.memory_space<vmem>>, %arg8: memref<256x256xf32, #tpu.memory_space<any>>, %arg9: memref<1x256xf32, #tpu.memory_space<any>>, %arg10: memref<256x128xf32, #tpu.memory_space<any>>, %arg11: memref<1x128xf32, #tpu.memory_space<any>>, %arg12: memref<8x128xf32, #tpu.memory_space<vmem>>, %arg13: memref<512x256xf32, #tpu.memory_space<vmem>>, %arg14: memref<8x256xf32, #tpu.memory_space<vmem>>, %arg15: memref<1024x256xbf16, #tpu.memory_space<vmem>>, %arg16: memref<!tpu.dma_semaphore, #tpu.memory_space<semaphore_mem>>) attributes {dimension_semantics = [#tpu.dimension_semantics<arbitrary>, #tpu.dimension_semantics<arbitrary>, #tpu.dimension_semantics<arbitrary>], iteration_bounds = array<i64: 7, 1, 1>, scalar_prefetch = 0 : i64, scratch_operands = 4 : i64, tpu.core_type = #tpu.core_type<tc>, window_params = [{transform_indices = @transform_0, window_bounds = array<i64: 512, 512>}, {}, {transform_indices = @transform_2, window_bounds = array<i64: 1, 256, 256>}, {transform_indices = @transform_3, window_bounds = array<i64: 1, 1, 256>}, {transform_indices = @transform_4, window_bounds = array<i64: 8, 512>}, {}, {}, {}, {}, {pipeline_mode = #tpu.pipeline_mode<synchronous>, transform_indices = @transform_9, window_bounds = array<i64: 8, 128>}]} {
    %c0_i32 = arith.constant 0 : i32
    %0 = arith.cmpi eq, %arg0, %c0_i32 : i32
    %c0_i32_0 = arith.constant 0 : i32
    %1 = arith.cmpi eq, %arg1, %c0_i32_0 : i32
    %2 = arith.andi %0, %1 : i1
    %c0_i32_1 = arith.constant 0 : i32
    %3 = arith.cmpi eq, %arg2, %c0_i32_1 : i32
    %4 = arith.andi %2, %3 : i1
    %5 = arith.extui %4 : i1 to i32
    %c0_i32_2 = arith.constant 0 : i32
    %6 = arith.cmpi ne, %5, %c0_i32_2 : i32
    scf.if %6 {
      %c0_i32_25 = arith.constant 0 : i32
      %c0_i32_26 = arith.constant 0 : i32
      %51 = tpu.memref_slice %arg15[%c0_i32_25, %c0_i32_26] : memref<1024x256xbf16, #tpu.memory_space<vmem>> -> memref<512x256xbf16, #tpu.memory_space<vmem>>
      tpu.enqueue_dma source(%arg4 : memref<512x256xbf16, #tpu.memory_space<any>>) target(%51 : memref<512x256xbf16, #tpu.memory_space<vmem>>) target_semaphore(%arg16 : memref<!tpu.dma_semaphore, #tpu.memory_space<semaphore_mem>>)
      %c0_i32_27 = arith.constant 0 : i32
      %c0_i32_28 = arith.constant 0 : i32
      %52 = tpu.memref_slice %arg15[%c0_i32_27, %c0_i32_28] : memref<1024x256xbf16, #tpu.memory_space<vmem>> -> memref<512x256xbf16, #tpu.memory_space<vmem>>
      tpu.wait_dma2 semaphore(%arg16 : memref<!tpu.dma_semaphore, #tpu.memory_space<semaphore_mem>>) src(%arg4 : memref<512x256xbf16, #tpu.memory_space<any>>) dst(%52 : memref<512x256xbf16, #tpu.memory_space<vmem>>)
    } else {
    }
    %c2_i32 = arith.constant 2 : i32
    %c0_i32_3 = arith.constant 0 : i32
    %7 = arith.cmpi eq, %c2_i32, %c0_i32_3 : i32
    %c1_i32 = arith.constant 1 : i32
    %8 = arith.select %7, %c1_i32, %c2_i32 : i32
    %9 = arith.remsi %arg0, %8 : i32
    %c0_i32_4 = arith.constant 0 : i32
    %10 = arith.cmpi ne, %9, %c0_i32_4 : i32
    %c0_i32_5 = arith.constant 0 : i32
    %11 = arith.cmpi slt, %9, %c0_i32_5 : i32
    %c0_i32_6 = arith.constant 0 : i32
    %12 = arith.cmpi slt, %8, %c0_i32_6 : i32
    %13 = arith.xori %11, %12 : i1
    %14 = arith.andi %13, %10 : i1
    %15 = arith.addi %9, %8 : i32
    %16 = arith.select %14, %15, %9 : i32
    %c512_i32 = arith.constant 512 : i32
    %17 = arith.muli %16, %c512_i32 : i32
    %c512_i32_7 = arith.constant 512 : i32
    %18 = arith.subi %c512_i32_7, %17 : i32
    %c0_i32_8 = arith.constant 0 : i32
    %19 = arith.cmpi eq, %arg2, %c0_i32_8 : i32
    %20 = arith.extui %19 : i1 to i32
    %c0_i32_9 = arith.constant 0 : i32
    %21 = arith.cmpi ne, %20, %c0_i32_9 : i32
    scf.if %21 {
      %cst_25 = arith.constant 0.000000e+00 : f32
      %51 = vector.broadcast %cst_25 : f32 to vector<512x256xf32>
      %c0_26 = arith.constant 0 : index
      %c0_27 = arith.constant 0 : index
      %52 = vector.load %arg13[%c0_26, %c0_27] : memref<512x256xf32, #tpu.memory_space<vmem>>, vector<512x256xf32>
      tpu.vector_store %arg13[%c0_26, %c0_27], %51 {strides = array<i32>} : memref<512x256xf32, #tpu.memory_space<vmem>>, vector<512x256xf32>,
    } else {
    }
    %c512_i32_10 = arith.constant 512 : i32
    %22 = arith.muli %arg2, %c512_i32_10 : i32
    %23 = arith.addi %17, %22 : i32
    %24 = tpu.assume_multiple %23, 512 : i32
    %25 = arith.index_cast %24 : i32 to index
    %c0 = arith.constant 0 : index
    %26 = vector.load %arg15[%25, %c0] : memref<1024x256xbf16, #tpu.memory_space<vmem>>, vector<512x256xbf16>
    %c0_11 = arith.constant 0 : index
    %c0_12 = arith.constant 0 : index
    %27 = vector.load %arg13[%c0_11, %c0_12] : memref<512x256xf32, #tpu.memory_space<vmem>>, vector<512x256xf32>
    %c0_13 = arith.constant 0 : index
    %c0_14 = arith.constant 0 : index
    %28 = vector.load %arg3[%c0_13, %c0_14] : memref<512x512xbf16, #tpu.memory_space<vmem>>, vector<512x512xbf16>
    %cst = arith.constant dense<0.000000e+00> : vector<512x256xf32>
    %29 = tpu.matmul %28, %26, %cst {dimension_numbers = #tpu.dot_dimension_numbers<[1], [0], [0], [1], [0, 0, 1, 1], [], []>} : vector<512x512xbf16>, vector<512x256xbf16>, vector<512x256xf32> -> vector<512x256xf32>
    %30 = arith.addf %27, %29 : vector<512x256xf32>
    %c0_15 = arith.constant 0 : index
    %c0_16 = arith.constant 0 : index
    %31 = vector.load %arg13[%c0_15, %c0_16] : memref<512x256xf32, #tpu.memory_space<vmem>>, vector<512x256xf32>
    tpu.vector_store %arg13[%c0_15, %c0_16], %30 {strides = array<i32>} : memref<512x256xf32, #tpu.memory_space<vmem>>, vector<512x256xf32>,
    %c512_i32_17 = arith.constant 512 : i32
    %32 = arith.muli %arg1, %c512_i32_17 : i32
    %33 = tpu.assume_multiple %32, 512 : i32
    %c0_i32_18 = arith.constant 0 : i32
    %34 = arith.cmpi eq, %arg2, %c0_i32_18 : i32
    %c6_i32 = arith.constant 6 : i32
    %35 = arith.cmpi eq, %arg0, %c6_i32 : i32
    %36 = arith.extui %34 : i1 to i32
    %c0_i32_19 = arith.constant 0 : i32
    %37 = arith.cmpi ne, %36, %c0_i32_19 : i32
    scf.if %37 {
      %c0_25 = arith.constant 0 : index
      %c0_26 = arith.constant 0 : index
      %51 = vector.load %arg13[%c0_25, %c0_26] : memref<512x256xf32, #tpu.memory_space<vmem>>, vector<512x256xf32>
      %52 = arith.truncf %51 : vector<512x256xf32> to vector<512x256xbf16>
      %c0_27 = arith.constant 0 : index
      %c0_28 = arith.constant 0 : index
      %c0_29 = arith.constant 0 : index
      %53 = vector.load %arg5[%c0_27, %c0_28, %c0_29] : memref<1x256x256xbf16, #tpu.memory_space<vmem>>, vector<1x256x256xbf16>
      %54 = vector.shape_cast %53 : vector<1x256x256xbf16> to vector<256x256xbf16>
      %cst_30 = arith.constant dense<0.000000e+00> : vector<512x256xf32>
      %55 = tpu.matmul %52, %54, %cst_30 {dimension_numbers = #tpu.dot_dimension_numbers<[1], [0], [0], [1], [0, 0, 1, 1], [], []>} : vector<512x256xbf16>, vector<256x256xbf16>, vector<512x256xf32> -> vector<512x256xf32>
      %c0_31 = arith.constant 0 : index
      %c0_32 = arith.constant 0 : index
      %c0_33 = arith.constant 0 : index
      %56 = vector.load %arg6[%c0_31, %c0_32, %c0_33] : memref<1x1x256xf32, #tpu.memory_space<vmem>>, vector<1x1x256xf32>
      %57 = vector.shape_cast %56 : vector<1x1x256xf32> to vector<1x256xf32>
      %58 = vector.broadcast %57 : vector<1x256xf32> to vector<512x256xf32>
      %59 = arith.addf %55, %58 : vector<512x256xf32>
      %cst_34 = arith.constant 0.000000e+00 : f32
      %60 = vector.broadcast %cst_34 : f32 to vector<512x256xf32>
      %61 = arith.maximumf %59, %60 : vector<512x256xf32>
      %62 = arith.truncf %61 : vector<512x256xf32> to vector<512x256xbf16>
      %63 = arith.addi %18, %33 : i32
      %64 = tpu.assume_multiple %63, 512 : i32
      %65 = arith.index_cast %64 : i32 to index
      %c0_35 = arith.constant 0 : index
      %66 = vector.load %arg15[%65, %c0_35] : memref<1024x256xbf16, #tpu.memory_space<vmem>>, vector<512x256xbf16>
      tpu.vector_store %arg15[%65, %c0_35], %62 {strides = array<i32>} : memref<1024x256xbf16, #tpu.memory_space<vmem>>, vector<512x256xbf16>,
    } else {
    }
    %38 = arith.andi %34, %35 : i1
    %c0_i32_20 = arith.constant 0 : i32
    %39 = arith.cmpi eq, %arg1, %c0_i32_20 : i32
    %40 = arith.andi %38, %39 : i1
    %41 = arith.extui %40 : i1 to i32
    %c0_i32_21 = arith.constant 0 : i32
    %42 = arith.cmpi ne, %41, %c0_i32_21 : i32
    scf.if %42 {
      %cst_25 = arith.constant 0.000000e+00 : f32
      %51 = vector.broadcast %cst_25 : f32 to vector<8x256xf32>
      %c0_26 = arith.constant 0 : index
      %c0_27 = arith.constant 0 : index
      %52 = vector.load %arg14[%c0_26, %c0_27] : memref<8x256xf32, #tpu.memory_space<vmem>>, vector<8x256xf32>
      tpu.vector_store %arg14[%c0_26, %c0_27], %51 {strides = array<i32>} : memref<8x256xf32, #tpu.memory_space<vmem>>, vector<8x256xf32>,
    } else {
    }
    %43 = arith.andi %34, %35 : i1
    %44 = arith.extui %43 : i1 to i32
    %c0_i32_22 = arith.constant 0 : i32
    %45 = arith.cmpi ne, %44, %c0_i32_22 : i32
    scf.if %45 {
      %51 = arith.addi %18, %33 : i32
      %52 = tpu.assume_multiple %51, 512 : i32
      %53 = arith.index_cast %52 : i32 to index
      %c0_25 = arith.constant 0 : index
      %54 = vector.load %arg15[%53, %c0_25] : memref<1024x256xbf16, #tpu.memory_space<vmem>>, vector<512x256xbf16>
      %c0_26 = arith.constant 0 : index
      %c0_27 = arith.constant 0 : index
      %55 = vector.load %arg14[%c0_26, %c0_27] : memref<8x256xf32, #tpu.memory_space<vmem>>, vector<8x256xf32>
      %c0_28 = arith.constant 0 : index
      %c0_29 = arith.constant 0 : index
      %56 = vector.load %arg7[%c0_28, %c0_29] : memref<8x512xbf16, #tpu.memory_space<vmem>>, vector<8x512xbf16>
      %cst_30 = arith.constant dense<0.000000e+00> : vector<8x256xf32>
      %57 = tpu.matmul %56, %54, %cst_30 {dimension_numbers = #tpu.dot_dimension_numbers<[1], [0], [0], [1], [0, 0, 1, 1], [], []>} : vector<8x512xbf16>, vector<512x256xbf16>, vector<8x256xf32> -> vector<8x256xf32>
      %58 = arith.addf %55, %57 : vector<8x256xf32>
      %c0_31 = arith.constant 0 : index
      %c0_32 = arith.constant 0 : index
      %59 = vector.load %arg14[%c0_31, %c0_32] : memref<8x256xf32, #tpu.memory_space<vmem>>, vector<8x256xf32>
      tpu.vector_store %arg14[%c0_31, %c0_32], %58 {strides = array<i32>} : memref<8x256xf32, #tpu.memory_space<vmem>>, vector<8x256xf32>,
    } else {
    }
    %46 = arith.andi %34, %35 : i1
    %c0_i32_23 = arith.constant 0 : i32
    %47 = arith.cmpi eq, %arg1, %c0_i32_23 : i32
    %48 = arith.andi %46, %47 : i1
    %49 = arith.extui %48 : i1 to i32
    %c0_i32_24 = arith.constant 0 : i32
    %50 = arith.cmpi ne, %49, %c0_i32_24 : i32
    scf.if %50 {
      "tpu.region"() ({
        %alloca = memref.alloca() : memref<256x256xf32, #tpu.memory_space<vmem>>
        %alloca_25 = memref.alloca() : memref<1x256xf32, #tpu.memory_space<vmem>>
        %alloca_26 = memref.alloca() : memref<256x128xf32, #tpu.memory_space<vmem>>
        %alloca_27 = memref.alloca() : memref<1x128xf32, #tpu.memory_space<vmem>>
        tpu.enqueue_dma source(%arg8 : memref<256x256xf32, #tpu.memory_space<any>>) target(%alloca : memref<256x256xf32, #tpu.memory_space<vmem>>) target_semaphore(%arg16 : memref<!tpu.dma_semaphore, #tpu.memory_space<semaphore_mem>>)
        tpu.wait_dma2 semaphore(%arg16 : memref<!tpu.dma_semaphore, #tpu.memory_space<semaphore_mem>>) src(%arg8 : memref<256x256xf32, #tpu.memory_space<any>>) dst(%alloca : memref<256x256xf32, #tpu.memory_space<vmem>>)
        tpu.enqueue_dma source(%arg9 : memref<1x256xf32, #tpu.memory_space<any>>) target(%alloca_25 : memref<1x256xf32, #tpu.memory_space<vmem>>) target_semaphore(%arg16 : memref<!tpu.dma_semaphore, #tpu.memory_space<semaphore_mem>>)
        tpu.wait_dma2 semaphore(%arg16 : memref<!tpu.dma_semaphore, #tpu.memory_space<semaphore_mem>>) src(%arg9 : memref<1x256xf32, #tpu.memory_space<any>>) dst(%alloca_25 : memref<1x256xf32, #tpu.memory_space<vmem>>)
        tpu.enqueue_dma source(%arg10 : memref<256x128xf32, #tpu.memory_space<any>>) target(%alloca_26 : memref<256x128xf32, #tpu.memory_space<vmem>>) target_semaphore(%arg16 : memref<!tpu.dma_semaphore, #tpu.memory_space<semaphore_mem>>)
        tpu.wait_dma2 semaphore(%arg16 : memref<!tpu.dma_semaphore, #tpu.memory_space<semaphore_mem>>) src(%arg10 : memref<256x128xf32, #tpu.memory_space<any>>) dst(%alloca_26 : memref<256x128xf32, #tpu.memory_space<vmem>>)
        tpu.enqueue_dma source(%arg11 : memref<1x128xf32, #tpu.memory_space<any>>) target(%alloca_27 : memref<1x128xf32, #tpu.memory_space<vmem>>) target_semaphore(%arg16 : memref<!tpu.dma_semaphore, #tpu.memory_space<semaphore_mem>>)
        tpu.wait_dma2 semaphore(%arg16 : memref<!tpu.dma_semaphore, #tpu.memory_space<semaphore_mem>>) src(%arg11 : memref<1x128xf32, #tpu.memory_space<any>>) dst(%alloca_27 : memref<1x128xf32, #tpu.memory_space<vmem>>)
        %c0_28 = arith.constant 0 : index
        %c0_29 = arith.constant 0 : index
        %51 = vector.load %arg14[%c0_28, %c0_29] : memref<8x256xf32, #tpu.memory_space<vmem>>, vector<8x256xf32>
        %c0_30 = arith.constant 0 : index
        %c0_31 = arith.constant 0 : index
        %52 = vector.load %alloca[%c0_30, %c0_31] : memref<256x256xf32, #tpu.memory_space<vmem>>, vector<256x256xf32>
        %cst_32 = arith.constant dense<0.000000e+00> : vector<8x256xf32>
        %53 = tpu.matmul %51, %52, %cst_32 {dimension_numbers = #tpu.dot_dimension_numbers<[1], [0], [0], [1], [0, 0, 1, 1], [], []>} : vector<8x256xf32>, vector<256x256xf32>, vector<8x256xf32> -> vector<8x256xf32>
        %c0_33 = arith.constant 0 : index
        %c0_34 = arith.constant 0 : index
        %54 = vector.load %alloca_25[%c0_33, %c0_34] : memref<1x256xf32, #tpu.memory_space<vmem>>, vector<1x256xf32>
        %55 = vector.broadcast %54 : vector<1x256xf32> to vector<8x256xf32>
        %56 = arith.addf %53, %55 : vector<8x256xf32>
        %cst_35 = arith.constant 0.000000e+00 : f32
        %57 = vector.broadcast %cst_35 : f32 to vector<8x256xf32>
        %58 = arith.maximumf %56, %57 : vector<8x256xf32>
        %c0_36 = arith.constant 0 : index
        %c0_37 = arith.constant 0 : index
        %59 = vector.load %alloca_26[%c0_36, %c0_37] : memref<256x128xf32, #tpu.memory_space<vmem>>, vector<256x128xf32>
        %cst_38 = arith.constant dense<0.000000e+00> : vector<8x128xf32>
        %60 = tpu.matmul %58, %59, %cst_38 {dimension_numbers = #tpu.dot_dimension_numbers<[1], [0], [0], [1], [0, 0, 1, 1], [], []>} : vector<8x256xf32>, vector<256x128xf32>, vector<8x128xf32> -> vector<8x128xf32>
        %c0_39 = arith.constant 0 : index
        %c0_40 = arith.constant 0 : index
        %61 = vector.load %alloca_27[%c0_39, %c0_40] : memref<1x128xf32, #tpu.memory_space<vmem>>, vector<1x128xf32>
        %62 = vector.broadcast %61 : vector<1x128xf32> to vector<8x128xf32>
        %63 = arith.addf %60, %62 : vector<8x128xf32>
        %c0_41 = arith.constant 0 : index
        %c0_42 = arith.constant 0 : index
        %64 = vector.load %arg12[%c0_41, %c0_42] : memref<8x128xf32, #tpu.memory_space<vmem>>, vector<8x128xf32>
        tpu.vector_store %arg12[%c0_41, %c0_42], %63 {strides = array<i32>} : memref<8x128xf32, #tpu.memory_space<vmem>>, vector<8x128xf32>,
        tpu.yield
      }) : () -> ()
    } else {
    }
    return
  }
  func.func @transform_0(%arg0: i32, %arg1: i32, %arg2: i32) -> (i32, i32) {
    %c0_i32 = arith.constant 0 : i32
    return %arg1, %arg2 : i32, i32
  }
  func.func @transform_2(%arg0: i32, %arg1: i32, %arg2: i32) -> (i32, i32, i32) {
    %c0_i32 = arith.constant 0 : i32
    %c0_i32_0 = arith.constant 0 : i32
    %c0_i32_1 = arith.constant 0 : i32
    return %arg0, %c0_i32, %c0_i32_0 : i32, i32, i32
  }
  func.func @transform_3(%arg0: i32, %arg1: i32, %arg2: i32) -> (i32, i32, i32) {
    %c0_i32 = arith.constant 0 : i32
    %c0_i32_0 = arith.constant 0 : i32
    %c0_i32_1 = arith.constant 0 : i32
    return %arg0, %c0_i32, %c0_i32_0 : i32, i32, i32
  }
  func.func @transform_4(%arg0: i32, %arg1: i32, %arg2: i32) -> (i32, i32) {
    %c6_i32 = arith.constant 6 : i32
    %0 = arith.cmpi eq, %arg0, %c6_i32 : i32
    %c0_i32 = arith.constant 0 : i32
    %1 = arith.select %0, %arg1, %c0_i32 : i32
    %c0_i32_0 = arith.constant 0 : i32
    %c0_i32_1 = arith.constant 0 : i32
    return %c0_i32_0, %1 : i32, i32
  }
  func.func @transform_9(%arg0: i32, %arg1: i32, %arg2: i32) -> (i32, i32) {
    %c0_i32 = arith.constant 0 : i32
    %c0_i32_0 = arith.constant 0 : i32
    %c0_i32_1 = arith.constant 0 : i32
    return %c0_i32, %c0_i32_0 : i32, i32
  }
}

</mosaic_0001>

<llo_original>
// kernel: orthogonal_gcn_forward.1
$region0: #{orthogonal_gcn_forward.1}
  #allocation0 [shape = 'u32[]', space=smem, size = 0x4, offset = 0x4, fixed_abs, tag = 'smem constant byte address 0x4 - core index']
  #allocation1 [shape = 'u32[72,128]{1,0:T(1,128)}', space=vmem, size = 0x9000, scoped, tag = 'internal scratch']
  #allocation2 [shape = 'f32[512,256]{1,0:T(8,128)}', space=vmem, size = 0x80000, scoped, tag = 'scratch operand']
  #allocation3 [shape = 'f32[8,256]{1,0:T(8,128)}', space=vmem, size = 0x2000, scoped, tag = 'scratch operand']
  #allocation4 [shape = 'bf16[1024,256]{1,0:T(8,128)(2,1)}', space=vmem, size = 0x80000, scoped, tag = 'scratch operand']
  #allocation5 [shape = 's32[1]{0}', space=sflag, size = 0x4, scoped, tag = 'scratch operand']
  #allocation6 [shape = 's32[]', space=sflag, size = 0x4, offset = 0, fixed_abs, tag = 'sflag constant byte address 0x0 - dummy sync flag']
  #allocation11 [shape = 's32[]', space=sflag, size = 0x4, offset = 0, fixed_abs, tag = 'sflag constant byte address 0x0 - dummy sync flag']
  #allocation12 [shape = 's32[]', space=sflag, size = 0x4, offset = 0, fixed_abs, tag = 'sflag constant byte address 0x0 - dummy sync flag']
  #allocation13 [shape = 's32[]', space=sflag, size = 0x4, offset = 0, fixed_abs, tag = 'sflag constant byte address 0x0 - dummy sync flag']
  #allocation14 [shape = 's32[]', space=sflag, size = 0x4, offset = 0, fixed_abs, tag = 'sflag constant byte address 0x0 - dummy sync flag']
  %s0 = inlined_call_operand.vmem [shape: bf16[512,512], index: 0, kind: input, shape index: {}]
  %s1 = inlined_call_operand.vmem [shape: bf16[512,256], index: 1, kind: input, shape index: {}]
  %s2 = inlined_call_operand.vmem [shape: bf16[7,256,256], index: 2, kind: input, shape index: {}]
  %s3 = inlined_call_operand.vmem [shape: f32[7,1,256], index: 3, kind: input, shape index: {}]
  %s4 = inlined_call_operand.vmem [shape: bf16[8,512], index: 4, kind: input, shape index: {}]
  %s5 = inlined_call_operand.vmem [shape: f32[256,256], index: 5, kind: input, shape index: {}]
  %s6 = inlined_call_operand.vmem [shape: f32[1,256], index: 6, kind: input, shape index: {}]
  %s7 = inlined_call_operand.vmem [shape: f32[256,128], index: 7, kind: input, shape index: {}]
  %s8 = inlined_call_operand.vmem [shape: f32[1,128], index: 8, kind: input, shape index: {}]
  %s9 = inlined_call_operand.vmem [shape: f32[8,128], index: 9, kind: output, shape index: {}]
  %s10 = sld [smem:[#allocation0]]
  $region191: #{orthogonal_gcn_forward.1} parent=0
    _
  %s12 = ssub.s32 1, %s10
  %s13 = scalar_select 0, %s12, %s10
  loop: start=0, step=1, limit=9
  $region2: #{orthogonal_gcn_forward.1} parent=0 // loop_pre_header
    _
  $region3: #{orthogonal_gcn_forward.1} parent=0 // loop_header
    %s15 = sphi 0, %s19
    %p16 = scmp.ge.s32.totalorder %s15, 9
    %s22 = sphi 0, %s41
    %s23 = sphi 0, %s37
    %s24 = sphi 0, %s33
    %s25 = sphi 0, %s22
    %s26 = sphi 0, %s23
    %s27 = sphi 0, %s24
    %s28 = sphi 0, %s25
    %s29 = sphi 0, %s26
    %s30 = sphi 0, %s27
    %s46 = sphi 0, %s48
    %s49 = sphi 0, %s46
    %s50 = sphi 0, %s49
    %s66 = sphi 0, %s50
    %s72 = sphi 0, %s74
    %s75 = sphi 0, %s72
    %s76 = sphi 0, %s75
    %s92 = sphi 0, %s76
    %s98 = sphi 0, %s100
    %s101 = sphi 0, %s98
    %s102 = sphi 0, %s101
    %s118 = sphi 0, %s102
    %s128 = sphi 0, %s130
    %s131 = sphi 0, %s128
    %s132 = sphi 0, %s131
    %s148 = sphi 0, %s132
    %s152 = sphi 0, %s152
    %s154 = sphi 0, %s152
    %s155 = sphi 0, %s154
    %s169 = sphi 0, %s155
  $region4: #{orthogonal_gcn_forward.1} parent=0 // loop_header_branch
    %18 = sbr.rel (%p16) target = $region8
  $region5: #{orthogonal_gcn_forward.1} parent=0 // loop_body
    %s20 = ssub.s32 %s15, 1
    %s21 = ssub.s32 %s15, 2
    %s31 = sadd.s32 1, %s24
    %p32 = scmp.ge.s32.totalorder %s31, 1
    %s33 = scalar_select %p32, 0, %s31
    %s34 = sadd.s32 1, %s23
    %s35 = scalar_select %p32, %s34, %s23
    %p36 = scmp.ge.s32.totalorder %s35, 1
    %s37 = scalar_select %p36, 0, %s35
    %s38 = sadd.s32 1, %s22
    %s39 = scalar_select %p36, %s38, %s22
    %p40 = scmp.ge.s32.totalorder %s39, 7
    %s41 = scalar_select %p40, 0, %s39
    %s42 = ssub.s32 %s23, %s37
    %s43 = ssub.s32 %s24, %s33
    %s44 = sor.u32 %s42, %s43
    %p45 = scmp.eq.s32.totalorder %s44, 0
    %s47 = sadd.s32 %s46, 1
    %s48 = scalar_select %p45, %s46, %s47
    %p51 = pneg %p45
    %p52 = scmp.eq.s32.totalorder %s15, 6
    %p53 = por %p51, %p52
    %p54 = scmp.ne.s32.totalorder %s46, %s49
    %p55 = scmp.eq.s32.totalorder %s15, 0
    %p56 = por %p54, %p55
    %p57 = scmp.ne.s32.totalorder %s46, %s49
    %p58 = scmp.eq.s32.totalorder %s20, 6
    %p59 = por %p57, %p58
    %p60 = scmp.ne.s32.totalorder %s49, %s50
    %p61 = scmp.eq.s32.totalorder %s20, 0
    %p62 = por %p60, %p61
    %p63 = scmp.ne.s32.totalorder %s49, %s50
    %p64 = scmp.eq.s32.totalorder %s21, 6
    %p65 = por %p63, %p64
    %p67 = scmp.ne.s32.totalorder %s50, %s66
    %p68 = scmp.eq.s32.totalorder %s21, 0
    %p69 = por %p67, %p68
    %s70 = ssub.s32 %s22, %s41
    %p71 = scmp.eq.s32.totalorder %s70, 0
    %s73 = sadd.s32 %s72, 1
    %s74 = scalar_select %p71, %s72, %s73
    %p77 = pneg %p71
    %p78 = scmp.eq.s32.totalorder %s15, 6
    %p79 = por %p77, %p78
    %p80 = scmp.ne.s32.totalorder %s72, %s75
    %p81 = scmp.eq.s32.totalorder %s15, 0
    %p82 = por %p80, %p81
    %p83 = scmp.ne.s32.totalorder %s72, %s75
    %p84 = scmp.eq.s32.totalorder %s20, 6
    %p85 = por %p83, %p84
    %p86 = scmp.ne.s32.totalorder %s75, %s76
    %p87 = scmp.eq.s32.totalorder %s20, 0
    %p88 = por %p86, %p87
    %p89 = scmp.ne.s32.totalorder %s75, %s76
    %p90 = scmp.eq.s32.totalorder %s21, 6
    %p91 = por %p89, %p90
    %p93 = scmp.ne.s32.totalorder %s76, %s92
    %p94 = scmp.eq.s32.totalorder %s21, 0
    %p95 = por %p93, %p94
    %s96 = ssub.s32 %s22, %s41
    %p97 = scmp.eq.s32.totalorder %s96, 0
    %s99 = sadd.s32 %s98, 1
    %s100 = scalar_select %p97, %s98, %s99
    %p103 = pneg %p97
    %p104 = scmp.eq.s32.totalorder %s15, 6
    %p105 = por %p103, %p104
    %p106 = scmp.ne.s32.totalorder %s98, %s101
    %p107 = scmp.eq.s32.totalorder %s15, 0
    %p108 = por %p106, %p107
    %p109 = scmp.ne.s32.totalorder %s98, %s101
    %p110 = scmp.eq.s32.totalorder %s20, 6
    %p111 = por %p109, %p110
    %p112 = scmp.ne.s32.totalorder %s101, %s102
    %p113 = scmp.eq.s32.totalorder %s20, 0
    %p114 = por %p112, %p113
    %p115 = scmp.ne.s32.totalorder %s101, %s102
    %p116 = scmp.eq.s32.totalorder %s21, 6
    %p117 = por %p115, %p116
    %p119 = scmp.ne.s32.totalorder %s102, %s118
    %p120 = scmp.eq.s32.totalorder %s21, 0
    %p121 = por %p119, %p120
    %p122 = scmp.eq.s32.totalorder %s22, 6
    %s123 = scalar_select %p122, %s23, 0
    %p124 = scmp.eq.s32.totalorder %s41, 6
    %s125 = scalar_select %p124, %s37, 0
    %s126 = ssub.s32 %s123, %s125
    %p127 = scmp.eq.s32.totalorder %s126, 0
    %s129 = sadd.s32 %s128, 1
    %s130 = scalar_select %p127, %s128, %s129
    %p133 = pneg %p127
    %p134 = scmp.eq.s32.totalorder %s15, 6
    %p135 = por %p133, %p134
    %p136 = scmp.ne.s32.totalorder %s128, %s131
    %p137 = scmp.eq.s32.totalorder %s15, 0
    %p138 = por %p136, %p137
    %p139 = scmp.ne.s32.totalorder %s128, %s131
    %p140 = scmp.eq.s32.totalorder %s20, 6
    %p141 = por %p139, %p140
    %p142 = scmp.ne.s32.totalorder %s131, %s132
    %p143 = scmp.eq.s32.totalorder %s20, 0
    %p144 = por %p142, %p143
    %p145 = scmp.ne.s32.totalorder %s131, %s132
    %p146 = scmp.eq.s32.totalorder %s21, 6
    %p147 = por %p145, %p146
    %p149 = scmp.ne.s32.totalorder %s132, %s148
    %p150 = scmp.eq.s32.totalorder %s21, 0
    %p151 = por %p149, %p150
    %s153 = sadd.s32 %s152, 1
    %p156 = scmp.eq.s32.totalorder %s15, 6
    %p157 = scmp.ne.s32.totalorder %s152, %s154
    %p158 = scmp.eq.s32.totalorder %s15, 0
    %p159 = por %p157, %p158
    %p160 = scmp.ne.s32.totalorder %s152, %s154
    %p161 = scmp.eq.s32.totalorder %s20, 6
    %p162 = por %p160, %p161
    %p163 = scmp.ne.s32.totalorder %s154, %s155
    %p164 = scmp.eq.s32.totalorder %s20, 0
    %p165 = por %p163, %p164
    %p166 = scmp.ne.s32.totalorder %s154, %s155
    %p167 = scmp.eq.s32.totalorder %s21, 6
    %p168 = por %p166, %p167
    %p170 = scmp.ne.s32.totalorder %s155, %s169
    %p171 = scmp.eq.s32.totalorder %s21, 0
    %p172 = por %p170, %p171
    %p173 = scmp.le.s32.totalorder 1, %s15
    %p174 = scmp.lt.s32.totalorder %s15, 8
    %p175 = pnand %p173, %p174
    %p176 = pneg %p175
    // Predicated region
    $region9: #{orthogonal_gcn_forward.1} parent=5 // pred_check
      _
    $region10: #{orthogonal_gcn_forward.1} parent=5 // pred_check_branch
      %178 = sbr.rel (%p175) target = $region12
    $region11: #{orthogonal_gcn_forward.1} parent=5 // pred_region
      %s179 = ssub.s32 %s15, 1
      // Predicated region
      $region13: #{orthogonal_gcn_forward.1} parent=11 // pred_check
        %p180 = pneg %p62
      $region14: #{orthogonal_gcn_forward.1} parent=11 // pred_check_branch
        %182 = sbr.rel (%p180) target = $region16
      $region15: #{orthogonal_gcn_forward.1} parent=11 // pred_region
        %s183 = smul.u32 64, %s26
        %s184 = smul.u32 4, %s27
        %p185 = scmp.lt.s32.totalorder %s183, 63
        %s186 = scalar_select %p185, %s183, 63
        %p187 = scmp.lt.s32.totalorder %s184, 3
        %s188 = scalar_select %p187, %s184, 3
        %s189 = smul.addr %s186, 4
        %s190 = sadd.s32 %s188, %s189
        %s191 = smul.addr %s190, 4
        %s192 = scalar_lea.vmem %s0, %s191
        %s193 = smul.u32 64, %s26
        %s194 = smul.u32 4, %s27
      $region16: #{orthogonal_gcn_forward.1} parent=11 // pred_fallthru
        _
    $region12: #{orthogonal_gcn_forward.1} parent=5 // pred_fallthru
      _
    %p195 = scmp.lt.s32.totalorder %s15, 7
    // Predicated region
    $region17: #{orthogonal_gcn_forward.1} parent=5 // pred_check
      %p196 = pneg %p195
    $region18: #{orthogonal_gcn_forward.1} parent=5 // pred_check_branch
      %198 = sbr.rel (%p196) target = $region20
    $region19: #{orthogonal_gcn_forward.1} parent=5 // pred_region
      // Predicated region
      $region21: #{orthogonal_gcn_forward.1} parent=19 // pred_check
        %p199 = pneg %p82
      $region22: #{orthogonal_gcn_forward.1} parent=19 // pred_check_branch
        %201 = sbr.rel (%p199) target = $region24
      $region23: #{orthogonal_gcn_forward.1} parent=19 // pred_region
        %p202 = scmp.lt.s32.totalorder %s22, 6
        %s203 = scalar_select %p202, %s22, 6
        %s204 = smul.addr %s203, 64
        %s205 = smul.addr %s204, 4
        %s206 = scalar_lea.vmem %s2, %s205
      $region24: #{orthogonal_gcn_forward.1} parent=19 // pred_fallthru
        _
      // Predicated region
      $region25: #{orthogonal_gcn_forward.1} parent=19 // pred_check
        %p207 = pneg %p108
      $region26: #{orthogonal_gcn_forward.1} parent=19 // pred_check_branch
        %209 = sbr.rel (%p207) target = $region28
      $region27: #{orthogonal_gcn_forward.1} parent=19 // pred_region
        %p210 = scmp.lt.s32.totalorder %s22, 6
        %s211 = scalar_select %p210, %s22, 6
        %s212 = smul.addr %s211, 2
        %s213 = scalar_lea.vmem %s3, %s212
      $region28: #{orthogonal_gcn_forward.1} parent=19 // pred_fallthru
        _
      // Predicated region
      $region29: #{orthogonal_gcn_forward.1} parent=19 // pred_check
        %p214 = pneg %p138
      $region30: #{orthogonal_gcn_forward.1} parent=19 // pred_check_branch
        %216 = sbr.rel (%p214) target = $region32
      $region31: #{orthogonal_gcn_forward.1} parent=19 // pred_region
        %p217 = scmp.eq.s32.totalorder %s22, 6
        %s218 = scalar_select %p217, %s23, 0
        %s219 = smul.u32 4, %s218
        %p220 = scmp.lt.s32.totalorder %s219, 3
        %s221 = scalar_select %p220, %s219, 3
        %s222 = smul.addr %s221, 4
        %s223 = scalar_lea.vmem %s4, %s222
        %p224 = scmp.eq.s32.totalorder %s22, 6
        %s225 = scalar_select %p224, %s23, 0
        %s226 = smul.u32 4, %s225
      $region32: #{orthogonal_gcn_forward.1} parent=19 // pred_fallthru
        _
    $region20: #{orthogonal_gcn_forward.1} parent=5 // pred_fallthru
      _
    %p227 = scmp.le.s32.totalorder 1, %s15
    %p228 = scmp.lt.s32.totalorder %s15, 8
    %p229 = pnand %p227, %p228
    %p230 = pneg %p229
    // Predicated region
    $region33: #{orthogonal_gcn_forward.1} parent=5 // pred_check
      _
    $region34: #{orthogonal_gcn_forward.1} parent=5 // pred_check_branch
      %232 = sbr.rel (%p229) target = $region36
    $region35: #{orthogonal_gcn_forward.1} parent=5 // pred_region
      %s233 = ssub.s32 %s15, 1
      %s234 = smul.u32 64, %s26
      %s235 = smul.u32 4, %s27
      %p236 = scmp.lt.s32.totalorder %s234, 63
      %s237 = scalar_select %p236, %s234, 63
      %p238 = scmp.lt.s32.totalorder %s235, 3
      %s239 = scalar_select %p238, %s235, 3
      %s240 = smul.addr %s237, 4
      %s241 = sadd.s32 %s239, %s240
      %s242 = smul.addr %s241, 4
      %s243 = scalar_lea.vmem %s0, %s242
      %p244 = pneg %p62
      %p245 = pneg %p59
      %p246 = scmp.lt.s32.totalorder %s25, 6
      %s247 = scalar_select %p246, %s25, 6
      %s248 = smul.addr %s247, 64
      %s249 = smul.addr %s248, 4
      %s250 = scalar_lea.vmem %s2, %s249
      %p251 = pneg %p88
      %p252 = pneg %p85
      %p253 = scmp.lt.s32.totalorder %s25, 6
      %s254 = scalar_select %p253, %s25, 6
      %s255 = smul.addr %s254, 2
      %s256 = scalar_lea.vmem %s3, %s255
      %p257 = pneg %p114
      %p258 = pneg %p111
      %p259 = scmp.eq.s32.totalorder %s25, 6
      %s260 = scalar_select %p259, %s26, 0
      %s261 = smul.u32 4, %s260
      %p262 = scmp.lt.s32.totalorder %s261, 3
      %s263 = scalar_select %p262, %s261, 3
      %s264 = smul.addr %s263, 4
      %s265 = scalar_lea.vmem %s4, %s264
      %p266 = pneg %p144
      %p267 = pneg %p141
      %p268 = pneg %p165
      %p269 = pneg %p162
      %s270 = smul.u32 64, %s26
      %s271 = smul.u32 4, %s27
      %p272 = scmp.lt.s32.totalorder %s270, 63
      %s273 = scalar_select %p272, %s270, 63
      %p274 = scmp.lt.s32.totalorder %s271, 3
      %s275 = scalar_select %p274, %s271, 3
      %s276 = smul.addr %s273, 4
      %s277 = sadd.s32 %s275, %s276
      %s278 = smul.addr %s277, 4
      %s279 = scalar_lea.vmem %s0, %s278
      %s280 = smul.u32 64, %s26
      %s281 = smul.u32 4, %s27
      %p282 = scmp.lt.s32.totalorder %s25, 6
      %s283 = scalar_select %p282, %s25, 6
      %s284 = smul.addr %s283, 64
      %s285 = smul.addr %s284, 4
      %s286 = scalar_lea.vmem %s2, %s285
      %p287 = scmp.lt.s32.totalorder %s25, 6
      %s288 = scalar_select %p287, %s25, 6
      %s289 = smul.addr %s288, 2
      %s290 = scalar_lea.vmem %s3, %s289
      %p291 = scmp.eq.s32.totalorder %s25, 6
      %s292 = scalar_select %p291, %s26, 0
      %s293 = smul.u32 4, %s292
      %p294 = scmp.lt.s32.totalorder %s293, 3
      %s295 = scalar_select %p294, %s293, 3
      %s296 = smul.addr %s295, 4
      %s297 = scalar_lea.vmem %s4, %s296
      %p298 = scmp.eq.s32.totalorder %s25, 6
      %s299 = scalar_select %p298, %s26, 0
      %s300 = smul.u32 4, %s299
      %p301 = scmp.eq.s32.totalorder %s25, 0
      %p302 = scmp.eq.s32.totalorder %s26, 0
      %p303 = pnand %p301, %p302
      %p304 = pneg %p303
      %p305 = scmp.eq.s32.totalorder %s27, 0
      %p306 = pnand %p304, %p305
      %p307 = pneg %p306
      // Predicated region
      $region37: #{orthogonal_gcn_forward.1} parent=35 // pred_check
        _
      $region38: #{orthogonal_gcn_forward.1} parent=35 // pred_check_branch
        %309 = sbr.rel (%p306) target = $region40
      $region39: #{orthogonal_gcn_forward.1} parent=35 // pred_region
        // Predicated region
        $region41: #{orthogonal_gcn_forward.1} parent=39 // pred_check
          _
        $region42: #{orthogonal_gcn_forward.1} parent=39 // pred_check_branch
          %311 = sbr.rel (0) target = $region44
        $region43: #{orthogonal_gcn_forward.1} parent=39 // pred_region
          loop: start=0, step=1, limit=1
          $region45: #{orthogonal_gcn_forward.1} parent=43 // loop_pre_header
            _
          $region46: #{orthogonal_gcn_forward.1} parent=43 // loop_header
            %s313 = sphi 0, %s317
            %p314 = scmp.ge.s32.totalorder %s313, 1
            %s318 = sphi %s1, %s1
            %s319 = sphi [#allocation4], [#allocation4]
          $region47: #{orthogonal_gcn_forward.1} parent=43 // loop_header_branch
            %316 = sbr.rel (%p314) target = $region51
          $region48: #{orthogonal_gcn_forward.1} parent=43 // loop_body
            %v320 = vld [vmem:[%s318] sm:$0xff]
            %321 = vst [vmem:[%s319] sm:$0xff] %v320
            %v322 = vld [vmem:[%s318 + $0x8] sm:$0xff]
            %323 = vst [vmem:[%s319 + $0x8] sm:$0xff] %v322
            %v324 = vld [vmem:[%s318 + $0x10] sm:$0xff]
            %325 = vst [vmem:[%s319 + $0x10] sm:$0xff] %v324
            %v326 = vld [vmem:[%s318 + $0x18] sm:$0xff]
            %327 = vst [vmem:[%s319 + $0x18] sm:$0xff] %v326
            %v328 = vld [vmem:[%s318 + $0x20] sm:$0xff]
            %329 = vst [vmem:[%s319 + $0x20] sm:$0xff] %v328
            %v330 = vld [vmem:[%s318 + $0x28] sm:$0xff]
            %331 = vst [vmem:[%s319 + $0x28] sm:$0xff] %v330
            %v332 = vld [vmem:[%s318 + $0x30] sm:$0xff]
            %333 = vst [vmem:[%s319 + $0x30] sm:$0xff] %v332
            %v334 = vld [vmem:[%s318 + $0x38] sm:$0xff]
            %335 = vst [vmem:[%s319 + $0x38] sm:$0xff] %v334
            %v336 = vld [vmem:[%s318 + $0x40] sm:$0xff]
            %337 = vst [vmem:[%s319 + $0x40] sm:$0xff] %v336
            %v338 = vld [vmem:[%s318 + $0x48] sm:$0xff]
            %339 = vst [vmem:[%s319 + $0x48] sm:$0xff] %v338
            %v340 = vld [vmem:[%s318 + $0x50] sm:$0xff]
            %341 = vst [vmem:[%s319 + $0x50] sm:$0xff] %v340
            %v342 = vld [vmem:[%s318 + $0x58] sm:$0xff]
            %343 = vst [vmem:[%s319 + $0x58] sm:$0xff] %v342
            %v344 = vld [vmem:[%s318 + $0x60] sm:$0xff]
            %345 = vst [vmem:[%s319 + $0x60] sm:$0xff] %v344
            %v346 = vld [vmem:[%s318 + $0x68] sm:$0xff]
            %347 = vst [vmem:[%s319 + $0x68] sm:$0xff] %v346
            %v348 = vld [vmem:[%s318 + $0x70] sm:$0xff]
            %349 = vst [vmem:[%s319 + $0x70] sm:$0xff] %v348
            %v350 = vld [vmem:[%s318 + $0x78] sm:$0xff]
            %351 = vst [vmem:[%s319 + $0x78] sm:$0xff] %v350
            %v352 = vld [vmem:[%s318 + $0x80] sm:$0xff]
            %353 = vst [vmem:[%s319 + $0x80] sm:$0xff] %v352
            %v354 = vld [vmem:[%s318 + $0x88] sm:$0xff]
            %355 = vst [vmem:[%s319 + $0x88] sm:$0xff] %v354
            %v356 = vld [vmem:[%s318 + $0x90] sm:$0xff]
            %357 = vst [vmem:[%s319 + $0x90] sm:$0xff] %v356
            %v358 = vld [vmem:[%s318 + $0x98] sm:$0xff]
            %359 = vst [vmem:[%s319 + $0x98] sm:$0xff] %v358
            %v360 = vld [vmem:[%s318 + $0xa0] sm:$0xff]
            %361 = vst [vmem:[%s319 + $0xa0] sm:$0xff] %v360
            %v362 = vld [vmem:[%s318 + $0xa8] sm:$0xff]
            %363 = vst [vmem:[%s319 + $0xa8] sm:$0xff] %v362
            %v364 = vld [vmem:[%s318 + $0xb0] sm:$0xff]
            %365 = vst [vmem:[%s319 + $0xb0] sm:$0xff] %v364
            %v366 = vld [vmem:[%s318 + $0xb8] sm:$0xff]
            %367 = vst [vmem:[%s319 + $0xb8] sm:$0xff] %v366
            %v368 = vld [vmem:[%s318 + $0xc0] sm:$0xff]
            %369 = vst [vmem:[%s319 + $0xc0] sm:$0xff] %v368
            %v370 = vld [vmem:[%s318 + $0xc8] sm:$0xff]
            %371 = vst [vmem:[%s319 + $0xc8] sm:$0xff] %v370
            %v372 = vld [vmem:[%s318 + $0xd0] sm:$0xff]
            %373 = vst [vmem:[%s319 + $0xd0] sm:$0xff] %v372
            %v374 = vld [vmem:[%s318 + $0xd8] sm:$0xff]
            %375 = vst [vmem:[%s319 + $0xd8] sm:$0xff] %v374
            %v376 = vld [vmem:[%s318 + $0xe0] sm:$0xff]
            %377 = vst [vmem:[%s319 + $0xe0] sm:$0xff] %v376
            %v378 = vld [vmem:[%s318 + $0xe8] sm:$0xff]
            %379 = vst [vmem:[%s319 + $0xe8] sm:$0xff] %v378
            %v380 = vld [vmem:[%s318 + $0xf0] sm:$0xff]
            %381 = vst [vmem:[%s319 + $0xf0] sm:$0xff] %v380
            %v382 = vld [vmem:[%s318 + $0xf8] sm:$0xff]
            %383 = vst [vmem:[%s319 + $0xf8] sm:$0xff] %v382
            %v384 = vld [vmem:[%s318 + $0x100] sm:$0xff]
            %385 = vst [vmem:[%s319 + $0x100] sm:$0xff] %v384
            %v386 = vld [vmem:[%s318 + $0x108] sm:$0xff]
            %387 = vst [vmem:[%s319 + $0x108] sm:$0xff] %v386
            %v388 = vld [vmem:[%s318 + $0x110] sm:$0xff]
            %389 = vst [vmem:[%s319 + $0x110] sm:$0xff] %v388
            %v390 = vld [vmem:[%s318 + $0x118] sm:$0xff]
            %391 = vst [vmem:[%s319 + $0x118] sm:$0xff] %v390
            %v392 = vld [vmem:[%s318 + $0x120] sm:$0xff]
            %393 = vst [vmem:[%s319 + $0x120] sm:$0xff] %v392
            %v394 = vld [vmem:[%s318 + $0x128] sm:$0xff]
            %395 = vst [vmem:[%s319 + $0x128] sm:$0xff] %v394
            %v396 = vld [vmem:[%s318 + $0x130] sm:$0xff]
            %397 = vst [vmem:[%s319 + $0x130] sm:$0xff] %v396
            %v398 = vld [vmem:[%s318 + $0x138] sm:$0xff]
            %399 = vst [vmem:[%s319 + $0x138] sm:$0xff] %v398
            %v400 = vld [vmem:[%s318 + $0x140] sm:$0xff]
            %401 = vst [vmem:[%s319 + $0x140] sm:$0xff] %v400
            %v402 = vld [vmem:[%s318 + $0x148] sm:$0xff]
            %403 = vst [vmem:[%s319 + $0x148] sm:$0xff] %v402
            %v404 = vld [vmem:[%s318 + $0x150] sm:$0xff]
            %405 = vst [vmem:[%s319 + $0x150] sm:$0xff] %v404
            %v406 = vld [vmem:[%s318 + $0x158] sm:$0xff]
            %407 = vst [vmem:[%s319 + $0x158] sm:$0xff] %v406
            %v408 = vld [vmem:[%s318 + $0x160] sm:$0xff]
            %409 = vst [vmem:[%s319 + $0x160] sm:$0xff] %v408
            %v410 = vld [vmem:[%s318 + $0x168] sm:$0xff]
            %411 = vst [vmem:[%s319 + $0x168] sm:$0xff] %v410
            %v412 = vld [vmem:[%s318 + $0x170] sm:$0xff]
            %413 = vst [vmem:[%s319 + $0x170] sm:$0xff] %v412
            %v414 = vld [vmem:[%s318 + $0x178] sm:$0xff]
            %415 = vst [vmem:[%s319 + $0x178] sm:$0xff] %v414
            %v416 = vld [vmem:[%s318 + $0x180] sm:$0xff]
            %417 = vst [vmem:[%s319 + $0x180] sm:$0xff] %v416
            %v418 = vld [vmem:[%s318 + $0x188] sm:$0xff]
            %419 = vst [vmem:[%s319 + $0x188] sm:$0xff] %v418
            %v420 = vld [vmem:[%s318 + $0x190] sm:$0xff]
            %421 = vst [vmem:[%s319 + $0x190] sm:$0xff] %v420
            %v422 = vld [vmem:[%s318 + $0x198] sm:$0xff]
            %423 = vst [vmem:[%s319 + $0x198] sm:$0xff] %v422
            %v424 = vld [vmem:[%s318 + $0x1a0] sm:$0xff]
            %425 = vst [vmem:[%s319 + $0x1a0] sm:$0xff] %v424
            %v426 = vld [vmem:[%s318 + $0x1a8] sm:$0xff]
            %427 = vst [vmem:[%s319 + $0x1a8] sm:$0xff] %v426
            %v428 = vld [vmem:[%s318 + $0x1b0] sm:$0xff]
            %429 = vst [vmem:[%s319 + $0x1b0] sm:$0xff] %v428
            %v430 = vld [vmem:[%s318 + $0x1b8] sm:$0xff]
            %431 = vst [vmem:[%s319 + $0x1b8] sm:$0xff] %v430
            %v432 = vld [vmem:[%s318 + $0x1c0] sm:$0xff]
            %433 = vst [vmem:[%s319 + $0x1c0] sm:$0xff] %v432
            %v434 = vld [vmem:[%s318 + $0x1c8] sm:$0xff]
            %435 = vst [vmem:[%s319 + $0x1c8] sm:$0xff] %v434
            %v436 = vld [vmem:[%s318 + $0x1d0] sm:$0xff]
            %437 = vst [vmem:[%s319 + $0x1d0] sm:$0xff] %v436
            %v438 = vld [vmem:[%s318 + $0x1d8] sm:$0xff]
            %439 = vst [vmem:[%s319 + $0x1d8] sm:$0xff] %v438
            %v440 = vld [vmem:[%s318 + $0x1e0] sm:$0xff]
            %441 = vst [vmem:[%s319 + $0x1e0] sm:$0xff] %v440
            %v442 = vld [vmem:[%s318 + $0x1e8] sm:$0xff]
            %443 = vst [vmem:[%s319 + $0x1e8] sm:$0xff] %v442
            %v444 = vld [vmem:[%s318 + $0x1f0] sm:$0xff]
            %445 = vst [vmem:[%s319 + $0x1f0] sm:$0xff] %v444
            %v446 = vld [vmem:[%s318 + $0x1f8] sm:$0xff]
            %447 = vst [vmem:[%s319 + $0x1f8] sm:$0xff] %v446
          $region49: #{orthogonal_gcn_forward.1} parent=43 // loop_footer
            %s317 = sadd.s32 1, %s313
          $region50: #{orthogonal_gcn_forward.1} parent=43 // loop_footer_branch
            %312 = sbr.rel target = $region46
          $region51: #{orthogonal_gcn_forward.1} parent=43 // loop_exit
            _
        $region44: #{orthogonal_gcn_forward.1} parent=39 // pred_fallthru
          _
        // Predicated region
        $region52: #{orthogonal_gcn_forward.1} parent=39 // pred_check
          _
        $region53: #{orthogonal_gcn_forward.1} parent=39 // pred_check_branch
          %449 = sbr.rel target = $region55
        $region54: #{orthogonal_gcn_forward.1} parent=39 // pred_region
          _
        $region55: #{orthogonal_gcn_forward.1} parent=39 // pred_fallthru
          _
        // Predicated region
        $region56: #{orthogonal_gcn_forward.1} parent=39 // pred_check
          _
        $region57: #{orthogonal_gcn_forward.1} parent=39 // pred_check_branch
          %452 = sbr.rel (0) target = $region59
        $region58: #{orthogonal_gcn_forward.1} parent=39 // pred_region
          %453 = vsyncadd [#allocation5], 8192
        $region59: #{orthogonal_gcn_forward.1} parent=39 // pred_fallthru
          _
        %s454 = smul.u32 4, 64
        %s455 = smul.u32 %s454, 2
        %s456 = sshll.u32 %s455, 4
        %457 = dma.done [#allocation5], %s456
      $region40: #{orthogonal_gcn_forward.1} parent=35 // pred_fallthru
        _
      %p458 = scmp.lt.s32.totalorder %s25, 0
      %s459 = ssub.s32 0, %s25
      %s460 = scalar_select %p458, %s459, %s25
      %s461 = sand.u32 %s460, 1
      %s462 = ssub.s32 0, %s461
      %s463 = scalar_select %p458, %s462, %s461
      %p464 = scmp.ne.s32.totalorder %s463, 0
      %p465 = scmp.lt.s32.totalorder %s463, 0
      %p466 = pnand %p465, %p464
      %p467 = pneg %p466
      %s468 = sadd.s32 %s463, 2
      %s469 = scalar_select %p467, %s468, %s463
      %s470 = smul.u32 %s469, 512
      %s471 = ssub.s32 512, %s470
      // Predicated region
      $region60: #{orthogonal_gcn_forward.1} parent=35 // pred_check
        %p472 = pneg %p305
      $region61: #{orthogonal_gcn_forward.1} parent=35 // pred_check_branch
        %474 = sbr.rel (%p472) target = $region63
      $region62: #{orthogonal_gcn_forward.1} parent=35 // pred_region
        %475 = vst [vmem:[#allocation2] sm:$0xff] 0.0
        %476 = vst [vmem:[#allocation2 + $0x8] sm:$0xff] 0.0
        %477 = vst [vmem:[#allocation2 + $0x10] sm:$0xff] 0.0
        %478 = vst [vmem:[#allocation2 + $0x18] sm:$0xff] 0.0
        %479 = vst [vmem:[#allocation2 + $0x20] sm:$0xff] 0.0
        %480 = vst [vmem:[#allocation2 + $0x28] sm:$0xff] 0.0
        %481 = vst [vmem:[#allocation2 + $0x30] sm:$0xff] 0.0
        %482 = vst [vmem:[#allocation2 + $0x38] sm:$0xff] 0.0
        %483 = vst [vmem:[#allocation2 + $0x40] sm:$0xff] 0.0
        %484 = vst [vmem:[#allocation2 + $0x48] sm:$0xff] 0.0
        %485 = vst [vmem:[#allocation2 + $0x50] sm:$0xff] 0.0
        %486 = vst [vmem:[#allocation2 + $0x58] sm:$0xff] 0.0
        %487 = vst [vmem:[#allocation2 + $0x60] sm:$0xff] 0.0
        %488 = vst [vmem:[#allocation2 + $0x68] sm:$0xff] 0.0
        %489 = vst [vmem:[#allocation2 + $0x70] sm:$0xff] 0.0
        %490 = vst [vmem:[#allocation2 + $0x78] sm:$0xff] 0.0
        %491 = vst [vmem:[#allocation2 + $0x80] sm:$0xff] 0.0
        %492 = vst [vmem:[#allocation2 + $0x88] sm:$0xff] 0.0
        %493 = vst [vmem:[#allocation2 + $0x90] sm:$0xff] 0.0
        %494 = vst [vmem:[#allocation2 + $0x98] sm:$0xff] 0.0
        %495 = vst [vmem:[#allocation2 + $0xa0] sm:$0xff] 0.0
        %496 = vst [vmem:[#allocation2 + $0xa8] sm:$0xff] 0.0
        %497 = vst [vmem:[#allocation2 + $0xb0] sm:$0xff] 0.0
        %498 = vst [vmem:[#allocation2 + $0xb8] sm:$0xff] 0.0
        %499 = vst [vmem:[#allocation2 + $0xc0] sm:$0xff] 0.0
        %500 = vst [vmem:[#allocation2 + $0xc8] sm:$0xff] 0.0
        %501 = vst [vmem:[#allocation2 + $0xd0] sm:$0xff] 0.0
        %502 = vst [vmem:[#allocation2 + $0xd8] sm:$0xff] 0.0
        %503 = vst [vmem:[#allocation2 + $0xe0] sm:$0xff] 0.0
        %504 = vst [vmem:[#allocation2 + $0xe8] sm:$0xff] 0.0
        %505 = vst [vmem:[#allocation2 + $0xf0] sm:$0xff] 0.0
        %506 = vst [vmem:[#allocation2 + $0xf8] sm:$0xff] 0.0
        %507 = vst [vmem:[#allocation2 + $0x100] sm:$0xff] 0.0
        %508 = vst [vmem:[#allocation2 + $0x108] sm:$0xff] 0.0
        %509 = vst [vmem:[#allocation2 + $0x110] sm:$0xff] 0.0
        %510 = vst [vmem:[#allocation2 + $0x118] sm:$0xff] 0.0
        %511 = vst [vmem:[#allocation2 + $0x120] sm:$0xff] 0.0
        %512 = vst [vmem:[#allocation2 + $0x128] sm:$0xff] 0.0
        %513 = vst [vmem:[#allocation2 + $0x130] sm:$0xff] 0.0
        %514 = vst [vmem:[#allocation2 + $0x138] sm:$0xff] 0.0
        %515 = vst [vmem:[#allocation2 + $0x140] sm:$0xff] 0.0
        %516 = vst [vmem:[#allocation2 + $0x148] sm:$0xff] 0.0
        %517 = vst [vmem:[#allocation2 + $0x150] sm:$0xff] 0.0
        %518 = vst [vmem:[#allocation2 + $0x158] sm:$0xff] 0.0
        %519 = vst [vmem:[#allocation2 + $0x160] sm:$0xff] 0.0
        %520 = vst [vmem:[#allocation2 + $0x168] sm:$0xff] 0.0
        %521 = vst [vmem:[#allocation2 + $0x170] sm:$0xff] 0.0
        %522 = vst [vmem:[#allocation2 + $0x178] sm:$0xff] 0.0
        %523 = vst [vmem:[#allocation2 + $0x180] sm:$0xff] 0.0
        %524 = vst [vmem:[#allocation2 + $0x188] sm:$0xff] 0.0
        %525 = vst [vmem:[#allocation2 + $0x190] sm:$0xff] 0.0
        %526 = vst [vmem:[#allocation2 + $0x198] sm:$0xff] 0.0
        %527 = vst [vmem:[#allocation2 + $0x1a0] sm:$0xff] 0.0
        %528 = vst [vmem:[#allocation2 + $0x1a8] sm:$0xff] 0.0
        %529 = vst [vmem:[#allocation2 + $0x1b0] sm:$0xff] 0.0
        %530 = vst [vmem:[#allocation2 + $0x1b8] sm:$0xff] 0.0
        %531 = vst [vmem:[#allocation2 + $0x1c0] sm:$0xff] 0.0
        %532 = vst [vmem:[#allocation2 + $0x1c8] sm:$0xff] 0.0
        %533 = vst [vmem:[#allocation2 + $0x1d0] sm:$0xff] 0.0
        %534 = vst [vmem:[#allocation2 + $0x1d8] sm:$0xff] 0.0
        %535 = vst [vmem:[#allocation2 + $0x1e0] sm:$0xff] 0.0
        %536 = vst [vmem:[#allocation2 + $0x1e8] sm:$0xff] 0.0
        %537 = vst [vmem:[#allocation2 + $0x1f0] sm:$0xff] 0.0
        %538 = vst [vmem:[#allocation2 + $0x1f8] sm:$0xff] 0.0
        %539 = vst [vmem:[#allocation2 + $0x200] sm:$0xff] 0.0
        %540 = vst [vmem:[#allocation2 + $0x208] sm:$0xff] 0.0
        %541 = vst [vmem:[#allocation2 + $0x210] sm:$0xff] 0.0
        %542 = vst [vmem:[#allocation2 + $0x218] sm:$0xff] 0.0
        %543 = vst [vmem:[#allocation2 + $0x220] sm:$0xff] 0.0
        %544 = vst [vmem:[#allocation2 + $0x228] sm:$0xff] 0.0
        %545 = vst [vmem:[#allocation2 + $0x230] sm:$0xff] 0.0
        %546 = vst [vmem:[#allocation2 + $0x238] sm:$0xff] 0.0
        %547 = vst [vmem:[#allocation2 + $0x240] sm:$0xff] 0.0
        %548 = vst [vmem:[#allocation2 + $0x248] sm:$0xff] 0.0
        %549 = vst [vmem:[#allocation2 + $0x250] sm:$0xff] 0.0
        %550 = vst [vmem:[#allocation2 + $0x258] sm:$0xff] 0.0
        %551 = vst [vmem:[#allocation2 + $0x260] sm:$0xff] 0.0
        %552 = vst [vmem:[#allocation2 + $0x268] sm:$0xff] 0.0
        %553 = vst [vmem:[#allocation2 + $0x270] sm:$0xff] 0.0
        %554 = vst [vmem:[#allocation2 + $0x278] sm:$0xff] 0.0
        %555 = vst [vmem:[#allocation2 + $0x280] sm:$0xff] 0.0
        %556 = vst [vmem:[#allocation2 + $0x288] sm:$0xff] 0.0
        %557 = vst [vmem:[#allocation2 + $0x290] sm:$0xff] 0.0
        %558 = vst [vmem:[#allocation2 + $0x298] sm:$0xff] 0.0
        %559 = vst [vmem:[#allocation2 + $0x2a0] sm:$0xff] 0.0
        %560 = vst [vmem:[#allocation2 + $0x2a8] sm:$0xff] 0.0
        %561 = vst [vmem:[#allocation2 + $0x2b0] sm:$0xff] 0.0
        %562 = vst [vmem:[#allocation2 + $0x2b8] sm:$0xff] 0.0
        %563 = vst [vmem:[#allocation2 + $0x2c0] sm:$0xff] 0.0
        %564 = vst [vmem:[#allocation2 + $0x2c8] sm:$0xff] 0.0
        %565 = vst [vmem:[#allocation2 + $0x2d0] sm:$0xff] 0.0
        %566 = vst [vmem:[#allocation2 + $0x2d8] sm:$0xff] 0.0
        %567 = vst [vmem:[#allocation2 + $0x2e0] sm:$0xff] 0.0
        %568 = vst [vmem:[#allocation2 + $0x2e8] sm:$0xff] 0.0
        %569 = vst [vmem:[#allocation2 + $0x2f0] sm:$0xff] 0.0
        %570 = vst [vmem:[#allocation2 + $0x2f8] sm:$0xff] 0.0
        %571 = vst [vmem:[#allocation2 + $0x300] sm:$0xff] 0.0
        %572 = vst [vmem:[#allocation2 + $0x308] sm:$0xff] 0.0
        %573 = vst [vmem:[#allocation2 + $0x310] sm:$0xff] 0.0
        %574 = vst [vmem:[#allocation2 + $0x318] sm:$0xff] 0.0
        %575 = vst [vmem:[#allocation2 + $0x320] sm:$0xff] 0.0
        %576 = vst [vmem:[#allocation2 + $0x328] sm:$0xff] 0.0
        %577 = vst [vmem:[#allocation2 + $0x330] sm:$0xff] 0.0
        %578 = vst [vmem:[#allocation2 + $0x338] sm:$0xff] 0.0
        %579 = vst [vmem:[#allocation2 + $0x340] sm:$0xff] 0.0
        %580 = vst [vmem:[#allocation2 + $0x348] sm:$0xff] 0.0
        %581 = vst [vmem:[#allocation2 + $0x350] sm:$0xff] 0.0
        %582 = vst [vmem:[#allocation2 + $0x358] sm:$0xff] 0.0
        %583 = vst [vmem:[#allocation2 + $0x360] sm:$0xff] 0.0
        %584 = vst [vmem:[#allocation2 + $0x368] sm:$0xff] 0.0
        %585 = vst [vmem:[#allocation2 + $0x370] sm:$0xff] 0.0
        %586 = vst [vmem:[#allocation2 + $0x378] sm:$0xff] 0.0
        %587 = vst [vmem:[#allocation2 + $0x380] sm:$0xff] 0.0
        %588 = vst [vmem:[#allocation2 + $0x388] sm:$0xff] 0.0
        %589 = vst [vmem:[#allocation2 + $0x390] sm:$0xff] 0.0
        %590 = vst [vmem:[#allocation2 + $0x398] sm:$0xff] 0.0
        %591 = vst [vmem:[#allocation2 + $0x3a0] sm:$0xff] 0.0
        %592 = vst [vmem:[#allocation2 + $0x3a8] sm:$0xff] 0.0
        %593 = vst [vmem:[#allocation2 + $0x3b0] sm:$0xff] 0.0
        %594 = vst [vmem:[#allocation2 + $0x3b8] sm:$0xff] 0.0
        %595 = vst [vmem:[#allocation2 + $0x3c0] sm:$0xff] 0.0
        %596 = vst [vmem:[#allocation2 + $0x3c8] sm:$0xff] 0.0
        %597 = vst [vmem:[#allocation2 + $0x3d0] sm:$0xff] 0.0
        %598 = vst [vmem:[#allocation2 + $0x3d8] sm:$0xff] 0.0
        %599 = vst [vmem:[#allocation2 + $0x3e0] sm:$0xff] 0.0
        %600 = vst [vmem:[#allocation2 + $0x3e8] sm:$0xff] 0.0
        %601 = vst [vmem:[#allocation2 + $0x3f0] sm:$0xff] 0.0
        %602 = vst [vmem:[#allocation2 + $0x3f8] sm:$0xff] 0.0
      $region63: #{orthogonal_gcn_forward.1} parent=35 // pred_fallthru
        _
      %s603 = smul.u32 %s27, 512
      %s604 = sadd.s32 %s470, %s603
      %s605 = sshra.s32 %s604, 3
      %s606 = sand.u32 %s604, 7
      %s607 = smul.u32 %s605, 2
      %s608 = smul.addr %s607, 4
      %s609 = scalar_lea.vmem [#allocation4], %s608
      %v610 = vld [vmem:[%s609] sm:$0xff]
      %v611 = vld [vmem:[%s609 + $0x8] sm:$0xff]
      %v612 = vld [vmem:[%s609 + $0x10] sm:$0xff]
      %v613 = vld [vmem:[%s609 + $0x18] sm:$0xff]
      %v614 = vld [vmem:[%s609 + $0x20] sm:$0xff]
      %v615 = vld [vmem:[%s609 + $0x28] sm:$0xff]
      %v616 = vld [vmem:[%s609 + $0x30] sm:$0xff]
      %v617 = vld [vmem:[%s609 + $0x38] sm:$0xff]
      %v618 = vld [vmem:[%s609 + $0x40] sm:$0xff]
      %v619 = vld [vmem:[%s609 + $0x48] sm:$0xff]
      %v620 = vld [vmem:[%s609 + $0x50] sm:$0xff]
      %v621 = vld [vmem:[%s609 + $0x58] sm:$0xff]
      %v622 = vld [vmem:[%s609 + $0x60] sm:$0xff]
      %v623 = vld [vmem:[%s609 + $0x68] sm:$0xff]
      %v624 = vld [vmem:[%s609 + $0x70] sm:$0xff]
      %v625 = vld [vmem:[%s609 + $0x78] sm:$0xff]
      %v626 = vld [vmem:[%s609 + $0x80] sm:$0xff]
      %v627 = vld [vmem:[%s609 + $0x88] sm:$0xff]
      %v628 = vld [vmem:[%s609 + $0x90] sm:$0xff]
      %v629 = vld [vmem:[%s609 + $0x98] sm:$0xff]
      %v630 = vld [vmem:[%s609 + $0xa0] sm:$0xff]
      %v631 = vld [vmem:[%s609 + $0xa8] sm:$0xff]
      %v632 = vld [vmem:[%s609 + $0xb0] sm:$0xff]
      %v633 = vld [vmem:[%s609 + $0xb8] sm:$0xff]
      %v634 = vld [vmem:[%s609 + $0xc0] sm:$0xff]
      %v635 = vld [vmem:[%s609 + $0xc8] sm:$0xff]
      %v636 = vld [vmem:[%s609 + $0xd0] sm:$0xff]
      %v637 = vld [vmem:[%s609 + $0xd8] sm:$0xff]
      %v638 = vld [vmem:[%s609 + $0xe0] sm:$0xff]
      %v639 = vld [vmem:[%s609 + $0xe8] sm:$0xff]
      %v640 = vld [vmem:[%s609 + $0xf0] sm:$0xff]
      %v641 = vld [vmem:[%s609 + $0xf8] sm:$0xff]
      %v642 = vld [vmem:[%s609 + $0x100] sm:$0xff]
      %v643 = vld [vmem:[%s609 + $0x108] sm:$0xff]
      %v644 = vld [vmem:[%s609 + $0x110] sm:$0xff]
      %v645 = vld [vmem:[%s609 + $0x118] sm:$0xff]
      %v646 = vld [vmem:[%s609 + $0x120] sm:$0xff]
      %v647 = vld [vmem:[%s609 + $0x128] sm:$0xff]
      %v648 = vld [vmem:[%s609 + $0x130] sm:$0xff]
      %v649 = vld [vmem:[%s609 + $0x138] sm:$0xff]
      %v650 = vld [vmem:[%s609 + $0x140] sm:$0xff]
      %v651 = vld [vmem:[%s609 + $0x148] sm:$0xff]
      %v652 = vld [vmem:[%s609 + $0x150] sm:$0xff]
      %v653 = vld [vmem:[%s609 + $0x158] sm:$0xff]
      %v654 = vld [vmem:[%s609 + $0x160] sm:$0xff]
      %v655 = vld [vmem:[%s609 + $0x168] sm:$0xff]
      %v656 = vld [vmem:[%s609 + $0x170] sm:$0xff]
      %v657 = vld [vmem:[%s609 + $0x178] sm:$0xff]
      %v658 = vld [vmem:[%s609 + $0x180] sm:$0xff]
      %v659 = vld [vmem:[%s609 + $0x188] sm:$0xff]
      %v660 = vld [vmem:[%s609 + $0x190] sm:$0xff]
      %v661 = vld [vmem:[%s609 + $0x198] sm:$0xff]
      %v662 = vld [vmem:[%s609 + $0x1a0] sm:$0xff]
      %v663 = vld [vmem:[%s609 + $0x1a8] sm:$0xff]
      %v664 = vld [vmem:[%s609 + $0x1b0] sm:$0xff]
      %v665 = vld [vmem:[%s609 + $0x1b8] sm:$0xff]
      %v666 = vld [vmem:[%s609 + $0x1c0] sm:$0xff]
      %v667 = vld [vmem:[%s609 + $0x1c8] sm:$0xff]
      %v668 = vld [vmem:[%s609 + $0x1d0] sm:$0xff]
      %v669 = vld [vmem:[%s609 + $0x1d8] sm:$0xff]
      %v670 = vld [vmem:[%s609 + $0x1e0] sm:$0xff]
      %v671 = vld [vmem:[%s609 + $0x1e8] sm:$0xff]
      %v672 = vld [vmem:[%s609 + $0x1f0] sm:$0xff]
      %v673 = vld [vmem:[%s609 + $0x1f8] sm:$0xff]
      %v674 = vld [vmem:[#allocation2] sm:$0xff]
      %v675 = vld [vmem:[#allocation2 + $0x8] sm:$0xff]
      %v676 = vld [vmem:[#allocation2 + $0x10] sm:$0xff]
      %v677 = vld [vmem:[#allocation2 + $0x18] sm:$0xff]
      %v678 = vld [vmem:[#allocation2 + $0x20] sm:$0xff]
      %v679 = vld [vmem:[#allocation2 + $0x28] sm:$0xff]
      %v680 = vld [vmem:[#allocation2 + $0x30] sm:$0xff]
      %v681 = vld [vmem:[#allocation2 + $0x38] sm:$0xff]
      %v682 = vld [vmem:[#allocation2 + $0x40] sm:$0xff]
      %v683 = vld [vmem:[#allocation2 + $0x48] sm:$0xff]
      %v684 = vld [vmem:[#allocation2 + $0x50] sm:$0xff]
      %v685 = vld [vmem:[#allocation2 + $0x58] sm:$0xff]
      %v686 = vld [vmem:[#allocation2 + $0x60] sm:$0xff]
      %v687 = vld [vmem:[#allocation2 + $0x68] sm:$0xff]
      %v688 = vld [vmem:[#allocation2 + $0x70] sm:$0xff]
      %v689 = vld [vmem:[#allocation2 + $0x78] sm:$0xff]
      %v690 = vld [vmem:[#allocation2 + $0x80] sm:$0xff]
      %v691 = vld [vmem:[#allocation2 + $0x88] sm:$0xff]
      %v692 = vld [vmem:[#allocation2 + $0x90] sm:$0xff]
      %v693 = vld [vmem:[#allocation2 + $0x98] sm:$0xff]
      %v694 = vld [vmem:[#allocation2 + $0xa0] sm:$0xff]
      %v695 = vld [vmem:[#allocation2 + $0xa8] sm:$0xff]
      %v696 = vld [vmem:[#allocation2 + $0xb0] sm:$0xff]
      %v697 = vld [vmem:[#allocation2 + $0xb8] sm:$0xff]
      %v698 = vld [vmem:[#allocation2 + $0xc0] sm:$0xff]
      %v699 = vld [vmem:[#allocation2 + $0xc8] sm:$0xff]
      %v700 = vld [vmem:[#allocation2 + $0xd0] sm:$0xff]
      %v701 = vld [vmem:[#allocation2 + $0xd8] sm:$0xff]
      %v702 = vld [vmem:[#allocation2 + $0xe0] sm:$0xff]
      %v703 = vld [vmem:[#allocation2 + $0xe8] sm:$0xff]
      %v704 = vld [vmem:[#allocation2 + $0xf0] sm:$0xff]
      %v705 = vld [vmem:[#allocation2 + $0xf8] sm:$0xff]
      %v706 = vld [vmem:[#allocation2 + $0x100] sm:$0xff]
      %v707 = vld [vmem:[#allocation2 + $0x108] sm:$0xff]
      %v708 = vld [vmem:[#allocation2 + $0x110] sm:$0xff]
      %v709 = vld [vmem:[#allocation2 + $0x118] sm:$0xff]
      %v710 = vld [vmem:[#allocation2 + $0x120] sm:$0xff]
      %v711 = vld [vmem:[#allocation2 + $0x128] sm:$0xff]
      %v712 = vld [vmem:[#allocation2 + $0x130] sm:$0xff]
      %v713 = vld [vmem:[#allocation2 + $0x138] sm:$0xff]
      %v714 = vld [vmem:[#allocation2 + $0x140] sm:$0xff]
      %v715 = vld [vmem:[#allocation2 + $0x148] sm:$0xff]
      %v716 = vld [vmem:[#allocation2 + $0x150] sm:$0xff]
      %v717 = vld [vmem:[#allocation2 + $0x158] sm:$0xff]
      %v718 = vld [vmem:[#allocation2 + $0x160] sm:$0xff]
      %v719 = vld [vmem:[#allocation2 + $0x168] sm:$0xff]
      %v720 = vld [vmem:[#allocation2 + $0x170] sm:$0xff]
      %v721 = vld [vmem:[#allocation2 + $0x178] sm:$0xff]
      %v722 = vld [vmem:[#allocation2 + $0x180] sm:$0xff]
      %v723 = vld [vmem:[#allocation2 + $0x188] sm:$0xff]
      %v724 = vld [vmem:[#allocation2 + $0x190] sm:$0xff]
      %v725 = vld [vmem:[#allocation2 + $0x198] sm:$0xff]
      %v726 = vld [vmem:[#allocation2 + $0x1a0] sm:$0xff]
      %v727 = vld [vmem:[#allocation2 + $0x1a8] sm:$0xff]
      %v728 = vld [vmem:[#allocation2 + $0x1b0] sm:$0xff]
      %v729 = vld [vmem:[#allocation2 + $0x1b8] sm:$0xff]
      %v730 = vld [vmem:[#allocation2 + $0x1c0] sm:$0xff]
      %v731 = vld [vmem:[#allocation2 + $0x1c8] sm:$0xff]
      %v732 = vld [vmem:[#allocation2 + $0x1d0] sm:$0xff]
      %v733 = vld [vmem:[#allocation2 + $0x1d8] sm:$0xff]
      %v734 = vld [vmem:[#allocation2 + $0x1e0] sm:$0xff]
      %v735 = vld [vmem:[#allocation2 + $0x1e8] sm:$0xff]
      %v736 = vld [vmem:[#allocation2 + $0x1f0] sm:$0xff]
      %v737 = vld [vmem:[#allocation2 + $0x1f8] sm:$0xff]
      %v738 = vld [vmem:[#allocation2 + $0x200] sm:$0xff]
      %v739 = vld [vmem:[#allocation2 + $0x208] sm:$0xff]
      %v740 = vld [vmem:[#allocation2 + $0x210] sm:$0xff]
      %v741 = vld [vmem:[#allocation2 + $0x218] sm:$0xff]
      %v742 = vld [vmem:[#allocation2 + $0x220] sm:$0xff]
      %v743 = vld [vmem:[#allocation2 + $0x228] sm:$0xff]
      %v744 = vld [vmem:[#allocation2 + $0x230] sm:$0xff]
      %v745 = vld [vmem:[#allocation2 + $0x238] sm:$0xff]
      %v746 = vld [vmem:[#allocation2 + $0x240] sm:$0xff]
      %v747 = vld [vmem:[#allocation2 + $0x248] sm:$0xff]
      %v748 = vld [vmem:[#allocation2 + $0x250] sm:$0xff]
      %v749 = vld [vmem:[#allocation2 + $0x258] sm:$0xff]
      %v750 = vld [vmem:[#allocation2 + $0x260] sm:$0xff]
      %v751 = vld [vmem:[#allocation2 + $0x268] sm:$0xff]
      %v752 = vld [vmem:[#allocation2 + $0x270] sm:$0xff]
      %v753 = vld [vmem:[#allocation2 + $0x278] sm:$0xff]
      %v754 = vld [vmem:[#allocation2 + $0x280] sm:$0xff]
      %v755 = vld [vmem:[#allocation2 + $0x288] sm:$0xff]
      %v756 = vld [vmem:[#allocation2 + $0x290] sm:$0xff]
      %v757 = vld [vmem:[#allocation2 + $0x298] sm:$0xff]
      %v758 = vld [vmem:[#allocation2 + $0x2a0] sm:$0xff]
      %v759 = vld [vmem:[#allocation2 + $0x2a8] sm:$0xff]
      %v760 = vld [vmem:[#allocation2 + $0x2b0] sm:$0xff]
      %v761 = vld [vmem:[#allocation2 + $0x2b8] sm:$0xff]
      %v762 = vld [vmem:[#allocation2 + $0x2c0] sm:$0xff]
      %v763 = vld [vmem:[#allocation2 + $0x2c8] sm:$0xff]
      %v764 = vld [vmem:[#allocation2 + $0x2d0] sm:$0xff]
      %v765 = vld [vmem:[#allocation2 + $0x2d8] sm:$0xff]
      %v766 = vld [vmem:[#allocation2 + $0x2e0] sm:$0xff]
      %v767 = vld [vmem:[#allocation2 + $0x2e8] sm:$0xff]
      %v768 = vld [vmem:[#allocation2 + $0x2f0] sm:$0xff]
      %v769 = vld [vmem:[#allocation2 + $0x2f8] sm:$0xff]
      %v770 = vld [vmem:[#allocation2 + $0x300] sm:$0xff]
      %v771 = vld [vmem:[#allocation2 + $0x308] sm:$0xff]
      %v772 = vld [vmem:[#allocation2 + $0x310] sm:$0xff]
      %v773 = vld [vmem:[#allocation2 + $0x318] sm:$0xff]
      %v774 = vld [vmem:[#allocation2 + $0x320] sm:$0xff]
      %v775 = vld [vmem:[#allocation2 + $0x328] sm:$0xff]
      %v776 = vld [vmem:[#allocation2 + $0x330] sm:$0xff]
      %v777 = vld [vmem:[#allocation2 + $0x338] sm:$0xff]
      %v778 = vld [vmem:[#allocation2 + $0x340] sm:$0xff]
      %v779 = vld [vmem:[#allocation2 + $0x348] sm:$0xff]
      %v780 = vld [vmem:[#allocation2 + $0x350] sm:$0xff]
      %v781 = vld [vmem:[#allocation2 + $0x358] sm:$0xff]
      %v782 = vld [vmem:[#allocation2 + $0x360] sm:$0xff]
      %v783 = vld [vmem:[#allocation2 + $0x368] sm:$0xff]
      %v784 = vld [vmem:[#allocation2 + $0x370] sm:$0xff]
      %v785 = vld [vmem:[#allocation2 + $0x378] sm:$0xff]
      %v786 = vld [vmem:[#allocation2 + $0x380] sm:$0xff]
      %v787 = vld [vmem:[#allocation2 + $0x388] sm:$0xff]
      %v788 = vld [vmem:[#allocation2 + $0x390] sm:$0xff]
      %v789 = vld [vmem:[#allocation2 + $0x398] sm:$0xff]
      %v790 = vld [vmem:[#allocation2 + $0x3a0] sm:$0xff]
      %v791 = vld [vmem:[#allocation2 + $0x3a8] sm:$0xff]
      %v792 = vld [vmem:[#allocation2 + $0x3b0] sm:$0xff]
      %v793 = vld [vmem:[#allocation2 + $0x3b8] sm:$0xff]
      %v794 = vld [vmem:[#allocation2 + $0x3c0] sm:$0xff]
      %v795 = vld [vmem:[#allocation2 + $0x3c8] sm:$0xff]
      %v796 = vld [vmem:[#allocation2 + $0x3d0] sm:$0xff]
      %v797 = vld [vmem:[#allocation2 + $0x3d8] sm:$0xff]
      %v798 = vld [vmem:[#allocation2 + $0x3e0] sm:$0xff]
      %v799 = vld [vmem:[#allocation2 + $0x3e8] sm:$0xff]
      %v800 = vld [vmem:[#allocation2 + $0x3f0] sm:$0xff]
      %v801 = vld [vmem:[#allocation2 + $0x3f8] sm:$0xff]
      %v802 = vld [vmem:[%s279] sm:$0xff]
      %v803 = vld [vmem:[%s279 + $0x8] sm:$0xff]
      %v804 = vld [vmem:[%s279 + $0x10] sm:$0xff]
      %v805 = vld [vmem:[%s279 + $0x18] sm:$0xff]
      %v806 = vld [vmem:[%s279 + $0x20] sm:$0xff]
      %v807 = vld [vmem:[%s279 + $0x28] sm:$0xff]
      %v808 = vld [vmem:[%s279 + $0x30] sm:$0xff]
      %v809 = vld [vmem:[%s279 + $0x38] sm:$0xff]
      %v810 = vld [vmem:[%s279 + $0x40] sm:$0xff]
      %v811 = vld [vmem:[%s279 + $0x48] sm:$0xff]
      %v812 = vld [vmem:[%s279 + $0x50] sm:$0xff]
      %v813 = vld [vmem:[%s279 + $0x58] sm:$0xff]
      %v814 = vld [vmem:[%s279 + $0x60] sm:$0xff]
      %v815 = vld [vmem:[%s279 + $0x68] sm:$0xff]
      %v816 = vld [vmem:[%s279 + $0x70] sm:$0xff]
      %v817 = vld [vmem:[%s279 + $0x78] sm:$0xff]
      %v818 = vld [vmem:[%s279 + $0x80] sm:$0xff]
      %v819 = vld [vmem:[%s279 + $0x88] sm:$0xff]
      %v820 = vld [vmem:[%s279 + $0x90] sm:$0xff]
      %v821 = vld [vmem:[%s279 + $0x98] sm:$0xff]
      %v822 = vld [vmem:[%s279 + $0xa0] sm:$0xff]
      %v823 = vld [vmem:[%s279 + $0xa8] sm:$0xff]
      %v824 = vld [vmem:[%s279 + $0xb0] sm:$0xff]
      %v825 = vld [vmem:[%s279 + $0xb8] sm:$0xff]
      %v826 = vld [vmem:[%s279 + $0xc0] sm:$0xff]
      %v827 = vld [vmem:[%s279 + $0xc8] sm:$0xff]
      %v828 = vld [vmem:[%s279 + $0xd0] sm:$0xff]
      %v829 = vld [vmem:[%s279 + $0xd8] sm:$0xff]
      %v830 = vld [vmem:[%s279 + $0xe0] sm:$0xff]
      %v831 = vld [vmem:[%s279 + $0xe8] sm:$0xff]
      %v832 = vld [vmem:[%s279 + $0xf0] sm:$0xff]
      %v833 = vld [vmem:[%s279 + $0xf8] sm:$0xff]
      %v834 = vld [vmem:[%s279 + $0x100] sm:$0xff]
      %v835 = vld [vmem:[%s279 + $0x108] sm:$0xff]
      %v836 = vld [vmem:[%s279 + $0x110] sm:$0xff]
      %v837 = vld [vmem:[%s279 + $0x118] sm:$0xff]
      %v838 = vld [vmem:[%s279 + $0x120] sm:$0xff]
      %v839 = vld [vmem:[%s279 + $0x128] sm:$0xff]
      %v840 = vld [vmem:[%s279 + $0x130] sm:$0xff]
      %v841 = vld [vmem:[%s279 + $0x138] sm:$0xff]
      %v842 = vld [vmem:[%s279 + $0x140] sm:$0xff]
      %v843 = vld [vmem:[%s279 + $0x148] sm:$0xff]
      %v844 = vld [vmem:[%s279 + $0x150] sm:$0xff]
      %v845 = vld [vmem:[%s279 + $0x158] sm:$0xff]
      %v846 = vld [vmem:[%s279 + $0x160] sm:$0xff]
      %v847 = vld [vmem:[%s279 + $0x168] sm:$0xff]
      %v848 = vld [vmem:[%s279 + $0x170] sm:$0xff]
      %v849 = vld [vmem:[%s279 + $0x178] sm:$0xff]
      %v850 = vld [vmem:[%s279 + $0x180] sm:$0xff]
      %v851 = vld [vmem:[%s279 + $0x188] sm:$0xff]
      %v852 = vld [vmem:[%s279 + $0x190] sm:$0xff]
      %v853 = vld [vmem:[%s279 + $0x198] sm:$0xff]
      %v854 = vld [vmem:[%s279 + $0x1a0] sm:$0xff]
      %v855 = vld [vmem:[%s279 + $0x1a8] sm:$0xff]
      %v856 = vld [vmem:[%s279 + $0x1b0] sm:$0xff]
      %v857 = vld [vmem:[%s279 + $0x1b8] sm:$0xff]
      %v858 = vld [vmem:[%s279 + $0x1c0] sm:$0xff]
      %v859 = vld [vmem:[%s279 + $0x1c8] sm:$0xff]
      %v860 = vld [vmem:[%s279 + $0x1d0] sm:$0xff]
      %v861 = vld [vmem:[%s279 + $0x1d8] sm:$0xff]
      %v862 = vld [vmem:[%s279 + $0x1e0] sm:$0xff]
      %v863 = vld [vmem:[%s279 + $0x1e8] sm:$0xff]
      %v864 = vld [vmem:[%s279 + $0x1f0] sm:$0xff]
      %v865 = vld [vmem:[%s279 + $0x1f8] sm:$0xff]
      %v866 = vld [vmem:[%s279 + $0x200] sm:$0xff]
      %v867 = vld [vmem:[%s279 + $0x208] sm:$0xff]
      %v868 = vld [vmem:[%s279 + $0x210] sm:$0xff]
      %v869 = vld [vmem:[%s279 + $0x218] sm:$0xff]
      %v870 = vld [vmem:[%s279 + $0x220] sm:$0xff]
      %v871 = vld [vmem:[%s279 + $0x228] sm:$0xff]
      %v872 = vld [vmem:[%s279 + $0x230] sm:$0xff]
      %v873 = vld [vmem:[%s279 + $0x238] sm:$0xff]
      %v874 = vld [vmem:[%s279 + $0x240] sm:$0xff]
      %v875 = vld [vmem:[%s279 + $0x248] sm:$0xff]
      %v876 = vld [vmem:[%s279 + $0x250] sm:$0xff]
      %v877 = vld [vmem:[%s279 + $0x258] sm:$0xff]
      %v878 = vld [vmem:[%s279 + $0x260] sm:$0xff]
      %v879 = vld [vmem:[%s279 + $0x268] sm:$0xff]
      %v880 = vld [vmem:[%s279 + $0x270] sm:$0xff]
      %v881 = vld [vmem:[%s279 + $0x278] sm:$0xff]
      %v882 = vld [vmem:[%s279 + $0x280] sm:$0xff]
      %v883 = vld [vmem:[%s279 + $0x288] sm:$0xff]
      %v884 = vld [vmem:[%s279 + $0x290] sm:$0xff]
      %v885 = vld [vmem:[%s279 + $0x298] sm:$0xff]
      %v886 = vld [vmem:[%s279 + $0x2a0] sm:$0xff]
      %v887 = vld [vmem:[%s279 + $0x2a8] sm:$0xff]
      %v888 = vld [vmem:[%s279 + $0x2b0] sm:$0xff]
      %v889 = vld [vmem:[%s279 + $0x2b8] sm:$0xff]
      %v890 = vld [vmem:[%s279 + $0x2c0] sm:$0xff]
      %v891 = vld [vmem:[%s279 + $0x2c8] sm:$0xff]
      %v892 = vld [vmem:[%s279 + $0x2d0] sm:$0xff]
      %v893 = vld [vmem:[%s279 + $0x2d8] sm:$0xff]
      %v894 = vld [vmem:[%s279 + $0x2e0] sm:$0xff]
      %v895 = vld [vmem:[%s279 + $0x2e8] sm:$0xff]
      %v896 = vld [vmem:[%s279 + $0x2f0] sm:$0xff]
      %v897 = vld [vmem:[%s279 + $0x2f8] sm:$0xff]
      %v898 = vld [vmem:[%s279 + $0x300] sm:$0xff]
      %v899 = vld [vmem:[%s279 + $0x308] sm:$0xff]
      %v900 = vld [vmem:[%s279 + $0x310] sm:$0xff]
      %v901 = vld [vmem:[%s279 + $0x318] sm:$0xff]
      %v902 = vld [vmem:[%s279 + $0x320] sm:$0xff]
      %v903 = vld [vmem:[%s279 + $0x328] sm:$0xff]
      %v904 = vld [vmem:[%s279 + $0x330] sm:$0xff]
      %v905 = vld [vmem:[%s279 + $0x338] sm:$0xff]
      %v906 = vld [vmem:[%s279 + $0x340] sm:$0xff]
      %v907 = vld [vmem:[%s279 + $0x348] sm:$0xff]
      %v908 = vld [vmem:[%s279 + $0x350] sm:$0xff]
      %v909 = vld [vmem:[%s279 + $0x358] sm:$0xff]
      %v910 = vld [vmem:[%s279 + $0x360] sm:$0xff]
      %v911 = vld [vmem:[%s279 + $0x368] sm:$0xff]
      %v912 = vld [vmem:[%s279 + $0x370] sm:$0xff]
      %v913 = vld [vmem:[%s279 + $0x378] sm:$0xff]
      %v914 = vld [vmem:[%s279 + $0x380] sm:$0xff]
      %v915 = vld [vmem:[%s279 + $0x388] sm:$0xff]
      %v916 = vld [vmem:[%s279 + $0x390] sm:$0xff]
      %v917 = vld [vmem:[%s279 + $0x398] sm:$0xff]
      %v918 = vld [vmem:[%s279 + $0x3a0] sm:$0xff]
      %v919 = vld [vmem:[%s279 + $0x3a8] sm:$0xff]
      %v920 = vld [vmem:[%s279 + $0x3b0] sm:$0xff]
      %v921 = vld [vmem:[%s279 + $0x3b8] sm:$0xff]
      %v922 = vld [vmem:[%s279 + $0x3c0] sm:$0xff]
      %v923 = vld [vmem:[%s279 + $0x3c8] sm:$0xff]
      %v924 = vld [vmem:[%s279 + $0x3d0] sm:$0xff]
      %v925 = vld [vmem:[%s279 + $0x3d8] sm:$0xff]
      %v926 = vld [vmem:[%s279 + $0x3e0] sm:$0xff]
      %v927 = vld [vmem:[%s279 + $0x3e8] sm:$0xff]
      %v928 = vld [vmem:[%s279 + $0x3f0] sm:$0xff]
      %v929 = vld [vmem:[%s279 + $0x3f8] sm:$0xff]
      %v1058 = vunpack.c.l.b16 %v802
      %v1059 = vunpack.c.h.b16 %v802
      %v1060 = vunpack.c.l.b16 %v803
      %v1061 = vunpack.c.h.b16 %v803
      %v1062 = vunpack.c.l.b16 %v804
      %v1063 = vunpack.c.h.b16 %v804
      %v1064 = vunpack.c.l.b16 %v805
      %v1065 = vunpack.c.h.b16 %v805
      %v1066 = vunpack.c.l.b16 %v806
      %v1067 = vunpack.c.h.b16 %v806
      %v1068 = vunpack.c.l.b16 %v807
      %v1069 = vunpack.c.h.b16 %v807
      %v1070 = vunpack.c.l.b16 %v808
      %v1071 = vunpack.c.h.b16 %v808
      %v1072 = vunpack.c.l.b16 %v809
      %v1073 = vunpack.c.h.b16 %v809
      %v1074 = vunpack.c.l.b16 %v810
      %v1075 = vunpack.c.h.b16 %v810
      %v1076 = vunpack.c.l.b16 %v811
      %v1077 = vunpack.c.h.b16 %v811
      %v1078 = vunpack.c.l.b16 %v812
      %v1079 = vunpack.c.h.b16 %v812
      %v1080 = vunpack.c.l.b16 %v813
      %v1081 = vunpack.c.h.b16 %v813
      %v1082 = vunpack.c.l.b16 %v814
      %v1083 = vunpack.c.h.b16 %v814
      %v1084 = vunpack.c.l.b16 %v815
      %v1085 = vunpack.c.h.b16 %v815
      %v1086 = vunpack.c.l.b16 %v816
      %v1087 = vunpack.c.h.b16 %v816
      %v1088 = vunpack.c.l.b16 %v817
      %v1089 = vunpack.c.h.b16 %v817
      %v1090 = vunpack.c.l.b16 %v818
      %v1091 = vunpack.c.h.b16 %v818
      %v1092 = vunpack.c.l.b16 %v819
      %v1093 = vunpack.c.h.b16 %v819
      %v1094 = vunpack.c.l.b16 %v820
      %v1095 = vunpack.c.h.b16 %v820
      %v1096 = vunpack.c.l.b16 %v821
      %v1097 = vunpack.c.h.b16 %v821
      %v1098 = vunpack.c.l.b16 %v822
      %v1099 = vunpack.c.h.b16 %v822
      %v1100 = vunpack.c.l.b16 %v823
      %v1101 = vunpack.c.h.b16 %v823
      %v1102 = vunpack.c.l.b16 %v824
      %v1103 = vunpack.c.h.b16 %v824
      %v1104 = vunpack.c.l.b16 %v825
      %v1105 = vunpack.c.h.b16 %v825
      %v1106 = vunpack.c.l.b16 %v826
      %v1107 = vunpack.c.h.b16 %v826
      %v1108 = vunpack.c.l.b16 %v827
      %v1109 = vunpack.c.h.b16 %v827
      %v1110 = vunpack.c.l.b16 %v828
      %v1111 = vunpack.c.h.b16 %v828
      %v1112 = vunpack.c.l.b16 %v829
      %v1113 = vunpack.c.h.b16 %v829
      %v1114 = vunpack.c.l.b16 %v830
      %v1115 = vunpack.c.h.b16 %v830
      %v1116 = vunpack.c.l.b16 %v831
      %v1117 = vunpack.c.h.b16 %v831
      %v1118 = vunpack.c.l.b16 %v832
      %v1119 = vunpack.c.h.b16 %v832
      %v1120 = vunpack.c.l.b16 %v833
      %v1121 = vunpack.c.h.b16 %v833
      %v1122 = vunpack.c.l.b16 %v834
      %v1123 = vunpack.c.h.b16 %v834
      %v1124 = vunpack.c.l.b16 %v835
      %v1125 = vunpack.c.h.b16 %v835
      %v1126 = vunpack.c.l.b16 %v836
      %v1127 = vunpack.c.h.b16 %v836
      %v1128 = vunpack.c.l.b16 %v837
      %v1129 = vunpack.c.h.b16 %v837
      %v1130 = vunpack.c.l.b16 %v838
      %v1131 = vunpack.c.h.b16 %v838
      %v1132 = vunpack.c.l.b16 %v839
      %v1133 = vunpack.c.h.b16 %v839
      %v1134 = vunpack.c.l.b16 %v840
      %v1135 = vunpack.c.h.b16 %v840
      %v1136 = vunpack.c.l.b16 %v841
      %v1137 = vunpack.c.h.b16 %v841
      %v1138 = vunpack.c.l.b16 %v842
      %v1139 = vunpack.c.h.b16 %v842
      %v1140 = vunpack.c.l.b16 %v843
      %v1141 = vunpack.c.h.b16 %v843
      %v1142 = vunpack.c.l.b16 %v844
      %v1143 = vunpack.c.h.b16 %v844
      %v1144 = vunpack.c.l.b16 %v845
      %v1145 = vunpack.c.h.b16 %v845
      %v1146 = vunpack.c.l.b16 %v846
      %v1147 = vunpack.c.h.b16 %v846
      %v1148 = vunpack.c.l.b16 %v847
      %v1149 = vunpack.c.h.b16 %v847
      %v1150 = vunpack.c.l.b16 %v848
      %v1151 = vunpack.c.h.b16 %v848
      %v1152 = vunpack.c.l.b16 %v849
      %v1153 = vunpack.c.h.b16 %v849
      %v1154 = vunpack.c.l.b16 %v850
      %v1155 = vunpack.c.h.b16 %v850
      %v1156 = vunpack.c.l.b16 %v851
      %v1157 = vunpack.c.h.b16 %v851
      %v1158 = vunpack.c.l.b16 %v852
      %v1159 = vunpack.c.h.b16 %v852
      %v1160 = vunpack.c.l.b16 %v853
      %v1161 = vunpack.c.h.b16 %v853
      %v1162 = vunpack.c.l.b16 %v854
      %v1163 = vunpack.c.h.b16 %v854
      %v1164 = vunpack.c.l.b16 %v855
      %v1165 = vunpack.c.h.b16 %v855
      %v1166 = vunpack.c.l.b16 %v856
      %v1167 = vunpack.c.h.b16 %v856
      %v1168 = vunpack.c.l.b16 %v857
      %v1169 = vunpack.c.h.b16 %v857
      %v1170 = vunpack.c.l.b16 %v858
      %v1171 = vunpack.c.h.b16 %v858
      %v1172 = vunpack.c.l.b16 %v859
      %v1173 = vunpack.c.h.b16 %v859
      %v1174 = vunpack.c.l.b16 %v860
      %v1175 = vunpack.c.h.b16 %v860
      %v1176 = vunpack.c.l.b16 %v861
      %v1177 = vunpack.c.h.b16 %v861
      %v1178 = vunpack.c.l.b16 %v862
      %v1179 = vunpack.c.h.b16 %v862
      %v1180 = vunpack.c.l.b16 %v863
      %v1181 = vunpack.c.h.b16 %v863
      %v1182 = vunpack.c.l.b16 %v864
      %v1183 = vunpack.c.h.b16 %v864
      %v1184 = vunpack.c.l.b16 %v865
      %v1185 = vunpack.c.h.b16 %v865
      %v1186 = vunpack.c.l.b16 %v866
      %v1187 = vunpack.c.h.b16 %v866
      %v1188 = vunpack.c.l.b16 %v867
      %v1189 = vunpack.c.h.b16 %v867
      %v1190 = vunpack.c.l.b16 %v868
      %v1191 = vunpack.c.h.b16 %v868
      %v1192 = vunpack.c.l.b16 %v869
      %v1193 = vunpack.c.h.b16 %v869
      %v1194 = vunpack.c.l.b16 %v870
      %v1195 = vunpack.c.h.b16 %v870
      %v1196 = vunpack.c.l.b16 %v871
      %v1197 = vunpack.c.h.b16 %v871
      %v1198 = vunpack.c.l.b16 %v872
      %v1199 = vunpack.c.h.b16 %v872
      %v1200 = vunpack.c.l.b16 %v873
      %v1201 = vunpack.c.h.b16 %v873
      %v1202 = vunpack.c.l.b16 %v874
      %v1203 = vunpack.c.h.b16 %v874
      %v1204 = vunpack.c.l.b16 %v875
      %v1205 = vunpack.c.h.b16 %v875
      %v1206 = vunpack.c.l.b16 %v876
      %v1207 = vunpack.c.h.b16 %v876
      %v1208 = vunpack.c.l.b16 %v877
      %v1209 = vunpack.c.h.b16 %v877
      %v1210 = vunpack.c.l.b16 %v878
      %v1211 = vunpack.c.h.b16 %v878
      %v1212 = vunpack.c.l.b16 %v879
      %v1213 = vunpack.c.h.b16 %v879
      %v1214 = vunpack.c.l.b16 %v880
      %v1215 = vunpack.c.h.b16 %v880
      %v1216 = vunpack.c.l.b16 %v881
      %v1217 = vunpack.c.h.b16 %v881
      %v1218 = vunpack.c.l.b16 %v882
      %v1219 = vunpack.c.h.b16 %v882
      %v1220 = vunpack.c.l.b16 %v883
      %v1221 = vunpack.c.h.b16 %v883
      %v1222 = vunpack.c.l.b16 %v884
      %v1223 = vunpack.c.h.b16 %v884
      %v1224 = vunpack.c.l.b16 %v885
      %v1225 = vunpack.c.h.b16 %v885
      %v1226 = vunpack.c.l.b16 %v886
      %v1227 = vunpack.c.h.b16 %v886
      %v1228 = vunpack.c.l.b16 %v887
      %v1229 = vunpack.c.h.b16 %v887
      %v1230 = vunpack.c.l.b16 %v888
      %v1231 = vunpack.c.h.b16 %v888
      %v1232 = vunpack.c.l.b16 %v889
      %v1233 = vunpack.c.h.b16 %v889
      %v1234 = vunpack.c.l.b16 %v890
      %v1235 = vunpack.c.h.b16 %v890
      %v1236 = vunpack.c.l.b16 %v891
      %v1237 = vunpack.c.h.b16 %v891
      %v1238 = vunpack.c.l.b16 %v892
      %v1239 = vunpack.c.h.b16 %v892
      %v1240 = vunpack.c.l.b16 %v893
      %v1241 = vunpack.c.h.b16 %v893
      %v1242 = vunpack.c.l.b16 %v894
      %v1243 = vunpack.c.h.b16 %v894
      %v1244 = vunpack.c.l.b16 %v895
      %v1245 = vunpack.c.h.b16 %v895
      %v1246 = vunpack.c.l.b16 %v896
      %v1247 = vunpack.c.h.b16 %v896
      %v1248 = vunpack.c.l.b16 %v897
      %v1249 = vunpack.c.h.b16 %v897
      %v1250 = vunpack.c.l.b16 %v898
      %v1251 = vunpack.c.h.b16 %v898
      %v1252 = vunpack.c.l.b16 %v899
      %v1253 = vunpack.c.h.b16 %v899
      %v1254 = vunpack.c.l.b16 %v900
      %v1255 = vunpack.c.h.b16 %v900
      %v1256 = vunpack.c.l.b16 %v901
      %v1257 = vunpack.c.h.b16 %v901
      %v1258 = vunpack.c.l.b16 %v902
      %v1259 = vunpack.c.h.b16 %v902
      %v1260 = vunpack.c.l.b16 %v903
      %v1261 = vunpack.c.h.b16 %v903
      %v1262 = vunpack.c.l.b16 %v904
      %v1263 = vunpack.c.h.b16 %v904
      %v1264 = vunpack.c.l.b16 %v905
      %v1265 = vunpack.c.h.b16 %v905
      %v1266 = vunpack.c.l.b16 %v906
      %v1267 = vunpack.c.h.b16 %v906
      %v1268 = vunpack.c.l.b16 %v907
      %v1269 = vunpack.c.h.b16 %v907
      %v1270 = vunpack.c.l.b16 %v908
      %v1271 = vunpack.c.h.b16 %v908
      %v1272 = vunpack.c.l.b16 %v909
      %v1273 = vunpack.c.h.b16 %v909
      %v1274 = vunpack.c.l.b16 %v910
      %v1275 = vunpack.c.h.b16 %v910
      %v1276 = vunpack.c.l.b16 %v911
      %v1277 = vunpack.c.h.b16 %v911
      %v1278 = vunpack.c.l.b16 %v912
      %v1279 = vunpack.c.h.b16 %v912
      %v1280 = vunpack.c.l.b16 %v913
      %v1281 = vunpack.c.h.b16 %v913
      %v1282 = vunpack.c.l.b16 %v914
      %v1283 = vunpack.c.h.b16 %v914
      %v1284 = vunpack.c.l.b16 %v915
      %v1285 = vunpack.c.h.b16 %v915
      %v1286 = vunpack.c.l.b16 %v916
      %v1287 = vunpack.c.h.b16 %v916
      %v1288 = vunpack.c.l.b16 %v917
      %v1289 = vunpack.c.h.b16 %v917
      %v1290 = vunpack.c.l.b16 %v918
      %v1291 = vunpack.c.h.b16 %v918
      %v1292 = vunpack.c.l.b16 %v919
      %v1293 = vunpack.c.h.b16 %v919
      %v1294 = vunpack.c.l.b16 %v920
      %v1295 = vunpack.c.h.b16 %v920
      %v1296 = vunpack.c.l.b16 %v921
      %v1297 = vunpack.c.h.b16 %v921
      %v1298 = vunpack.c.l.b16 %v922
      %v1299 = vunpack.c.h.b16 %v922
      %v1300 = vunpack.c.l.b16 %v923
      %v1301 = vunpack.c.h.b16 %v923
      %v1302 = vunpack.c.l.b16 %v924
      %v1303 = vunpack.c.h.b16 %v924
      %v1304 = vunpack.c.l.b16 %v925
      %v1305 = vunpack.c.h.b16 %v925
      %v1306 = vunpack.c.l.b16 %v926
      %v1307 = vunpack.c.h.b16 %v926
      %v1308 = vunpack.c.l.b16 %v927
      %v1309 = vunpack.c.h.b16 %v927
      %v1310 = vunpack.c.l.b16 %v928
      %v1311 = vunpack.c.h.b16 %v928
      %v1312 = vunpack.c.l.b16 %v929
      %v1313 = vunpack.c.h.b16 %v929
      %v1314 = vpack.c.b16 %v1062, %v1058
      %v1315 = vpack.c.b16 %v1063, %v1059
      %v1316 = vpack.c.b16 %v1064, %v1060
      %v1317 = vpack.c.b16 %v1065, %v1061
      %v1318 = vpack.c.b16 %v1070, %v1066
      %v1319 = vpack.c.b16 %v1071, %v1067
      %v1320 = vpack.c.b16 %v1072, %v1068
      %v1321 = vpack.c.b16 %v1073, %v1069
      %v1322 = vpack.c.b16 %v1078, %v1074
      %v1323 = vpack.c.b16 %v1079, %v1075
      %v1324 = vpack.c.b16 %v1080, %v1076
      %v1325 = vpack.c.b16 %v1081, %v1077
      %v1326 = vpack.c.b16 %v1086, %v1082
      %v1327 = vpack.c.b16 %v1087, %v1083
      %v1328 = vpack.c.b16 %v1088, %v1084
      %v1329 = vpack.c.b16 %v1089, %v1085
      %v1330 = vpack.c.b16 %v1094, %v1090
      %v1331 = vpack.c.b16 %v1095, %v1091
      %v1332 = vpack.c.b16 %v1096, %v1092
      %v1333 = vpack.c.b16 %v1097, %v1093
      %v1334 = vpack.c.b16 %v1102, %v1098
      %v1335 = vpack.c.b16 %v1103, %v1099
      %v1336 = vpack.c.b16 %v1104, %v1100
      %v1337 = vpack.c.b16 %v1105, %v1101
      %v1338 = vpack.c.b16 %v1110, %v1106
      %v1339 = vpack.c.b16 %v1111, %v1107
      %v1340 = vpack.c.b16 %v1112, %v1108
      %v1341 = vpack.c.b16 %v1113, %v1109
      %v1342 = vpack.c.b16 %v1118, %v1114
      %v1343 = vpack.c.b16 %v1119, %v1115
      %v1344 = vpack.c.b16 %v1120, %v1116
      %v1345 = vpack.c.b16 %v1121, %v1117
      %v1346 = vpack.c.b16 %v1126, %v1122
      %v1347 = vpack.c.b16 %v1127, %v1123
      %v1348 = vpack.c.b16 %v1128, %v1124
      %v1349 = vpack.c.b16 %v1129, %v1125
      %v1350 = vpack.c.b16 %v1134, %v1130
      %v1351 = vpack.c.b16 %v1135, %v1131
      %v1352 = vpack.c.b16 %v1136, %v1132
      %v1353 = vpack.c.b16 %v1137, %v1133
      %v1354 = vpack.c.b16 %v1142, %v1138
      %v1355 = vpack.c.b16 %v1143, %v1139
      %v1356 = vpack.c.b16 %v1144, %v1140
      %v1357 = vpack.c.b16 %v1145, %v1141
      %v1358 = vpack.c.b16 %v1150, %v1146
      %v1359 = vpack.c.b16 %v1151, %v1147
      %v1360 = vpack.c.b16 %v1152, %v1148
      %v1361 = vpack.c.b16 %v1153, %v1149
      %v1362 = vpack.c.b16 %v1158, %v1154
      %v1363 = vpack.c.b16 %v1159, %v1155
      %v1364 = vpack.c.b16 %v1160, %v1156
      %v1365 = vpack.c.b16 %v1161, %v1157
      %v1366 = vpack.c.b16 %v1166, %v1162
      %v1367 = vpack.c.b16 %v1167, %v1163
      %v1368 = vpack.c.b16 %v1168, %v1164
      %v1369 = vpack.c.b16 %v1169, %v1165
      %v1370 = vpack.c.b16 %v1174, %v1170
      %v1371 = vpack.c.b16 %v1175, %v1171
      %v1372 = vpack.c.b16 %v1176, %v1172
      %v1373 = vpack.c.b16 %v1177, %v1173
      %v1374 = vpack.c.b16 %v1182, %v1178
      %v1375 = vpack.c.b16 %v1183, %v1179
      %v1376 = vpack.c.b16 %v1184, %v1180
      %v1377 = vpack.c.b16 %v1185, %v1181
      %v1378 = vpack.c.b16 %v1190, %v1186
      %v1379 = vpack.c.b16 %v1191, %v1187
      %v1380 = vpack.c.b16 %v1192, %v1188
      %v1381 = vpack.c.b16 %v1193, %v1189
      %v1382 = vpack.c.b16 %v1198, %v1194
      %v1383 = vpack.c.b16 %v1199, %v1195
      %v1384 = vpack.c.b16 %v1200, %v1196
      %v1385 = vpack.c.b16 %v1201, %v1197
      %v1386 = vpack.c.b16 %v1206, %v1202
      %v1387 = vpack.c.b16 %v1207, %v1203
      %v1388 = vpack.c.b16 %v1208, %v1204
      %v1389 = vpack.c.b16 %v1209, %v1205
      %v1390 = vpack.c.b16 %v1214, %v1210
      %v1391 = vpack.c.b16 %v1215, %v1211
      %v1392 = vpack.c.b16 %v1216, %v1212
      %v1393 = vpack.c.b16 %v1217, %v1213
      %v1394 = vpack.c.b16 %v1222, %v1218
      %v1395 = vpack.c.b16 %v1223, %v1219
      %v1396 = vpack.c.b16 %v1224, %v1220
      %v1397 = vpack.c.b16 %v1225, %v1221
      %v1398 = vpack.c.b16 %v1230, %v1226
      %v1399 = vpack.c.b16 %v1231, %v1227
      %v1400 = vpack.c.b16 %v1232, %v1228
      %v1401 = vpack.c.b16 %v1233, %v1229
      %v1402 = vpack.c.b16 %v1238, %v1234
      %v1403 = vpack.c.b16 %v1239, %v1235
      %v1404 = vpack.c.b16 %v1240, %v1236
      %v1405 = vpack.c.b16 %v1241, %v1237
      %v1406 = vpack.c.b16 %v1246, %v1242
      %v1407 = vpack.c.b16 %v1247, %v1243
      %v1408 = vpack.c.b16 %v1248, %v1244
      %v1409 = vpack.c.b16 %v1249, %v1245
      %v1410 = vpack.c.b16 %v1254, %v1250
      %v1411 = vpack.c.b16 %v1255, %v1251
      %v1412 = vpack.c.b16 %v1256, %v1252
      %v1413 = vpack.c.b16 %v1257, %v1253
      %v1414 = vpack.c.b16 %v1262, %v1258
      %v1415 = vpack.c.b16 %v1263, %v1259
      %v1416 = vpack.c.b16 %v1264, %v1260
      %v1417 = vpack.c.b16 %v1265, %v1261
      %v1418 = vpack.c.b16 %v1270, %v1266
      %v1419 = vpack.c.b16 %v1271, %v1267
      %v1420 = vpack.c.b16 %v1272, %v1268
      %v1421 = vpack.c.b16 %v1273, %v1269
      %v1422 = vpack.c.b16 %v1278, %v1274
      %v1423 = vpack.c.b16 %v1279, %v1275
      %v1424 = vpack.c.b16 %v1280, %v1276
      %v1425 = vpack.c.b16 %v1281, %v1277
      %v1426 = vpack.c.b16 %v1286, %v1282
      %v1427 = vpack.c.b16 %v1287, %v1283
      %v1428 = vpack.c.b16 %v1288, %v1284
      %v1429 = vpack.c.b16 %v1289, %v1285
      %v1430 = vpack.c.b16 %v1294, %v1290
      %v1431 = vpack.c.b16 %v1295, %v1291
      %v1432 = vpack.c.b16 %v1296, %v1292
      %v1433 = vpack.c.b16 %v1297, %v1293
      %v1434 = vpack.c.b16 %v1302, %v1298
      %v1435 = vpack.c.b16 %v1303, %v1299
      %v1436 = vpack.c.b16 %v1304, %v1300
      %v1437 = vpack.c.b16 %v1305, %v1301
      %v1438 = vpack.c.b16 %v1310, %v1306
      %v1439 = vpack.c.b16 %v1311, %v1307
      %v1440 = vpack.c.b16 %v1312, %v1308
      %v1441 = vpack.c.b16 %v1313, %v1309
      %v1634 = vunpack.c.l.b16 %v610
      %v1635 = vunpack.c.h.b16 %v610
      %v1636 = vunpack.c.l.b16 %v611
      %v1637 = vunpack.c.h.b16 %v611
      %v1638 = vunpack.c.l.b16 %v612
      %v1639 = vunpack.c.h.b16 %v612
      %v1640 = vunpack.c.l.b16 %v613
      %v1641 = vunpack.c.h.b16 %v613
      %v1642 = vunpack.c.l.b16 %v614
      %v1643 = vunpack.c.h.b16 %v614
      %v1644 = vunpack.c.l.b16 %v615
      %v1645 = vunpack.c.h.b16 %v615
      %v1646 = vunpack.c.l.b16 %v616
      %v1647 = vunpack.c.h.b16 %v616
      %v1648 = vunpack.c.l.b16 %v617
      %v1649 = vunpack.c.h.b16 %v617
      %v1650 = vunpack.c.l.b16 %v618
      %v1651 = vunpack.c.h.b16 %v618
      %v1652 = vunpack.c.l.b16 %v619
      %v1653 = vunpack.c.h.b16 %v619
      %v1654 = vunpack.c.l.b16 %v620
      %v1655 = vunpack.c.h.b16 %v620
      %v1656 = vunpack.c.l.b16 %v621
      %v1657 = vunpack.c.h.b16 %v621
      %v1658 = vunpack.c.l.b16 %v622
      %v1659 = vunpack.c.h.b16 %v622
      %v1660 = vunpack.c.l.b16 %v623
      %v1661 = vunpack.c.h.b16 %v623
      %v1662 = vunpack.c.l.b16 %v624
      %v1663 = vunpack.c.h.b16 %v624
      %v1664 = vunpack.c.l.b16 %v625
      %v1665 = vunpack.c.h.b16 %v625
      %v1666 = vunpack.c.l.b16 %v626
      %v1667 = vunpack.c.h.b16 %v626
      %v1668 = vunpack.c.l.b16 %v627
      %v1669 = vunpack.c.h.b16 %v627
      %v1670 = vunpack.c.l.b16 %v628
      %v1671 = vunpack.c.h.b16 %v628
      %v1672 = vunpack.c.l.b16 %v629
      %v1673 = vunpack.c.h.b16 %v629
      %v1674 = vunpack.c.l.b16 %v630
      %v1675 = vunpack.c.h.b16 %v630
      %v1676 = vunpack.c.l.b16 %v631
      %v1677 = vunpack.c.h.b16 %v631
      %v1678 = vunpack.c.l.b16 %v632
      %v1679 = vunpack.c.h.b16 %v632
      %v1680 = vunpack.c.l.b16 %v633
      %v1681 = vunpack.c.h.b16 %v633
      %v1682 = vunpack.c.l.b16 %v634
      %v1683 = vunpack.c.h.b16 %v634
      %v1684 = vunpack.c.l.b16 %v635
      %v1685 = vunpack.c.h.b16 %v635
      %v1686 = vunpack.c.l.b16 %v636
      %v1687 = vunpack.c.h.b16 %v636
      %v1688 = vunpack.c.l.b16 %v637
      %v1689 = vunpack.c.h.b16 %v637
      %v1690 = vunpack.c.l.b16 %v638
      %v1691 = vunpack.c.h.b16 %v638
      %v1692 = vunpack.c.l.b16 %v639
      %v1693 = vunpack.c.h.b16 %v639
      %v1694 = vunpack.c.l.b16 %v640
      %v1695 = vunpack.c.h.b16 %v640
      %v1696 = vunpack.c.l.b16 %v641
      %v1697 = vunpack.c.h.b16 %v641
      %v1698 = vunpack.c.l.b16 %v642
      %v1699 = vunpack.c.h.b16 %v642
      %v1700 = vunpack.c.l.b16 %v643
      %v1701 = vunpack.c.h.b16 %v643
      %v1702 = vunpack.c.l.b16 %v644
      %v1703 = vunpack.c.h.b16 %v644
      %v1704 = vunpack.c.l.b16 %v645
      %v1705 = vunpack.c.h.b16 %v645
      %v1706 = vunpack.c.l.b16 %v646
      %v1707 = vunpack.c.h.b16 %v646
      %v1708 = vunpack.c.l.b16 %v647
      %v1709 = vunpack.c.h.b16 %v647
      %v1710 = vunpack.c.l.b16 %v648
      %v1711 = vunpack.c.h.b16 %v648
      %v1712 = vunpack.c.l.b16 %v649
      %v1713 = vunpack.c.h.b16 %v649
      %v1714 = vunpack.c.l.b16 %v650
      %v1715 = vunpack.c.h.b16 %v650
      %v1716 = vunpack.c.l.b16 %v651
      %v1717 = vunpack.c.h.b16 %v651
      %v1718 = vunpack.c.l.b16 %v652
      %v1719 = vunpack.c.h.b16 %v652
      %v1720 = vunpack.c.l.b16 %v653
      %v1721 = vunpack.c.h.b16 %v653
      %v1722 = vunpack.c.l.b16 %v654
      %v1723 = vunpack.c.h.b16 %v654
      %v1724 = vunpack.c.l.b16 %v655
      %v1725 = vunpack.c.h.b16 %v655
      %v1726 = vunpack.c.l.b16 %v656
      %v1727 = vunpack.c.h.b16 %v656
      %v1728 = vunpack.c.l.b16 %v657
      %v1729 = vunpack.c.h.b16 %v657
      %v1730 = vunpack.c.l.b16 %v658
      %v1731 = vunpack.c.h.b16 %v658
      %v1732 = vunpack.c.l.b16 %v659
      %v1733 = vunpack.c.h.b16 %v659
      %v1734 = vunpack.c.l.b16 %v660
      %v1735 = vunpack.c.h.b16 %v660
      %v1736 = vunpack.c.l.b16 %v661
      %v1737 = vunpack.c.h.b16 %v661
      %v1738 = vunpack.c.l.b16 %v662
      %v1739 = vunpack.c.h.b16 %v662
      %v1740 = vunpack.c.l.b16 %v663
      %v1741 = vunpack.c.h.b16 %v663
      %v1742 = vunpack.c.l.b16 %v664
      %v1743 = vunpack.c.h.b16 %v664
      %v1744 = vunpack.c.l.b16 %v665
      %v1745 = vunpack.c.h.b16 %v665
      %v1746 = vunpack.c.l.b16 %v666
      %v1747 = vunpack.c.h.b16 %v666
      %v1748 = vunpack.c.l.b16 %v667
      %v1749 = vunpack.c.h.b16 %v667
      %v1750 = vunpack.c.l.b16 %v668
      %v1751 = vunpack.c.h.b16 %v668
      %v1752 = vunpack.c.l.b16 %v669
      %v1753 = vunpack.c.h.b16 %v669
      %v1754 = vunpack.c.l.b16 %v670
      %v1755 = vunpack.c.h.b16 %v670
      %v1756 = vunpack.c.l.b16 %v671
      %v1757 = vunpack.c.h.b16 %v671
      %v1758 = vunpack.c.l.b16 %v672
      %v1759 = vunpack.c.h.b16 %v672
      %v1760 = vunpack.c.l.b16 %v673
      %v1761 = vunpack.c.h.b16 %v673
      %v1762 = vpack.c.b16 %v1636, %v1634
      %v1763 = vpack.c.b16 %v1637, %v1635
      %v1764 = vpack.c.b16 %v1640, %v1638
      %v1765 = vpack.c.b16 %v1641, %v1639
      %v1766 = vpack.c.b16 %v1644, %v1642
      %v1767 = vpack.c.b16 %v1645, %v1643
      %v1768 = vpack.c.b16 %v1648, %v1646
      %v1769 = vpack.c.b16 %v1649, %v1647
      %v1770 = vpack.c.b16 %v1652, %v1650
      %v1771 = vpack.c.b16 %v1653, %v1651
      %v1772 = vpack.c.b16 %v1656, %v1654
      %v1773 = vpack.c.b16 %v1657, %v1655
      %v1774 = vpack.c.b16 %v1660, %v1658
      %v1775 = vpack.c.b16 %v1661, %v1659
      %v1776 = vpack.c.b16 %v1664, %v1662
      %v1777 = vpack.c.b16 %v1665, %v1663
      %v1778 = vpack.c.b16 %v1668, %v1666
      %v1779 = vpack.c.b16 %v1669, %v1667
      %v1780 = vpack.c.b16 %v1672, %v1670
      %v1781 = vpack.c.b16 %v1673, %v1671
      %v1782 = vpack.c.b16 %v1676, %v1674
      %v1783 = vpack.c.b16 %v1677, %v1675
      %v1784 = vpack.c.b16 %v1680, %v1678
      %v1785 = vpack.c.b16 %v1681, %v1679
      %v1786 = vpack.c.b16 %v1684, %v1682
      %v1787 = vpack.c.b16 %v1685, %v1683
      %v1788 = vpack.c.b16 %v1688, %v1686
      %v1789 = vpack.c.b16 %v1689, %v1687
      %v1790 = vpack.c.b16 %v1692, %v1690
      %v1791 = vpack.c.b16 %v1693, %v1691
      %v1792 = vpack.c.b16 %v1696, %v1694
      %v1793 = vpack.c.b16 %v1697, %v1695
      %v1794 = vpack.c.b16 %v1700, %v1698
      %v1795 = vpack.c.b16 %v1701, %v1699
      %v1796 = vpack.c.b16 %v1704, %v1702
      %v1797 = vpack.c.b16 %v1705, %v1703
      %v1798 = vpack.c.b16 %v1708, %v1706
      %v1799 = vpack.c.b16 %v1709, %v1707
      %v1800 = vpack.c.b16 %v1712, %v1710
      %v1801 = vpack.c.b16 %v1713, %v1711
      %v1802 = vpack.c.b16 %v1716, %v1714
      %v1803 = vpack.c.b16 %v1717, %v1715
      %v1804 = vpack.c.b16 %v1720, %v1718
      %v1805 = vpack.c.b16 %v1721, %v1719
      %v1806 = vpack.c.b16 %v1724, %v1722
      %v1807 = vpack.c.b16 %v1725, %v1723
      %v1808 = vpack.c.b16 %v1728, %v1726
      %v1809 = vpack.c.b16 %v1729, %v1727
      %v1810 = vpack.c.b16 %v1732, %v1730
      %v1811 = vpack.c.b16 %v1733, %v1731
      %v1812 = vpack.c.b16 %v1736, %v1734
      %v1813 = vpack.c.b16 %v1737, %v1735
      %v1814 = vpack.c.b16 %v1740, %v1738
      %v1815 = vpack.c.b16 %v1741, %v1739
      %v1816 = vpack.c.b16 %v1744, %v1742
      %v1817 = vpack.c.b16 %v1745, %v1743
      %v1818 = vpack.c.b16 %v1748, %v1746
      %v1819 = vpack.c.b16 %v1749, %v1747
      %v1820 = vpack.c.b16 %v1752, %v1750
      %v1821 = vpack.c.b16 %v1753, %v1751
      %v1822 = vpack.c.b16 %v1756, %v1754
      %v1823 = vpack.c.b16 %v1757, %v1755
      %v1824 = vpack.c.b16 %v1760, %v1758
      %v1825 = vpack.c.b16 %v1761, %v1759
      %1890 = vmatpush.bf16.msra.mxu0 %v1776
      %1891 = vmatpush.bf16.msra.mxu0 %v1774
      %1892 = vmatpush.bf16.msra.mxu0 %v1772
      %1893 = vmatpush.bf16.msra.mxu0 %v1770
      %1894 = vmatpush.bf16.msra.mxu0 %v1768
      %1895 = vmatpush.bf16.msra.mxu0 %v1766
      %1896 = vmatpush.bf16.msra.mxu0 %v1764
      %1897 = vmatpush.bf16.msra.mxu0 %v1762
      %1898 = vmatmul.bf16.gmra.mxu0 %v1314
      %v1899 = vpop.f32.mrf.mxu0
      %v1900 = vadd.f32 0.0, %v1899
      %v1901 = vpop.f32.mrf.mxu0
      %v1902 = vadd.f32 0.0, %v1901
      %1903 = vmatmul.bf16.gmra.mxu0 %v1318
      %v1904 = vpop.f32.mrf.mxu0
      %v1905 = vadd.f32 0.0, %v1904
      %v1906 = vpop.f32.mrf.mxu0
      %v1907 = vadd.f32 0.0, %v1906
      %1908 = vmatmul.bf16.gmra.mxu0 %v1322
      %v1909 = vpop.f32.mrf.mxu0
      %v1910 = vadd.f32 0.0, %v1909
      %v1911 = vpop.f32.mrf.mxu0
      %v1912 = vadd.f32 0.0, %v1911
      %1913 = vmatmul.bf16.gmra.mxu0 %v1326
      %v1914 = vpop.f32.mrf.mxu0
      %v1915 = vadd.f32 0.0, %v1914
      %v1916 = vpop.f32.mrf.mxu0
      %v1917 = vadd.f32 0.0, %v1916
      %1918 = vmatmul.bf16.gmra.mxu0 %v1330
      %v1919 = vpop.f32.mrf.mxu0
      %v1920 = vadd.f32 0.0, %v1919
      %v1921 = vpop.f32.mrf.mxu0
      %v1922 = vadd.f32 0.0, %v1921
      %1923 = vmatmul.bf16.gmra.mxu0 %v1334
      %v1924 = vpop.f32.mrf.mxu0
      %v1925 = vadd.f32 0.0, %v1924
      %v1926 = vpop.f32.mrf.mxu0
      %v1927 = vadd.f32 0.0, %v1926
      %1928 = vmatmul.bf16.gmra.mxu0 %v1338
      %v1929 = vpop.f32.mrf.mxu0
      %v1930 = vadd.f32 0.0, %v1929
      %v1931 = vpop.f32.mrf.mxu0
      %v1932 = vadd.f32 0.0, %v1931
      %1933 = vmatmul.bf16.gmra.mxu0 %v1342
      %v1934 = vpop.f32.mrf.mxu0
      %v1935 = vadd.f32 0.0, %v1934
      %v1936 = vpop.f32.mrf.mxu0
      %v1937 = vadd.f32 0.0, %v1936
      %1938 = vmatmul.bf16.gmra.mxu0 %v1346
      %v1939 = vpop.f32.mrf.mxu0
      %v1940 = vadd.f32 0.0, %v1939
      %v1941 = vpop.f32.mrf.mxu0
      %v1942 = vadd.f32 0.0, %v1941
      %1943 = vmatmul.bf16.gmra.mxu0 %v1350
      %v1944 = vpop.f32.mrf.mxu0
      %v1945 = vadd.f32 0.0, %v1944
      %v1946 = vpop.f32.mrf.mxu0
      %v1947 = vadd.f32 0.0, %v1946
      %1948 = vmatmul.bf16.gmra.mxu0 %v1354
      %v1949 = vpop.f32.mrf.mxu0
      %v1950 = vadd.f32 0.0, %v1949
      %v1951 = vpop.f32.mrf.mxu0
      %v1952 = vadd.f32 0.0, %v1951
      %1953 = vmatmul.bf16.gmra.mxu0 %v1358
      %v1954 = vpop.f32.mrf.mxu0
      %v1955 = vadd.f32 0.0, %v1954
      %v1956 = vpop.f32.mrf.mxu0
      %v1957 = vadd.f32 0.0, %v1956
      %1958 = vmatmul.bf16.gmra.mxu0 %v1362
      %v1959 = vpop.f32.mrf.mxu0
      %v1960 = vadd.f32 0.0, %v1959
      %v1961 = vpop.f32.mrf.mxu0
      %v1962 = vadd.f32 0.0, %v1961
      %1963 = vmatmul.bf16.gmra.mxu0 %v1366
      %v1964 = vpop.f32.mrf.mxu0
      %v1965 = vadd.f32 0.0, %v1964
      %v1966 = vpop.f32.mrf.mxu0
      %v1967 = vadd.f32 0.0, %v1966
      %1968 = vmatmul.bf16.gmra.mxu0 %v1370
      %v1969 = vpop.f32.mrf.mxu0
      %v1970 = vadd.f32 0.0, %v1969
      %v1971 = vpop.f32.mrf.mxu0
      %v1972 = vadd.f32 0.0, %v1971
      %1973 = vmatmul.bf16.gmra.mxu0 %v1374
      %v1974 = vpop.f32.mrf.mxu0
      %v1975 = vadd.f32 0.0, %v1974
      %v1976 = vpop.f32.mrf.mxu0
      %v1977 = vadd.f32 0.0, %v1976
      %1978 = vmatmul.bf16.gmra.mxu0 %v1378
      %v1979 = vpop.f32.mrf.mxu0
      %v1980 = vadd.f32 0.0, %v1979
      %v1981 = vpop.f32.mrf.mxu0
      %v1982 = vadd.f32 0.0, %v1981
      %1983 = vmatmul.bf16.gmra.mxu0 %v1382
      %v1984 = vpop.f32.mrf.mxu0
      %v1985 = vadd.f32 0.0, %v1984
      %v1986 = vpop.f32.mrf.mxu0
      %v1987 = vadd.f32 0.0, %v1986
      %1988 = vmatmul.bf16.gmra.mxu0 %v1386
      %v1989 = vpop.f32.mrf.mxu0
      %v1990 = vadd.f32 0.0, %v1989
      %v1991 = vpop.f32.mrf.mxu0
      %v1992 = vadd.f32 0.0, %v1991
      %1993 = vmatmul.bf16.gmra.mxu0 %v1390
      %v1994 = vpop.f32.mrf.mxu0
      %v1995 = vadd.f32 0.0, %v1994
      %v1996 = vpop.f32.mrf.mxu0
      %v1997 = vadd.f32 0.0, %v1996
      %1998 = vmatmul.bf16.gmra.mxu0 %v1394
      %v1999 = vpop.f32.mrf.mxu0
      %v2000 = vadd.f32 0.0, %v1999
      %v2001 = vpop.f32.mrf.mxu0
      %v2002 = vadd.f32 0.0, %v2001
      %2003 = vmatmul.bf16.gmra.mxu0 %v1398
      %v2004 = vpop.f32.mrf.mxu0
      %v2005 = vadd.f32 0.0, %v2004
      %v2006 = vpop.f32.mrf.mxu0
      %v2007 = vadd.f32 0.0, %v2006
      %2008 = vmatmul.bf16.gmra.mxu0 %v1402
      %v2009 = vpop.f32.mrf.mxu0
      %v2010 = vadd.f32 0.0, %v2009
      %v2011 = vpop.f32.mrf.mxu0
      %v2012 = vadd.f32 0.0, %v2011
      %2013 = vmatmul.bf16.gmra.mxu0 %v1406
      %v2014 = vpop.f32.mrf.mxu0
      %v2015 = vadd.f32 0.0, %v2014
      %v2016 = vpop.f32.mrf.mxu0
      %v2017 = vadd.f32 0.0, %v2016
      %2018 = vmatmul.bf16.gmra.mxu0 %v1410
      %v2019 = vpop.f32.mrf.mxu0
      %v2020 = vadd.f32 0.0, %v2019
      %v2021 = vpop.f32.mrf.mxu0
      %v2022 = vadd.f32 0.0, %v2021
      %2023 = vmatmul.bf16.gmra.mxu0 %v1414
      %v2024 = vpop.f32.mrf.mxu0
      %v2025 = vadd.f32 0.0, %v2024
      %v2026 = vpop.f32.mrf.mxu0
      %v2027 = vadd.f32 0.0, %v2026
      %2028 = vmatmul.bf16.gmra.mxu0 %v1418
      %v2029 = vpop.f32.mrf.mxu0
      %v2030 = vadd.f32 0.0, %v2029
      %v2031 = vpop.f32.mrf.mxu0
      %v2032 = vadd.f32 0.0, %v2031
      %2033 = vmatmul.bf16.gmra.mxu0 %v1422
      %v2034 = vpop.f32.mrf.mxu0
      %v2035 = vadd.f32 0.0, %v2034
      %v2036 = vpop.f32.mrf.mxu0
      %v2037 = vadd.f32 0.0, %v2036
      %2038 = vmatmul.bf16.gmra.mxu0 %v1426
      %v2039 = vpop.f32.mrf.mxu0
      %v2040 = vadd.f32 0.0, %v2039
      %v2041 = vpop.f32.mrf.mxu0
      %v2042 = vadd.f32 0.0, %v2041
      %2043 = vmatmul.bf16.gmra.mxu0 %v1430
      %v2044 = vpop.f32.mrf.mxu0
      %v2045 = vadd.f32 0.0, %v2044
      %v2046 = vpop.f32.mrf.mxu0
      %v2047 = vadd.f32 0.0, %v2046
      %2048 = vmatmul.bf16.gmra.mxu0 %v1434
      %v2049 = vpop.f32.mrf.mxu0
      %v2050 = vadd.f32 0.0, %v2049
      %v2051 = vpop.f32.mrf.mxu0
      %v2052 = vadd.f32 0.0, %v2051
      %2053 = vmatmul.bf16.gmra.mxu0 %v1438
      %v2054 = vpop.f32.mrf.mxu0
      %v2055 = vadd.f32 0.0, %v2054
      %v2056 = vpop.f32.mrf.mxu0
      %v2057 = vadd.f32 0.0, %v2056
      %2058 = vdwg.mxu0
      %2059 = vmatpush.bf16.msra.mxu0 %v1792
      %2060 = vmatpush.bf16.msra.mxu0 %v1790
      %2061 = vmatpush.bf16.msra.mxu0 %v1788
      %2062 = vmatpush.bf16.msra.mxu0 %v1786
      %2063 = vmatpush.bf16.msra.mxu0 %v1784
      %2064 = vmatpush.bf16.msra.mxu0 %v1782
      %2065 = vmatpush.bf16.msra.mxu0 %v1780
      %2066 = vmatpush.bf16.msra.mxu0 %v1778
      %2067 = vmatmul.bf16.gmra.mxu0 %v1315
      %v2068 = vpop.f32.mrf.mxu0
      %v2069 = vadd.f32 %v1900, %v2068
      %v2070 = vpop.f32.mrf.mxu0
      %v2071 = vadd.f32 %v1902, %v2070
      %2072 = vmatmul.bf16.gmra.mxu0 %v1319
      %v2073 = vpop.f32.mrf.mxu0
      %v2074 = vadd.f32 %v1905, %v2073
      %v2075 = vpop.f32.mrf.mxu0
      %v2076 = vadd.f32 %v1907, %v2075
      %2077 = vmatmul.bf16.gmra.mxu0 %v1323
      %v2078 = vpop.f32.mrf.mxu0
      %v2079 = vadd.f32 %v1910, %v2078
      %v2080 = vpop.f32.mrf.mxu0
      %v2081 = vadd.f32 %v1912, %v2080
      %2082 = vmatmul.bf16.gmra.mxu0 %v1327
      %v2083 = vpop.f32.mrf.mxu0
      %v2084 = vadd.f32 %v1915, %v2083
      %v2085 = vpop.f32.mrf.mxu0
      %v2086 = vadd.f32 %v1917, %v2085
      %2087 = vmatmul.bf16.gmra.mxu0 %v1331
      %v2088 = vpop.f32.mrf.mxu0
      %v2089 = vadd.f32 %v1920, %v2088
      %v2090 = vpop.f32.mrf.mxu0
      %v2091 = vadd.f32 %v1922, %v2090
      %2092 = vmatmul.bf16.gmra.mxu0 %v1335
      %v2093 = vpop.f32.mrf.mxu0
      %v2094 = vadd.f32 %v1925, %v2093
      %v2095 = vpop.f32.mrf.mxu0
      %v2096 = vadd.f32 %v1927, %v2095
      %2097 = vmatmul.bf16.gmra.mxu0 %v1339
      %v2098 = vpop.f32.mrf.mxu0
      %v2099 = vadd.f32 %v1930, %v2098
      %v2100 = vpop.f32.mrf.mxu0
      %v2101 = vadd.f32 %v1932, %v2100
      %2102 = vmatmul.bf16.gmra.mxu0 %v1343
      %v2103 = vpop.f32.mrf.mxu0
      %v2104 = vadd.f32 %v1935, %v2103
      %v2105 = vpop.f32.mrf.mxu0
      %v2106 = vadd.f32 %v1937, %v2105
      %2107 = vmatmul.bf16.gmra.mxu0 %v1347
      %v2108 = vpop.f32.mrf.mxu0
      %v2109 = vadd.f32 %v1940, %v2108
      %v2110 = vpop.f32.mrf.mxu0
      %v2111 = vadd.f32 %v1942, %v2110
      %2112 = vmatmul.bf16.gmra.mxu0 %v1351
      %v2113 = vpop.f32.mrf.mxu0
      %v2114 = vadd.f32 %v1945, %v2113
      %v2115 = vpop.f32.mrf.mxu0
      %v2116 = vadd.f32 %v1947, %v2115
      %2117 = vmatmul.bf16.gmra.mxu0 %v1355
      %v2118 = vpop.f32.mrf.mxu0
      %v2119 = vadd.f32 %v1950, %v2118
      %v2120 = vpop.f32.mrf.mxu0
      %v2121 = vadd.f32 %v1952, %v2120
      %2122 = vmatmul.bf16.gmra.mxu0 %v1359
      %v2123 = vpop.f32.mrf.mxu0
      %v2124 = vadd.f32 %v1955, %v2123
      %v2125 = vpop.f32.mrf.mxu0
      %v2126 = vadd.f32 %v1957, %v2125
      %2127 = vmatmul.bf16.gmra.mxu0 %v1363
      %v2128 = vpop.f32.mrf.mxu0
      %v2129 = vadd.f32 %v1960, %v2128
      %v2130 = vpop.f32.mrf.mxu0
      %v2131 = vadd.f32 %v1962, %v2130
      %2132 = vmatmul.bf16.gmra.mxu0 %v1367
      %v2133 = vpop.f32.mrf.mxu0
      %v2134 = vadd.f32 %v1965, %v2133
      %v2135 = vpop.f32.mrf.mxu0
      %v2136 = vadd.f32 %v1967, %v2135
      %2137 = vmatmul.bf16.gmra.mxu0 %v1371
      %v2138 = vpop.f32.mrf.mxu0
      %v2139 = vadd.f32 %v1970, %v2138
      %v2140 = vpop.f32.mrf.mxu0
      %v2141 = vadd.f32 %v1972, %v2140
      %2142 = vmatmul.bf16.gmra.mxu0 %v1375
      %v2143 = vpop.f32.mrf.mxu0
      %v2144 = vadd.f32 %v1975, %v2143
      %v2145 = vpop.f32.mrf.mxu0
      %v2146 = vadd.f32 %v1977, %v2145
      %2147 = vmatmul.bf16.gmra.mxu0 %v1379
      %v2148 = vpop.f32.mrf.mxu0
      %v2149 = vadd.f32 %v1980, %v2148
      %v2150 = vpop.f32.mrf.mxu0
      %v2151 = vadd.f32 %v1982, %v2150
      %2152 = vmatmul.bf16.gmra.mxu0 %v1383
      %v2153 = vpop.f32.mrf.mxu0
      %v2154 = vadd.f32 %v1985, %v2153
      %v2155 = vpop.f32.mrf.mxu0
      %v2156 = vadd.f32 %v1987, %v2155
      %2157 = vmatmul.bf16.gmra.mxu0 %v1387
      %v2158 = vpop.f32.mrf.mxu0
      %v2159 = vadd.f32 %v1990, %v2158
      %v2160 = vpop.f32.mrf.mxu0
      %v2161 = vadd.f32 %v1992, %v2160
      %2162 = vmatmul.bf16.gmra.mxu0 %v1391
      %v2163 = vpop.f32.mrf.mxu0
      %v2164 = vadd.f32 %v1995, %v2163
      %v2165 = vpop.f32.mrf.mxu0
      %v2166 = vadd.f32 %v1997, %v2165
      %2167 = vmatmul.bf16.gmra.mxu0 %v1395
      %v2168 = vpop.f32.mrf.mxu0
      %v2169 = vadd.f32 %v2000, %v2168
      %v2170 = vpop.f32.mrf.mxu0
      %v2171 = vadd.f32 %v2002, %v2170
      %2172 = vmatmul.bf16.gmra.mxu0 %v1399
      %v2173 = vpop.f32.mrf.mxu0
      %v2174 = vadd.f32 %v2005, %v2173
      %v2175 = vpop.f32.mrf.mxu0
      %v2176 = vadd.f32 %v2007, %v2175
      %2177 = vmatmul.bf16.gmra.mxu0 %v1403
      %v2178 = vpop.f32.mrf.mxu0
      %v2179 = vadd.f32 %v2010, %v2178
      %v2180 = vpop.f32.mrf.mxu0
      %v2181 = vadd.f32 %v2012, %v2180
      %2182 = vmatmul.bf16.gmra.mxu0 %v1407
      %v2183 = vpop.f32.mrf.mxu0
      %v2184 = vadd.f32 %v2015, %v2183
      %v2185 = vpop.f32.mrf.mxu0
      %v2186 = vadd.f32 %v2017, %v2185
      %2187 = vmatmul.bf16.gmra.mxu0 %v1411
      %v2188 = vpop.f32.mrf.mxu0
      %v2189 = vadd.f32 %v2020, %v2188
      %v2190 = vpop.f32.mrf.mxu0
      %v2191 = vadd.f32 %v2022, %v2190
      %2192 = vmatmul.bf16.gmra.mxu0 %v1415
      %v2193 = vpop.f32.mrf.mxu0
      %v2194 = vadd.f32 %v2025, %v2193
      %v2195 = vpop.f32.mrf.mxu0
      %v2196 = vadd.f32 %v2027, %v2195
      %2197 = vmatmul.bf16.gmra.mxu0 %v1419
      %v2198 = vpop.f32.mrf.mxu0
      %v2199 = vadd.f32 %v2030, %v2198
      %v2200 = vpop.f32.mrf.mxu0
      %v2201 = vadd.f32 %v2032, %v2200
      %2202 = vmatmul.bf16.gmra.mxu0 %v1423
      %v2203 = vpop.f32.mrf.mxu0
      %v2204 = vadd.f32 %v2035, %v2203
      %v2205 = vpop.f32.mrf.mxu0
      %v2206 = vadd.f32 %v2037, %v2205
      %2207 = vmatmul.bf16.gmra.mxu0 %v1427
      %v2208 = vpop.f32.mrf.mxu0
      %v2209 = vadd.f32 %v2040, %v2208
      %v2210 = vpop.f32.mrf.mxu0
      %v2211 = vadd.f32 %v2042, %v2210
      %2212 = vmatmul.bf16.gmra.mxu0 %v1431
      %v2213 = vpop.f32.mrf.mxu0
      %v2214 = vadd.f32 %v2045, %v2213
      %v2215 = vpop.f32.mrf.mxu0
      %v2216 = vadd.f32 %v2047, %v2215
      %2217 = vmatmul.bf16.gmra.mxu0 %v1435
      %v2218 = vpop.f32.mrf.mxu0
      %v2219 = vadd.f32 %v2050, %v2218
      %v2220 = vpop.f32.mrf.mxu0
      %v2221 = vadd.f32 %v2052, %v2220
      %2222 = vmatmul.bf16.gmra.mxu0 %v1439
      %v2223 = vpop.f32.mrf.mxu0
      %v2224 = vadd.f32 %v2055, %v2223
      %v2225 = vpop.f32.mrf.mxu0
      %v2226 = vadd.f32 %v2057, %v2225
      %2227 = vdwg.mxu0
      %2228 = vmatpush.bf16.msra.mxu0 %v1808
      %2229 = vmatpush.bf16.msra.mxu0 %v1806
      %2230 = vmatpush.bf16.msra.mxu0 %v1804
      %2231 = vmatpush.bf16.msra.mxu0 %v1802
      %2232 = vmatpush.bf16.msra.mxu0 %v1800
      %2233 = vmatpush.bf16.msra.mxu0 %v1798
      %2234 = vmatpush.bf16.msra.mxu0 %v1796
      %2235 = vmatpush.bf16.msra.mxu0 %v1794
      %2236 = vmatmul.bf16.gmra.mxu0 %v1316
      %v2237 = vpop.f32.mrf.mxu0
      %v2238 = vadd.f32 %v2069, %v2237
      %v2239 = vpop.f32.mrf.mxu0
      %v2240 = vadd.f32 %v2071, %v2239
      %2241 = vmatmul.bf16.gmra.mxu0 %v1320
      %v2242 = vpop.f32.mrf.mxu0
      %v2243 = vadd.f32 %v2074, %v2242
      %v2244 = vpop.f32.mrf.mxu0
      %v2245 = vadd.f32 %v2076, %v2244
      %2246 = vmatmul.bf16.gmra.mxu0 %v1324
      %v2247 = vpop.f32.mrf.mxu0
      %v2248 = vadd.f32 %v2079, %v2247
      %v2249 = vpop.f32.mrf.mxu0
      %v2250 = vadd.f32 %v2081, %v2249
      %2251 = vmatmul.bf16.gmra.mxu0 %v1328
      %v2252 = vpop.f32.mrf.mxu0
      %v2253 = vadd.f32 %v2084, %v2252
      %v2254 = vpop.f32.mrf.mxu0
      %v2255 = vadd.f32 %v2086, %v2254
      %2256 = vmatmul.bf16.gmra.mxu0 %v1332
      %v2257 = vpop.f32.mrf.mxu0
      %v2258 = vadd.f32 %v2089, %v2257
      %v2259 = vpop.f32.mrf.mxu0
      %v2260 = vadd.f32 %v2091, %v2259
      %2261 = vmatmul.bf16.gmra.mxu0 %v1336
      %v2262 = vpop.f32.mrf.mxu0
      %v2263 = vadd.f32 %v2094, %v2262
      %v2264 = vpop.f32.mrf.mxu0
      %v2265 = vadd.f32 %v2096, %v2264
      %2266 = vmatmul.bf16.gmra.mxu0 %v1340
      %v2267 = vpop.f32.mrf.mxu0
      %v2268 = vadd.f32 %v2099, %v2267
      %v2269 = vpop.f32.mrf.mxu0
      %v2270 = vadd.f32 %v2101, %v2269
      %2271 = vmatmul.bf16.gmra.mxu0 %v1344
      %v2272 = vpop.f32.mrf.mxu0
      %v2273 = vadd.f32 %v2104, %v2272
      %v2274 = vpop.f32.mrf.mxu0
      %v2275 = vadd.f32 %v2106, %v2274
      %2276 = vmatmul.bf16.gmra.mxu0 %v1348
      %v2277 = vpop.f32.mrf.mxu0
      %v2278 = vadd.f32 %v2109, %v2277
      %v2279 = vpop.f32.mrf.mxu0
      %v2280 = vadd.f32 %v2111, %v2279
      %2281 = vmatmul.bf16.gmra.mxu0 %v1352
      %v2282 = vpop.f32.mrf.mxu0
      %v2283 = vadd.f32 %v2114, %v2282
      %v2284 = vpop.f32.mrf.mxu0
      %v2285 = vadd.f32 %v2116, %v2284
      %2286 = vmatmul.bf16.gmra.mxu0 %v1356
      %v2287 = vpop.f32.mrf.mxu0
      %v2288 = vadd.f32 %v2119, %v2287
      %v2289 = vpop.f32.mrf.mxu0
      %v2290 = vadd.f32 %v2121, %v2289
      %2291 = vmatmul.bf16.gmra.mxu0 %v1360
      %v2292 = vpop.f32.mrf.mxu0
      %v2293 = vadd.f32 %v2124, %v2292
      %v2294 = vpop.f32.mrf.mxu0
      %v2295 = vadd.f32 %v2126, %v2294
      %2296 = vmatmul.bf16.gmra.mxu0 %v1364
      %v2297 = vpop.f32.mrf.mxu0
      %v2298 = vadd.f32 %v2129, %v2297
      %v2299 = vpop.f32.mrf.mxu0
      %v2300 = vadd.f32 %v2131, %v2299
      %2301 = vmatmul.bf16.gmra.mxu0 %v1368
      %v2302 = vpop.f32.mrf.mxu0
      %v2303 = vadd.f32 %v2134, %v2302
      %v2304 = vpop.f32.mrf.mxu0
      %v2305 = vadd.f32 %v2136, %v2304
      %2306 = vmatmul.bf16.gmra.mxu0 %v1372
      %v2307 = vpop.f32.mrf.mxu0
      %v2308 = vadd.f32 %v2139, %v2307
      %v2309 = vpop.f32.mrf.mxu0
      %v2310 = vadd.f32 %v2141, %v2309
      %2311 = vmatmul.bf16.gmra.mxu0 %v1376
      %v2312 = vpop.f32.mrf.mxu0
      %v2313 = vadd.f32 %v2144, %v2312
      %v2314 = vpop.f32.mrf.mxu0
      %v2315 = vadd.f32 %v2146, %v2314
      %2316 = vmatmul.bf16.gmra.mxu0 %v1380
      %v2317 = vpop.f32.mrf.mxu0
      %v2318 = vadd.f32 %v2149, %v2317
      %v2319 = vpop.f32.mrf.mxu0
      %v2320 = vadd.f32 %v2151, %v2319
      %2321 = vmatmul.bf16.gmra.mxu0 %v1384
      %v2322 = vpop.f32.mrf.mxu0
      %v2323 = vadd.f32 %v2154, %v2322
      %v2324 = vpop.f32.mrf.mxu0
      %v2325 = vadd.f32 %v2156, %v2324
      %2326 = vmatmul.bf16.gmra.mxu0 %v1388
      %v2327 = vpop.f32.mrf.mxu0
      %v2328 = vadd.f32 %v2159, %v2327
      %v2329 = vpop.f32.mrf.mxu0
      %v2330 = vadd.f32 %v2161, %v2329
      %2331 = vmatmul.bf16.gmra.mxu0 %v1392
      %v2332 = vpop.f32.mrf.mxu0
      %v2333 = vadd.f32 %v2164, %v2332
      %v2334 = vpop.f32.mrf.mxu0
      %v2335 = vadd.f32 %v2166, %v2334
      %2336 = vmatmul.bf16.gmra.mxu0 %v1396
      %v2337 = vpop.f32.mrf.mxu0
      %v2338 = vadd.f32 %v2169, %v2337
      %v2339 = vpop.f32.mrf.mxu0
      %v2340 = vadd.f32 %v2171, %v2339
      %2341 = vmatmul.bf16.gmra.mxu0 %v1400
      %v2342 = vpop.f32.mrf.mxu0
      %v2343 = vadd.f32 %v2174, %v2342
      %v2344 = vpop.f32.mrf.mxu0
      %v2345 = vadd.f32 %v2176, %v2344
      %2346 = vmatmul.bf16.gmra.mxu0 %v1404
      %v2347 = vpop.f32.mrf.mxu0
      %v2348 = vadd.f32 %v2179, %v2347
      %v2349 = vpop.f32.mrf.mxu0
      %v2350 = vadd.f32 %v2181, %v2349
      %2351 = vmatmul.bf16.gmra.mxu0 %v1408
      %v2352 = vpop.f32.mrf.mxu0
      %v2353 = vadd.f32 %v2184, %v2352
      %v2354 = vpop.f32.mrf.mxu0
      %v2355 = vadd.f32 %v2186, %v2354
      %2356 = vmatmul.bf16.gmra.mxu0 %v1412
      %v2357 = vpop.f32.mrf.mxu0
      %v2358 = vadd.f32 %v2189, %v2357
      %v2359 = vpop.f32.mrf.mxu0
      %v2360 = vadd.f32 %v2191, %v2359
      %2361 = vmatmul.bf16.gmra.mxu0 %v1416
      %v2362 = vpop.f32.mrf.mxu0
      %v2363 = vadd.f32 %v2194, %v2362
      %v2364 = vpop.f32.mrf.mxu0
      %v2365 = vadd.f32 %v2196, %v2364
      %2366 = vmatmul.bf16.gmra.mxu0 %v1420
      %v2367 = vpop.f32.mrf.mxu0
      %v2368 = vadd.f32 %v2199, %v2367
      %v2369 = vpop.f32.mrf.mxu0
      %v2370 = vadd.f32 %v2201, %v2369
      %2371 = vmatmul.bf16.gmra.mxu0 %v1424
      %v2372 = vpop.f32.mrf.mxu0
      %v2373 = vadd.f32 %v2204, %v2372
      %v2374 = vpop.f32.mrf.mxu0
      %v2375 = vadd.f32 %v2206, %v2374
      %2376 = vmatmul.bf16.gmra.mxu0 %v1428
      %v2377 = vpop.f32.mrf.mxu0
      %v2378 = vadd.f32 %v2209, %v2377
      %v2379 = vpop.f32.mrf.mxu0
      %v2380 = vadd.f32 %v2211, %v2379
      %2381 = vmatmul.bf16.gmra.mxu0 %v1432
      %v2382 = vpop.f32.mrf.mxu0
      %v2383 = vadd.f32 %v2214, %v2382
      %v2384 = vpop.f32.mrf.mxu0
      %v2385 = vadd.f32 %v2216, %v2384
      %2386 = vmatmul.bf16.gmra.mxu0 %v1436
      %v2387 = vpop.f32.mrf.mxu0
      %v2388 = vadd.f32 %v2219, %v2387
      %v2389 = vpop.f32.mrf.mxu0
      %v2390 = vadd.f32 %v2221, %v2389
      %2391 = vmatmul.bf16.gmra.mxu0 %v1440
      %v2392 = vpop.f32.mrf.mxu0
      %v2393 = vadd.f32 %v2224, %v2392
      %v2394 = vpop.f32.mrf.mxu0
      %v2395 = vadd.f32 %v2226, %v2394
      %2396 = vdwg.mxu0
      %2397 = vmatpush.bf16.msra.mxu0 %v1824
      %2398 = vmatpush.bf16.msra.mxu0 %v1822
      %2399 = vmatpush.bf16.msra.mxu0 %v1820
      %2400 = vmatpush.bf16.msra.mxu0 %v1818
      %2401 = vmatpush.bf16.msra.mxu0 %v1816
      %2402 = vmatpush.bf16.msra.mxu0 %v1814
      %2403 = vmatpush.bf16.msra.mxu0 %v1812
      %2404 = vmatpush.bf16.msra.mxu0 %v1810
      %2405 = vmatmul.bf16.gmra.mxu0 %v1317
      %v2406 = vpop.f32.mrf.mxu0
      %v2407 = vadd.f32 %v2238, %v2406
      %v2408 = vpop.f32.mrf.mxu0
      %v2409 = vadd.f32 %v2240, %v2408
      %2410 = vmatmul.bf16.gmra.mxu0 %v1321
      %v2411 = vpop.f32.mrf.mxu0
      %v2412 = vadd.f32 %v2243, %v2411
      %v2413 = vpop.f32.mrf.mxu0
      %v2414 = vadd.f32 %v2245, %v2413
      %2415 = vmatmul.bf16.gmra.mxu0 %v1325
      %v2416 = vpop.f32.mrf.mxu0
      %v2417 = vadd.f32 %v2248, %v2416
      %v2418 = vpop.f32.mrf.mxu0
      %v2419 = vadd.f32 %v2250, %v2418
      %2420 = vmatmul.bf16.gmra.mxu0 %v1329
      %v2421 = vpop.f32.mrf.mxu0
      %v2422 = vadd.f32 %v2253, %v2421
      %v2423 = vpop.f32.mrf.mxu0
      %v2424 = vadd.f32 %v2255, %v2423
      %2425 = vmatmul.bf16.gmra.mxu0 %v1333
      %v2426 = vpop.f32.mrf.mxu0
      %v2427 = vadd.f32 %v2258, %v2426
      %v2428 = vpop.f32.mrf.mxu0
      %v2429 = vadd.f32 %v2260, %v2428
      %2430 = vmatmul.bf16.gmra.mxu0 %v1337
      %v2431 = vpop.f32.mrf.mxu0
      %v2432 = vadd.f32 %v2263, %v2431
      %v2433 = vpop.f32.mrf.mxu0
      %v2434 = vadd.f32 %v2265, %v2433
      %2435 = vmatmul.bf16.gmra.mxu0 %v1341
      %v2436 = vpop.f32.mrf.mxu0
      %v2437 = vadd.f32 %v2268, %v2436
      %v2438 = vpop.f32.mrf.mxu0
      %v2439 = vadd.f32 %v2270, %v2438
      %2440 = vmatmul.bf16.gmra.mxu0 %v1345
      %v2441 = vpop.f32.mrf.mxu0
      %v2442 = vadd.f32 %v2273, %v2441
      %v2443 = vpop.f32.mrf.mxu0
      %v2444 = vadd.f32 %v2275, %v2443
      %2445 = vmatmul.bf16.gmra.mxu0 %v1349
      %v2446 = vpop.f32.mrf.mxu0
      %v2447 = vadd.f32 %v2278, %v2446
      %v2448 = vpop.f32.mrf.mxu0
      %v2449 = vadd.f32 %v2280, %v2448
      %2450 = vmatmul.bf16.gmra.mxu0 %v1353
      %v2451 = vpop.f32.mrf.mxu0
      %v2452 = vadd.f32 %v2283, %v2451
      %v2453 = vpop.f32.mrf.mxu0
      %v2454 = vadd.f32 %v2285, %v2453
      %2455 = vmatmul.bf16.gmra.mxu0 %v1357
      %v2456 = vpop.f32.mrf.mxu0
      %v2457 = vadd.f32 %v2288, %v2456
      %v2458 = vpop.f32.mrf.mxu0
      %v2459 = vadd.f32 %v2290, %v2458
      %2460 = vmatmul.bf16.gmra.mxu0 %v1361
      %v2461 = vpop.f32.mrf.mxu0
      %v2462 = vadd.f32 %v2293, %v2461
      %v2463 = vpop.f32.mrf.mxu0
      %v2464 = vadd.f32 %v2295, %v2463
      %2465 = vmatmul.bf16.gmra.mxu0 %v1365
      %v2466 = vpop.f32.mrf.mxu0
      %v2467 = vadd.f32 %v2298, %v2466
      %v2468 = vpop.f32.mrf.mxu0
      %v2469 = vadd.f32 %v2300, %v2468
      %2470 = vmatmul.bf16.gmra.mxu0 %v1369
      %v2471 = vpop.f32.mrf.mxu0
      %v2472 = vadd.f32 %v2303, %v2471
      %v2473 = vpop.f32.mrf.mxu0
      %v2474 = vadd.f32 %v2305, %v2473
      %2475 = vmatmul.bf16.gmra.mxu0 %v1373
      %v2476 = vpop.f32.mrf.mxu0
      %v2477 = vadd.f32 %v2308, %v2476
      %v2478 = vpop.f32.mrf.mxu0
      %v2479 = vadd.f32 %v2310, %v2478
      %2480 = vmatmul.bf16.gmra.mxu0 %v1377
      %v2481 = vpop.f32.mrf.mxu0
      %v2482 = vadd.f32 %v2313, %v2481
      %v2483 = vpop.f32.mrf.mxu0
      %v2484 = vadd.f32 %v2315, %v2483
      %2485 = vmatmul.bf16.gmra.mxu0 %v1381
      %v2486 = vpop.f32.mrf.mxu0
      %v2487 = vadd.f32 %v2318, %v2486
      %v2488 = vpop.f32.mrf.mxu0
      %v2489 = vadd.f32 %v2320, %v2488
      %2490 = vmatmul.bf16.gmra.mxu0 %v1385
      %v2491 = vpop.f32.mrf.mxu0
      %v2492 = vadd.f32 %v2323, %v2491
      %v2493 = vpop.f32.mrf.mxu0
      %v2494 = vadd.f32 %v2325, %v2493
      %2495 = vmatmul.bf16.gmra.mxu0 %v1389
      %v2496 = vpop.f32.mrf.mxu0
      %v2497 = vadd.f32 %v2328, %v2496
      %v2498 = vpop.f32.mrf.mxu0
      %v2499 = vadd.f32 %v2330, %v2498
      %2500 = vmatmul.bf16.gmra.mxu0 %v1393
      %v2501 = vpop.f32.mrf.mxu0
      %v2502 = vadd.f32 %v2333, %v2501
      %v2503 = vpop.f32.mrf.mxu0
      %v2504 = vadd.f32 %v2335, %v2503
      %2505 = vmatmul.bf16.gmra.mxu0 %v1397
      %v2506 = vpop.f32.mrf.mxu0
      %v2507 = vadd.f32 %v2338, %v2506
      %v2508 = vpop.f32.mrf.mxu0
      %v2509 = vadd.f32 %v2340, %v2508
      %2510 = vmatmul.bf16.gmra.mxu0 %v1401
      %v2511 = vpop.f32.mrf.mxu0
      %v2512 = vadd.f32 %v2343, %v2511
      %v2513 = vpop.f32.mrf.mxu0
      %v2514 = vadd.f32 %v2345, %v2513
      %2515 = vmatmul.bf16.gmra.mxu0 %v1405
      %v2516 = vpop.f32.mrf.mxu0
      %v2517 = vadd.f32 %v2348, %v2516
      %v2518 = vpop.f32.mrf.mxu0
      %v2519 = vadd.f32 %v2350, %v2518
      %2520 = vmatmul.bf16.gmra.mxu0 %v1409
      %v2521 = vpop.f32.mrf.mxu0
      %v2522 = vadd.f32 %v2353, %v2521
      %v2523 = vpop.f32.mrf.mxu0
      %v2524 = vadd.f32 %v2355, %v2523
      %2525 = vmatmul.bf16.gmra.mxu0 %v1413
      %v2526 = vpop.f32.mrf.mxu0
      %v2527 = vadd.f32 %v2358, %v2526
      %v2528 = vpop.f32.mrf.mxu0
      %v2529 = vadd.f32 %v2360, %v2528
      %2530 = vmatmul.bf16.gmra.mxu0 %v1417
      %v2531 = vpop.f32.mrf.mxu0
      %v2532 = vadd.f32 %v2363, %v2531
      %v2533 = vpop.f32.mrf.mxu0
      %v2534 = vadd.f32 %v2365, %v2533
      %2535 = vmatmul.bf16.gmra.mxu0 %v1421
      %v2536 = vpop.f32.mrf.mxu0
      %v2537 = vadd.f32 %v2368, %v2536
      %v2538 = vpop.f32.mrf.mxu0
      %v2539 = vadd.f32 %v2370, %v2538
      %2540 = vmatmul.bf16.gmra.mxu0 %v1425
      %v2541 = vpop.f32.mrf.mxu0
      %v2542 = vadd.f32 %v2373, %v2541
      %v2543 = vpop.f32.mrf.mxu0
      %v2544 = vadd.f32 %v2375, %v2543
      %2545 = vmatmul.bf16.gmra.mxu0 %v1429
      %v2546 = vpop.f32.mrf.mxu0
      %v2547 = vadd.f32 %v2378, %v2546
      %v2548 = vpop.f32.mrf.mxu0
      %v2549 = vadd.f32 %v2380, %v2548
      %2550 = vmatmul.bf16.gmra.mxu0 %v1433
      %v2551 = vpop.f32.mrf.mxu0
      %v2552 = vadd.f32 %v2383, %v2551
      %v2553 = vpop.f32.mrf.mxu0
      %v2554 = vadd.f32 %v2385, %v2553
      %2555 = vmatmul.bf16.gmra.mxu0 %v1437
      %v2556 = vpop.f32.mrf.mxu0
      %v2557 = vadd.f32 %v2388, %v2556
      %v2558 = vpop.f32.mrf.mxu0
      %v2559 = vadd.f32 %v2390, %v2558
      %2560 = vmatmul.bf16.gmra.mxu0 %v1441
      %v2561 = vpop.f32.mrf.mxu0
      %v2562 = vadd.f32 %v2393, %v2561
      %v2563 = vpop.f32.mrf.mxu0
      %v2564 = vadd.f32 %v2395, %v2563
      %2565 = vdwg.mxu0
      %2566 = vmatpush.bf16.msra.mxu0 %v1777
      %2567 = vmatpush.bf16.msra.mxu0 %v1775
      %2568 = vmatpush.bf16.msra.mxu0 %v1773
      %2569 = vmatpush.bf16.msra.mxu0 %v1771
      %2570 = vmatpush.bf16.msra.mxu0 %v1769
      %2571 = vmatpush.bf16.msra.mxu0 %v1767
      %2572 = vmatpush.bf16.msra.mxu0 %v1765
      %2573 = vmatpush.bf16.msra.mxu0 %v1763
      %2574 = vmatmul.bf16.gmra.mxu0 %v1314
      %v2575 = vpop.f32.mrf.mxu0
      %v2576 = vadd.f32 0.0, %v2575
      %v2577 = vpop.f32.mrf.mxu0
      %v2578 = vadd.f32 0.0, %v2577
      %2579 = vmatmul.bf16.gmra.mxu0 %v1318
      %v2580 = vpop.f32.mrf.mxu0
      %v2581 = vadd.f32 0.0, %v2580
      %v2582 = vpop.f32.mrf.mxu0
      %v2583 = vadd.f32 0.0, %v2582
      %2584 = vmatmul.bf16.gmra.mxu0 %v1322
      %v2585 = vpop.f32.mrf.mxu0
      %v2586 = vadd.f32 0.0, %v2585
      %v2587 = vpop.f32.mrf.mxu0
      %v2588 = vadd.f32 0.0, %v2587
      %2589 = vmatmul.bf16.gmra.mxu0 %v1326
      %v2590 = vpop.f32.mrf.mxu0
      %v2591 = vadd.f32 0.0, %v2590
      %v2592 = vpop.f32.mrf.mxu0
      %v2593 = vadd.f32 0.0, %v2592
      %2594 = vmatmul.bf16.gmra.mxu0 %v1330
      %v2595 = vpop.f32.mrf.mxu0
      %v2596 = vadd.f32 0.0, %v2595
      %v2597 = vpop.f32.mrf.mxu0
      %v2598 = vadd.f32 0.0, %v2597
      %2599 = vmatmul.bf16.gmra.mxu0 %v1334
      %v2600 = vpop.f32.mrf.mxu0
      %v2601 = vadd.f32 0.0, %v2600
      %v2602 = vpop.f32.mrf.mxu0
      %v2603 = vadd.f32 0.0, %v2602
      %2604 = vmatmul.bf16.gmra.mxu0 %v1338
      %v2605 = vpop.f32.mrf.mxu0
      %v2606 = vadd.f32 0.0, %v2605
      %v2607 = vpop.f32.mrf.mxu0
      %v2608 = vadd.f32 0.0, %v2607
      %2609 = vmatmul.bf16.gmra.mxu0 %v1342
      %v2610 = vpop.f32.mrf.mxu0
      %v2611 = vadd.f32 0.0, %v2610
      %v2612 = vpop.f32.mrf.mxu0
      %v2613 = vadd.f32 0.0, %v2612
      %2614 = vmatmul.bf16.gmra.mxu0 %v1346
      %v2615 = vpop.f32.mrf.mxu0
      %v2616 = vadd.f32 0.0, %v2615
      %v2617 = vpop.f32.mrf.mxu0
      %v2618 = vadd.f32 0.0, %v2617
      %2619 = vmatmul.bf16.gmra.mxu0 %v1350
      %v2620 = vpop.f32.mrf.mxu0
      %v2621 = vadd.f32 0.0, %v2620
      %v2622 = vpop.f32.mrf.mxu0
      %v2623 = vadd.f32 0.0, %v2622
      %2624 = vmatmul.bf16.gmra.mxu0 %v1354
      %v2625 = vpop.f32.mrf.mxu0
      %v2626 = vadd.f32 0.0, %v2625
      %v2627 = vpop.f32.mrf.mxu0
      %v2628 = vadd.f32 0.0, %v2627
      %2629 = vmatmul.bf16.gmra.mxu0 %v1358
      %v2630 = vpop.f32.mrf.mxu0
      %v2631 = vadd.f32 0.0, %v2630
      %v2632 = vpop.f32.mrf.mxu0
      %v2633 = vadd.f32 0.0, %v2632
      %2634 = vmatmul.bf16.gmra.mxu0 %v1362
      %v2635 = vpop.f32.mrf.mxu0
      %v2636 = vadd.f32 0.0, %v2635
      %v2637 = vpop.f32.mrf.mxu0
      %v2638 = vadd.f32 0.0, %v2637
      %2639 = vmatmul.bf16.gmra.mxu0 %v1366
      %v2640 = vpop.f32.mrf.mxu0
      %v2641 = vadd.f32 0.0, %v2640
      %v2642 = vpop.f32.mrf.mxu0
      %v2643 = vadd.f32 0.0, %v2642
      %2644 = vmatmul.bf16.gmra.mxu0 %v1370
      %v2645 = vpop.f32.mrf.mxu0
      %v2646 = vadd.f32 0.0, %v2645
      %v2647 = vpop.f32.mrf.mxu0
      %v2648 = vadd.f32 0.0, %v2647
      %2649 = vmatmul.bf16.gmra.mxu0 %v1374
      %v2650 = vpop.f32.mrf.mxu0
      %v2651 = vadd.f32 0.0, %v2650
      %v2652 = vpop.f32.mrf.mxu0
      %v2653 = vadd.f32 0.0, %v2652
      %2654 = vmatmul.bf16.gmra.mxu0 %v1378
      %v2655 = vpop.f32.mrf.mxu0
      %v2656 = vadd.f32 0.0, %v2655
      %v2657 = vpop.f32.mrf.mxu0
      %v2658 = vadd.f32 0.0, %v2657
      %2659 = vmatmul.bf16.gmra.mxu0 %v1382
      %v2660 = vpop.f32.mrf.mxu0
      %v2661 = vadd.f32 0.0, %v2660
      %v2662 = vpop.f32.mrf.mxu0
      %v2663 = vadd.f32 0.0, %v2662
      %2664 = vmatmul.bf16.gmra.mxu0 %v1386
      %v2665 = vpop.f32.mrf.mxu0
      %v2666 = vadd.f32 0.0, %v2665
      %v2667 = vpop.f32.mrf.mxu0
      %v2668 = vadd.f32 0.0, %v2667
      %2669 = vmatmul.bf16.gmra.mxu0 %v1390
      %v2670 = vpop.f32.mrf.mxu0
      %v2671 = vadd.f32 0.0, %v2670
      %v2672 = vpop.f32.mrf.mxu0
      %v2673 = vadd.f32 0.0, %v2672
      %2674 = vmatmul.bf16.gmra.mxu0 %v1394
      %v2675 = vpop.f32.mrf.mxu0
      %v2676 = vadd.f32 0.0, %v2675
      %v2677 = vpop.f32.mrf.mxu0
      %v2678 = vadd.f32 0.0, %v2677
      %2679 = vmatmul.bf16.gmra.mxu0 %v1398
      %v2680 = vpop.f32.mrf.mxu0
      %v2681 = vadd.f32 0.0, %v2680
      %v2682 = vpop.f32.mrf.mxu0
      %v2683 = vadd.f32 0.0, %v2682
      %2684 = vmatmul.bf16.gmra.mxu0 %v1402
      %v2685 = vpop.f32.mrf.mxu0
      %v2686 = vadd.f32 0.0, %v2685
      %v2687 = vpop.f32.mrf.mxu0
      %v2688 = vadd.f32 0.0, %v2687
      %2689 = vmatmul.bf16.gmra.mxu0 %v1406
      %v2690 = vpop.f32.mrf.mxu0
      %v2691 = vadd.f32 0.0, %v2690
      %v2692 = vpop.f32.mrf.mxu0
      %v2693 = vadd.f32 0.0, %v2692
      %2694 = vmatmul.bf16.gmra.mxu0 %v1410
      %v2695 = vpop.f32.mrf.mxu0
      %v2696 = vadd.f32 0.0, %v2695
      %v2697 = vpop.f32.mrf.mxu0
      %v2698 = vadd.f32 0.0, %v2697
      %2699 = vmatmul.bf16.gmra.mxu0 %v1414
      %v2700 = vpop.f32.mrf.mxu0
      %v2701 = vadd.f32 0.0, %v2700
      %v2702 = vpop.f32.mrf.mxu0
      %v2703 = vadd.f32 0.0, %v2702
      %2704 = vmatmul.bf16.gmra.mxu0 %v1418
      %v2705 = vpop.f32.mrf.mxu0
      %v2706 = vadd.f32 0.0, %v2705
      %v2707 = vpop.f32.mrf.mxu0
      %v2708 = vadd.f32 0.0, %v2707
      %2709 = vmatmul.bf16.gmra.mxu0 %v1422
      %v2710 = vpop.f32.mrf.mxu0
      %v2711 = vadd.f32 0.0, %v2710
      %v2712 = vpop.f32.mrf.mxu0
      %v2713 = vadd.f32 0.0, %v2712
      %2714 = vmatmul.bf16.gmra.mxu0 %v1426
      %v2715 = vpop.f32.mrf.mxu0
      %v2716 = vadd.f32 0.0, %v2715
      %v2717 = vpop.f32.mrf.mxu0
      %v2718 = vadd.f32 0.0, %v2717
      %2719 = vmatmul.bf16.gmra.mxu0 %v1430
      %v2720 = vpop.f32.mrf.mxu0
      %v2721 = vadd.f32 0.0, %v2720
      %v2722 = vpop.f32.mrf.mxu0
      %v2723 = vadd.f32 0.0, %v2722
      %2724 = vmatmul.bf16.gmra.mxu0 %v1434
      %v2725 = vpop.f32.mrf.mxu0
      %v2726 = vadd.f32 0.0, %v2725
      %v2727 = vpop.f32.mrf.mxu0
      %v2728 = vadd.f32 0.0, %v2727
      %2729 = vmatmul.bf16.gmra.mxu0 %v1438
      %v2730 = vpop.f32.mrf.mxu0
      %v2731 = vadd.f32 0.0, %v2730
      %v2732 = vpop.f32.mrf.mxu0
      %v2733 = vadd.f32 0.0, %v2732
      %2734 = vdwg.mxu0
      %2735 = vmatpush.bf16.msra.mxu0 %v1793
      %2736 = vmatpush.bf16.msra.mxu0 %v1791
      %2737 = vmatpush.bf16.msra.mxu0 %v1789
      %2738 = vmatpush.bf16.msra.mxu0 %v1787
      %2739 = vmatpush.bf16.msra.mxu0 %v1785
      %2740 = vmatpush.bf16.msra.mxu0 %v1783
      %2741 = vmatpush.bf16.msra.mxu0 %v1781
      %2742 = vmatpush.bf16.msra.mxu0 %v1779
      %2743 = vmatmul.bf16.gmra.mxu0 %v1315
      %v2744 = vpop.f32.mrf.mxu0
      %v2745 = vadd.f32 %v2576, %v2744
      %v2746 = vpop.f32.mrf.mxu0
      %v2747 = vadd.f32 %v2578, %v2746
      %2748 = vmatmul.bf16.gmra.mxu0 %v1319
      %v2749 = vpop.f32.mrf.mxu0
      %v2750 = vadd.f32 %v2581, %v2749
      %v2751 = vpop.f32.mrf.mxu0
      %v2752 = vadd.f32 %v2583, %v2751
      %2753 = vmatmul.bf16.gmra.mxu0 %v1323
      %v2754 = vpop.f32.mrf.mxu0
      %v2755 = vadd.f32 %v2586, %v2754
      %v2756 = vpop.f32.mrf.mxu0
      %v2757 = vadd.f32 %v2588, %v2756
      %2758 = vmatmul.bf16.gmra.mxu0 %v1327
      %v2759 = vpop.f32.mrf.mxu0
      %v2760 = vadd.f32 %v2591, %v2759
      %v2761 = vpop.f32.mrf.mxu0
      %v2762 = vadd.f32 %v2593, %v2761
      %2763 = vmatmul.bf16.gmra.mxu0 %v1331
      %v2764 = vpop.f32.mrf.mxu0
      %v2765 = vadd.f32 %v2596, %v2764
      %v2766 = vpop.f32.mrf.mxu0
      %v2767 = vadd.f32 %v2598, %v2766
      %2768 = vmatmul.bf16.gmra.mxu0 %v1335
      %v2769 = vpop.f32.mrf.mxu0
      %v2770 = vadd.f32 %v2601, %v2769
      %v2771 = vpop.f32.mrf.mxu0
      %v2772 = vadd.f32 %v2603, %v2771
      %2773 = vmatmul.bf16.gmra.mxu0 %v1339
      %v2774 = vpop.f32.mrf.mxu0
      %v2775 = vadd.f32 %v2606, %v2774
      %v2776 = vpop.f32.mrf.mxu0
      %v2777 = vadd.f32 %v2608, %v2776
      %2778 = vmatmul.bf16.gmra.mxu0 %v1343
      %v2779 = vpop.f32.mrf.mxu0
      %v2780 = vadd.f32 %v2611, %v2779
      %v2781 = vpop.f32.mrf.mxu0
      %v2782 = vadd.f32 %v2613, %v2781
      %2783 = vmatmul.bf16.gmra.mxu0 %v1347
      %v2784 = vpop.f32.mrf.mxu0
      %v2785 = vadd.f32 %v2616, %v2784
      %v2786 = vpop.f32.mrf.mxu0
      %v2787 = vadd.f32 %v2618, %v2786
      %2788 = vmatmul.bf16.gmra.mxu0 %v1351
      %v2789 = vpop.f32.mrf.mxu0
      %v2790 = vadd.f32 %v2621, %v2789
      %v2791 = vpop.f32.mrf.mxu0
      %v2792 = vadd.f32 %v2623, %v2791
      %2793 = vmatmul.bf16.gmra.mxu0 %v1355
      %v2794 = vpop.f32.mrf.mxu0
      %v2795 = vadd.f32 %v2626, %v2794
      %v2796 = vpop.f32.mrf.mxu0
      %v2797 = vadd.f32 %v2628, %v2796
      %2798 = vmatmul.bf16.gmra.mxu0 %v1359
      %v2799 = vpop.f32.mrf.mxu0
      %v2800 = vadd.f32 %v2631, %v2799
      %v2801 = vpop.f32.mrf.mxu0
      %v2802 = vadd.f32 %v2633, %v2801
      %2803 = vmatmul.bf16.gmra.mxu0 %v1363
      %v2804 = vpop.f32.mrf.mxu0
      %v2805 = vadd.f32 %v2636, %v2804
      %v2806 = vpop.f32.mrf.mxu0
      %v2807 = vadd.f32 %v2638, %v2806
      %2808 = vmatmul.bf16.gmra.mxu0 %v1367
      %v2809 = vpop.f32.mrf.mxu0
      %v2810 = vadd.f32 %v2641, %v2809
      %v2811 = vpop.f32.mrf.mxu0
      %v2812 = vadd.f32 %v2643, %v2811
      %2813 = vmatmul.bf16.gmra.mxu0 %v1371
      %v2814 = vpop.f32.mrf.mxu0
      %v2815 = vadd.f32 %v2646, %v2814
      %v2816 = vpop.f32.mrf.mxu0
      %v2817 = vadd.f32 %v2648, %v2816
      %2818 = vmatmul.bf16.gmra.mxu0 %v1375
      %v2819 = vpop.f32.mrf.mxu0
      %v2820 = vadd.f32 %v2651, %v2819
      %v2821 = vpop.f32.mrf.mxu0
      %v2822 = vadd.f32 %v2653, %v2821
      %2823 = vmatmul.bf16.gmra.mxu0 %v1379
      %v2824 = vpop.f32.mrf.mxu0
      %v2825 = vadd.f32 %v2656, %v2824
      %v2826 = vpop.f32.mrf.mxu0
      %v2827 = vadd.f32 %v2658, %v2826
      %2828 = vmatmul.bf16.gmra.mxu0 %v1383
      %v2829 = vpop.f32.mrf.mxu0
      %v2830 = vadd.f32 %v2661, %v2829
      %v2831 = vpop.f32.mrf.mxu0
      %v2832 = vadd.f32 %v2663, %v2831
      %2833 = vmatmul.bf16.gmra.mxu0 %v1387
      %v2834 = vpop.f32.mrf.mxu0
      %v2835 = vadd.f32 %v2666, %v2834
      %v2836 = vpop.f32.mrf.mxu0
      %v2837 = vadd.f32 %v2668, %v2836
      %2838 = vmatmul.bf16.gmra.mxu0 %v1391
      %v2839 = vpop.f32.mrf.mxu0
      %v2840 = vadd.f32 %v2671, %v2839
      %v2841 = vpop.f32.mrf.mxu0
      %v2842 = vadd.f32 %v2673, %v2841
      %2843 = vmatmul.bf16.gmra.mxu0 %v1395
      %v2844 = vpop.f32.mrf.mxu0
      %v2845 = vadd.f32 %v2676, %v2844
      %v2846 = vpop.f32.mrf.mxu0
      %v2847 = vadd.f32 %v2678, %v2846
      %2848 = vmatmul.bf16.gmra.mxu0 %v1399
      %v2849 = vpop.f32.mrf.mxu0
      %v2850 = vadd.f32 %v2681, %v2849
      %v2851 = vpop.f32.mrf.mxu0
      %v2852 = vadd.f32 %v2683, %v2851
      %2853 = vmatmul.bf16.gmra.mxu0 %v1403
      %v2854 = vpop.f32.mrf.mxu0
      %v2855 = vadd.f32 %v2686, %v2854
      %v2856 = vpop.f32.mrf.mxu0
      %v2857 = vadd.f32 %v2688, %v2856
      %2858 = vmatmul.bf16.gmra.mxu0 %v1407
      %v2859 = vpop.f32.mrf.mxu0
      %v2860 = vadd.f32 %v2691, %v2859
      %v2861 = vpop.f32.mrf.mxu0
      %v2862 = vadd.f32 %v2693, %v2861
      %2863 = vmatmul.bf16.gmra.mxu0 %v1411
      %v2864 = vpop.f32.mrf.mxu0
      %v2865 = vadd.f32 %v2696, %v2864
      %v2866 = vpop.f32.mrf.mxu0
      %v2867 = vadd.f32 %v2698, %v2866
      %2868 = vmatmul.bf16.gmra.mxu0 %v1415
      %v2869 = vpop.f32.mrf.mxu0
      %v2870 = vadd.f32 %v2701, %v2869
      %v2871 = vpop.f32.mrf.mxu0
      %v2872 = vadd.f32 %v2703, %v2871
      %2873 = vmatmul.bf16.gmra.mxu0 %v1419
      %v2874 = vpop.f32.mrf.mxu0
      %v2875 = vadd.f32 %v2706, %v2874
      %v2876 = vpop.f32.mrf.mxu0
      %v2877 = vadd.f32 %v2708, %v2876
      %2878 = vmatmul.bf16.gmra.mxu0 %v1423
      %v2879 = vpop.f32.mrf.mxu0
      %v2880 = vadd.f32 %v2711, %v2879
      %v2881 = vpop.f32.mrf.mxu0
      %v2882 = vadd.f32 %v2713, %v2881
      %2883 = vmatmul.bf16.gmra.mxu0 %v1427
      %v2884 = vpop.f32.mrf.mxu0
      %v2885 = vadd.f32 %v2716, %v2884
      %v2886 = vpop.f32.mrf.mxu0
      %v2887 = vadd.f32 %v2718, %v2886
      %2888 = vmatmul.bf16.gmra.mxu0 %v1431
      %v2889 = vpop.f32.mrf.mxu0
      %v2890 = vadd.f32 %v2721, %v2889
      %v2891 = vpop.f32.mrf.mxu0
      %v2892 = vadd.f32 %v2723, %v2891
      %2893 = vmatmul.bf16.gmra.mxu0 %v1435
      %v2894 = vpop.f32.mrf.mxu0
      %v2895 = vadd.f32 %v2726, %v2894
      %v2896 = vpop.f32.mrf.mxu0
      %v2897 = vadd.f32 %v2728, %v2896
      %2898 = vmatmul.bf16.gmra.mxu0 %v1439
      %v2899 = vpop.f32.mrf.mxu0
      %v2900 = vadd.f32 %v2731, %v2899
      %v2901 = vpop.f32.mrf.mxu0
      %v2902 = vadd.f32 %v2733, %v2901
      %2903 = vdwg.mxu0
      %2904 = vmatpush.bf16.msra.mxu0 %v1809
      %2905 = vmatpush.bf16.msra.mxu0 %v1807
      %2906 = vmatpush.bf16.msra.mxu0 %v1805
      %2907 = vmatpush.bf16.msra.mxu0 %v1803
      %2908 = vmatpush.bf16.msra.mxu0 %v1801
      %2909 = vmatpush.bf16.msra.mxu0 %v1799
      %2910 = vmatpush.bf16.msra.mxu0 %v1797
      %2911 = vmatpush.bf16.msra.mxu0 %v1795
      %2912 = vmatmul.bf16.gmra.mxu0 %v1316
      %v2913 = vpop.f32.mrf.mxu0
      %v2914 = vadd.f32 %v2745, %v2913
      %v2915 = vpop.f32.mrf.mxu0
      %v2916 = vadd.f32 %v2747, %v2915
      %2917 = vmatmul.bf16.gmra.mxu0 %v1320
      %v2918 = vpop.f32.mrf.mxu0
      %v2919 = vadd.f32 %v2750, %v2918
      %v2920 = vpop.f32.mrf.mxu0
      %v2921 = vadd.f32 %v2752, %v2920
      %2922 = vmatmul.bf16.gmra.mxu0 %v1324
      %v2923 = vpop.f32.mrf.mxu0
      %v2924 = vadd.f32 %v2755, %v2923
      %v2925 = vpop.f32.mrf.mxu0
      %v2926 = vadd.f32 %v2757, %v2925
      %2927 = vmatmul.bf16.gmra.mxu0 %v1328
      %v2928 = vpop.f32.mrf.mxu0
      %v2929 = vadd.f32 %v2760, %v2928
      %v2930 = vpop.f32.mrf.mxu0
      %v2931 = vadd.f32 %v2762, %v2930
      %2932 = vmatmul.bf16.gmra.mxu0 %v1332
      %v2933 = vpop.f32.mrf.mxu0
      %v2934 = vadd.f32 %v2765, %v2933
      %v2935 = vpop.f32.mrf.mxu0
      %v2936 = vadd.f32 %v2767, %v2935
      %2937 = vmatmul.bf16.gmra.mxu0 %v1336
      %v2938 = vpop.f32.mrf.mxu0
      %v2939 = vadd.f32 %v2770, %v2938
      %v2940 = vpop.f32.mrf.mxu0
      %v2941 = vadd.f32 %v2772, %v2940
      %2942 = vmatmul.bf16.gmra.mxu0 %v1340
      %v2943 = vpop.f32.mrf.mxu0
      %v2944 = vadd.f32 %v2775, %v2943
      %v2945 = vpop.f32.mrf.mxu0
      %v2946 = vadd.f32 %v2777, %v2945
      %2947 = vmatmul.bf16.gmra.mxu0 %v1344
      %v2948 = vpop.f32.mrf.mxu0
      %v2949 = vadd.f32 %v2780, %v2948
      %v2950 = vpop.f32.mrf.mxu0
      %v2951 = vadd.f32 %v2782, %v2950
      %2952 = vmatmul.bf16.gmra.mxu0 %v1348
      %v2953 = vpop.f32.mrf.mxu0
      %v2954 = vadd.f32 %v2785, %v2953
      %v2955 = vpop.f32.mrf.mxu0
      %v2956 = vadd.f32 %v2787, %v2955
      %2957 = vmatmul.bf16.gmra.mxu0 %v1352
      %v2958 = vpop.f32.mrf.mxu0
      %v2959 = vadd.f32 %v2790, %v2958
      %v2960 = vpop.f32.mrf.mxu0
      %v2961 = vadd.f32 %v2792, %v2960
      %2962 = vmatmul.bf16.gmra.mxu0 %v1356
      %v2963 = vpop.f32.mrf.mxu0
      %v2964 = vadd.f32 %v2795, %v2963
      %v2965 = vpop.f32.mrf.mxu0
      %v2966 = vadd.f32 %v2797, %v2965
      %2967 = vmatmul.bf16.gmra.mxu0 %v1360
      %v2968 = vpop.f32.mrf.mxu0
      %v2969 = vadd.f32 %v2800, %v2968
      %v2970 = vpop.f32.mrf.mxu0
      %v2971 = vadd.f32 %v2802, %v2970
      %2972 = vmatmul.bf16.gmra.mxu0 %v1364
      %v2973 = vpop.f32.mrf.mxu0
      %v2974 = vadd.f32 %v2805, %v2973
      %v2975 = vpop.f32.mrf.mxu0
      %v2976 = vadd.f32 %v2807, %v2975
      %2977 = vmatmul.bf16.gmra.mxu0 %v1368
      %v2978 = vpop.f32.mrf.mxu0
      %v2979 = vadd.f32 %v2810, %v2978
      %v2980 = vpop.f32.mrf.mxu0
      %v2981 = vadd.f32 %v2812, %v2980
      %2982 = vmatmul.bf16.gmra.mxu0 %v1372
      %v2983 = vpop.f32.mrf.mxu0
      %v2984 = vadd.f32 %v2815, %v2983
      %v2985 = vpop.f32.mrf.mxu0
      %v2986 = vadd.f32 %v2817, %v2985
      %2987 = vmatmul.bf16.gmra.mxu0 %v1376
      %v2988 = vpop.f32.mrf.mxu0
      %v2989 = vadd.f32 %v2820, %v2988
      %v2990 = vpop.f32.mrf.mxu0
      %v2991 = vadd.f32 %v2822, %v2990
      %2992 = vmatmul.bf16.gmra.mxu0 %v1380
      %v2993 = vpop.f32.mrf.mxu0
      %v2994 = vadd.f32 %v2825, %v2993
      %v2995 = vpop.f32.mrf.mxu0
      %v2996 = vadd.f32 %v2827, %v2995
      %2997 = vmatmul.bf16.gmra.mxu0 %v1384
      %v2998 = vpop.f32.mrf.mxu0
      %v2999 = vadd.f32 %v2830, %v2998
      %v3000 = vpop.f32.mrf.mxu0
      %v3001 = vadd.f32 %v2832, %v3000
      %3002 = vmatmul.bf16.gmra.mxu0 %v1388
      %v3003 = vpop.f32.mrf.mxu0
      %v3004 = vadd.f32 %v2835, %v3003
      %v3005 = vpop.f32.mrf.mxu0
      %v3006 = vadd.f32 %v2837, %v3005
      %3007 = vmatmul.bf16.gmra.mxu0 %v1392
      %v3008 = vpop.f32.mrf.mxu0
      %v3009 = vadd.f32 %v2840, %v3008
      %v3010 = vpop.f32.mrf.mxu0
      %v3011 = vadd.f32 %v2842, %v3010
      %3012 = vmatmul.bf16.gmra.mxu0 %v1396
      %v3013 = vpop.f32.mrf.mxu0
      %v3014 = vadd.f32 %v2845, %v3013
      %v3015 = vpop.f32.mrf.mxu0
      %v3016 = vadd.f32 %v2847, %v3015
      %3017 = vmatmul.bf16.gmra.mxu0 %v1400
      %v3018 = vpop.f32.mrf.mxu0
      %v3019 = vadd.f32 %v2850, %v3018
      %v3020 = vpop.f32.mrf.mxu0
      %v3021 = vadd.f32 %v2852, %v3020
      %3022 = vmatmul.bf16.gmra.mxu0 %v1404
      %v3023 = vpop.f32.mrf.mxu0
      %v3024 = vadd.f32 %v2855, %v3023
      %v3025 = vpop.f32.mrf.mxu0
      %v3026 = vadd.f32 %v2857, %v3025
      %3027 = vmatmul.bf16.gmra.mxu0 %v1408
      %v3028 = vpop.f32.mrf.mxu0
      %v3029 = vadd.f32 %v2860, %v3028
      %v3030 = vpop.f32.mrf.mxu0
      %v3031 = vadd.f32 %v2862, %v3030
      %3032 = vmatmul.bf16.gmra.mxu0 %v1412
      %v3033 = vpop.f32.mrf.mxu0
      %v3034 = vadd.f32 %v2865, %v3033
      %v3035 = vpop.f32.mrf.mxu0
      %v3036 = vadd.f32 %v2867, %v3035
      %3037 = vmatmul.bf16.gmra.mxu0 %v1416
      %v3038 = vpop.f32.mrf.mxu0
      %v3039 = vadd.f32 %v2870, %v3038
      %v3040 = vpop.f32.mrf.mxu0
      %v3041 = vadd.f32 %v2872, %v3040
      %3042 = vmatmul.bf16.gmra.mxu0 %v1420
      %v3043 = vpop.f32.mrf.mxu0
      %v3044 = vadd.f32 %v2875, %v3043
      %v3045 = vpop.f32.mrf.mxu0
      %v3046 = vadd.f32 %v2877, %v3045
      %3047 = vmatmul.bf16.gmra.mxu0 %v1424
      %v3048 = vpop.f32.mrf.mxu0
      %v3049 = vadd.f32 %v2880, %v3048
      %v3050 = vpop.f32.mrf.mxu0
      %v3051 = vadd.f32 %v2882, %v3050
      %3052 = vmatmul.bf16.gmra.mxu0 %v1428
      %v3053 = vpop.f32.mrf.mxu0
      %v3054 = vadd.f32 %v2885, %v3053
      %v3055 = vpop.f32.mrf.mxu0
      %v3056 = vadd.f32 %v2887, %v3055
      %3057 = vmatmul.bf16.gmra.mxu0 %v1432
      %v3058 = vpop.f32.mrf.mxu0
      %v3059 = vadd.f32 %v2890, %v3058
      %v3060 = vpop.f32.mrf.mxu0
      %v3061 = vadd.f32 %v2892, %v3060
      %3062 = vmatmul.bf16.gmra.mxu0 %v1436
      %v3063 = vpop.f32.mrf.mxu0
      %v3064 = vadd.f32 %v2895, %v3063
      %v3065 = vpop.f32.mrf.mxu0
      %v3066 = vadd.f32 %v2897, %v3065
      %3067 = vmatmul.bf16.gmra.mxu0 %v1440
      %v3068 = vpop.f32.mrf.mxu0
      %v3069 = vadd.f32 %v2900, %v3068
      %v3070 = vpop.f32.mrf.mxu0
      %v3071 = vadd.f32 %v2902, %v3070
      %3072 = vdwg.mxu0
      %3073 = vmatpush.bf16.msra.mxu0 %v1825
      %3074 = vmatpush.bf16.msra.mxu0 %v1823
      %3075 = vmatpush.bf16.msra.mxu0 %v1821
      %3076 = vmatpush.bf16.msra.mxu0 %v1819
      %3077 = vmatpush.bf16.msra.mxu0 %v1817
      %3078 = vmatpush.bf16.msra.mxu0 %v1815
      %3079 = vmatpush.bf16.msra.mxu0 %v1813
      %3080 = vmatpush.bf16.msra.mxu0 %v1811
      %3081 = vmatmul.bf16.gmra.mxu0 %v1317
      %v3082 = vpop.f32.mrf.mxu0
      %v3083 = vadd.f32 %v2914, %v3082
      %v3084 = vpop.f32.mrf.mxu0
      %v3085 = vadd.f32 %v2916, %v3084
      %3086 = vmatmul.bf16.gmra.mxu0 %v1321
      %v3087 = vpop.f32.mrf.mxu0
      %v3088 = vadd.f32 %v2919, %v3087
      %v3089 = vpop.f32.mrf.mxu0
      %v3090 = vadd.f32 %v2921, %v3089
      %3091 = vmatmul.bf16.gmra.mxu0 %v1325
      %v3092 = vpop.f32.mrf.mxu0
      %v3093 = vadd.f32 %v2924, %v3092
      %v3094 = vpop.f32.mrf.mxu0
      %v3095 = vadd.f32 %v2926, %v3094
      %3096 = vmatmul.bf16.gmra.mxu0 %v1329
      %v3097 = vpop.f32.mrf.mxu0
      %v3098 = vadd.f32 %v2929, %v3097
      %v3099 = vpop.f32.mrf.mxu0
      %v3100 = vadd.f32 %v2931, %v3099
      %3101 = vmatmul.bf16.gmra.mxu0 %v1333
      %v3102 = vpop.f32.mrf.mxu0
      %v3103 = vadd.f32 %v2934, %v3102
      %v3104 = vpop.f32.mrf.mxu0
      %v3105 = vadd.f32 %v2936, %v3104
      %3106 = vmatmul.bf16.gmra.mxu0 %v1337
      %v3107 = vpop.f32.mrf.mxu0
      %v3108 = vadd.f32 %v2939, %v3107
      %v3109 = vpop.f32.mrf.mxu0
      %v3110 = vadd.f32 %v2941, %v3109
      %3111 = vmatmul.bf16.gmra.mxu0 %v1341
      %v3112 = vpop.f32.mrf.mxu0
      %v3113 = vadd.f32 %v2944, %v3112
      %v3114 = vpop.f32.mrf.mxu0
      %v3115 = vadd.f32 %v2946, %v3114
      %3116 = vmatmul.bf16.gmra.mxu0 %v1345
      %v3117 = vpop.f32.mrf.mxu0
      %v3118 = vadd.f32 %v2949, %v3117
      %v3119 = vpop.f32.mrf.mxu0
      %v3120 = vadd.f32 %v2951, %v3119
      %3121 = vmatmul.bf16.gmra.mxu0 %v1349
      %v3122 = vpop.f32.mrf.mxu0
      %v3123 = vadd.f32 %v2954, %v3122
      %v3124 = vpop.f32.mrf.mxu0
      %v3125 = vadd.f32 %v2956, %v3124
      %3126 = vmatmul.bf16.gmra.mxu0 %v1353
      %v3127 = vpop.f32.mrf.mxu0
      %v3128 = vadd.f32 %v2959, %v3127
      %v3129 = vpop.f32.mrf.mxu0
      %v3130 = vadd.f32 %v2961, %v3129
      %3131 = vmatmul.bf16.gmra.mxu0 %v1357
      %v3132 = vpop.f32.mrf.mxu0
      %v3133 = vadd.f32 %v2964, %v3132
      %v3134 = vpop.f32.mrf.mxu0
      %v3135 = vadd.f32 %v2966, %v3134
      %3136 = vmatmul.bf16.gmra.mxu0 %v1361
      %v3137 = vpop.f32.mrf.mxu0
      %v3138 = vadd.f32 %v2969, %v3137
      %v3139 = vpop.f32.mrf.mxu0
      %v3140 = vadd.f32 %v2971, %v3139
      %3141 = vmatmul.bf16.gmra.mxu0 %v1365
      %v3142 = vpop.f32.mrf.mxu0
      %v3143 = vadd.f32 %v2974, %v3142
      %v3144 = vpop.f32.mrf.mxu0
      %v3145 = vadd.f32 %v2976, %v3144
      %3146 = vmatmul.bf16.gmra.mxu0 %v1369
      %v3147 = vpop.f32.mrf.mxu0
      %v3148 = vadd.f32 %v2979, %v3147
      %v3149 = vpop.f32.mrf.mxu0
      %v3150 = vadd.f32 %v2981, %v3149
      %3151 = vmatmul.bf16.gmra.mxu0 %v1373
      %v3152 = vpop.f32.mrf.mxu0
      %v3153 = vadd.f32 %v2984, %v3152
      %v3154 = vpop.f32.mrf.mxu0
      %v3155 = vadd.f32 %v2986, %v3154
      %3156 = vmatmul.bf16.gmra.mxu0 %v1377
      %v3157 = vpop.f32.mrf.mxu0
      %v3158 = vadd.f32 %v2989, %v3157
      %v3159 = vpop.f32.mrf.mxu0
      %v3160 = vadd.f32 %v2991, %v3159
      %3161 = vmatmul.bf16.gmra.mxu0 %v1381
      %v3162 = vpop.f32.mrf.mxu0
      %v3163 = vadd.f32 %v2994, %v3162
      %v3164 = vpop.f32.mrf.mxu0
      %v3165 = vadd.f32 %v2996, %v3164
      %3166 = vmatmul.bf16.gmra.mxu0 %v1385
      %v3167 = vpop.f32.mrf.mxu0
      %v3168 = vadd.f32 %v2999, %v3167
      %v3169 = vpop.f32.mrf.mxu0
      %v3170 = vadd.f32 %v3001, %v3169
      %3171 = vmatmul.bf16.gmra.mxu0 %v1389
      %v3172 = vpop.f32.mrf.mxu0
      %v3173 = vadd.f32 %v3004, %v3172
      %v3174 = vpop.f32.mrf.mxu0
      %v3175 = vadd.f32 %v3006, %v3174
      %3176 = vmatmul.bf16.gmra.mxu0 %v1393
      %v3177 = vpop.f32.mrf.mxu0
      %v3178 = vadd.f32 %v3009, %v3177
      %v3179 = vpop.f32.mrf.mxu0
      %v3180 = vadd.f32 %v3011, %v3179
      %3181 = vmatmul.bf16.gmra.mxu0 %v1397
      %v3182 = vpop.f32.mrf.mxu0
      %v3183 = vadd.f32 %v3014, %v3182
      %v3184 = vpop.f32.mrf.mxu0
      %v3185 = vadd.f32 %v3016, %v3184
      %3186 = vmatmul.bf16.gmra.mxu0 %v1401
      %v3187 = vpop.f32.mrf.mxu0
      %v3188 = vadd.f32 %v3019, %v3187
      %v3189 = vpop.f32.mrf.mxu0
      %v3190 = vadd.f32 %v3021, %v3189
      %3191 = vmatmul.bf16.gmra.mxu0 %v1405
      %v3192 = vpop.f32.mrf.mxu0
      %v3193 = vadd.f32 %v3024, %v3192
      %v3194 = vpop.f32.mrf.mxu0
      %v3195 = vadd.f32 %v3026, %v3194
      %3196 = vmatmul.bf16.gmra.mxu0 %v1409
      %v3197 = vpop.f32.mrf.mxu0
      %v3198 = vadd.f32 %v3029, %v3197
      %v3199 = vpop.f32.mrf.mxu0
      %v3200 = vadd.f32 %v3031, %v3199
      %3201 = vmatmul.bf16.gmra.mxu0 %v1413
      %v3202 = vpop.f32.mrf.mxu0
      %v3203 = vadd.f32 %v3034, %v3202
      %v3204 = vpop.f32.mrf.mxu0
      %v3205 = vadd.f32 %v3036, %v3204
      %3206 = vmatmul.bf16.gmra.mxu0 %v1417
      %v3207 = vpop.f32.mrf.mxu0
      %v3208 = vadd.f32 %v3039, %v3207
      %v3209 = vpop.f32.mrf.mxu0
      %v3210 = vadd.f32 %v3041, %v3209
      %3211 = vmatmul.bf16.gmra.mxu0 %v1421
      %v3212 = vpop.f32.mrf.mxu0
      %v3213 = vadd.f32 %v3044, %v3212
      %v3214 = vpop.f32.mrf.mxu0
      %v3215 = vadd.f32 %v3046, %v3214
      %3216 = vmatmul.bf16.gmra.mxu0 %v1425
      %v3217 = vpop.f32.mrf.mxu0
      %v3218 = vadd.f32 %v3049, %v3217
      %v3219 = vpop.f32.mrf.mxu0
      %v3220 = vadd.f32 %v3051, %v3219
      %3221 = vmatmul.bf16.gmra.mxu0 %v1429
      %v3222 = vpop.f32.mrf.mxu0
      %v3223 = vadd.f32 %v3054, %v3222
      %v3224 = vpop.f32.mrf.mxu0
      %v3225 = vadd.f32 %v3056, %v3224
      %3226 = vmatmul.bf16.gmra.mxu0 %v1433
      %v3227 = vpop.f32.mrf.mxu0
      %v3228 = vadd.f32 %v3059, %v3227
      %v3229 = vpop.f32.mrf.mxu0
      %v3230 = vadd.f32 %v3061, %v3229
      %3231 = vmatmul.bf16.gmra.mxu0 %v1437
      %v3232 = vpop.f32.mrf.mxu0
      %v3233 = vadd.f32 %v3064, %v3232
      %v3234 = vpop.f32.mrf.mxu0
      %v3235 = vadd.f32 %v3066, %v3234
      %3236 = vmatmul.bf16.gmra.mxu0 %v1441
      %v3237 = vpop.f32.mrf.mxu0
      %v3238 = vadd.f32 %v3069, %v3237
      %v3239 = vpop.f32.mrf.mxu0
      %v3240 = vadd.f32 %v3071, %v3239
      %3241 = vdwg.mxu0
      %v3242 = vadd.f32 %v674, %v2407
      %v3243 = vadd.f32 %v675, %v3083
      %v3244 = vadd.f32 %v676, %v2409
      %v3245 = vadd.f32 %v677, %v3085
      %v3246 = vadd.f32 %v678, %v2412
      %v3247 = vadd.f32 %v679, %v3088
      %v3248 = vadd.f32 %v680, %v2414
      %v3249 = vadd.f32 %v681, %v3090
      %v3250 = vadd.f32 %v682, %v2417
      %v3251 = vadd.f32 %v683, %v3093
      %v3252 = vadd.f32 %v684, %v2419
      %v3253 = vadd.f32 %v685, %v3095
      %v3254 = vadd.f32 %v686, %v2422
      %v3255 = vadd.f32 %v687, %v3098
      %v3256 = vadd.f32 %v688, %v2424
      %v3257 = vadd.f32 %v689, %v3100
      %v3258 = vadd.f32 %v690, %v2427
      %v3259 = vadd.f32 %v691, %v3103
      %v3260 = vadd.f32 %v692, %v2429
      %v3261 = vadd.f32 %v693, %v3105
      %v3262 = vadd.f32 %v694, %v2432
      %v3263 = vadd.f32 %v695, %v3108
      %v3264 = vadd.f32 %v696, %v2434
      %v3265 = vadd.f32 %v697, %v3110
      %v3266 = vadd.f32 %v698, %v2437
      %v3267 = vadd.f32 %v699, %v3113
      %v3268 = vadd.f32 %v700, %v2439
      %v3269 = vadd.f32 %v701, %v3115
      %v3270 = vadd.f32 %v702, %v2442
      %v3271 = vadd.f32 %v703, %v3118
      %v3272 = vadd.f32 %v704, %v2444
      %v3273 = vadd.f32 %v705, %v3120
      %v3274 = vadd.f32 %v706, %v2447
      %v3275 = vadd.f32 %v707, %v3123
      %v3276 = vadd.f32 %v708, %v2449
      %v3277 = vadd.f32 %v709, %v3125
      %v3278 = vadd.f32 %v710, %v2452
      %v3279 = vadd.f32 %v711, %v3128
      %v3280 = vadd.f32 %v712, %v2454
      %v3281 = vadd.f32 %v713, %v3130
      %v3282 = vadd.f32 %v714, %v2457
      %v3283 = vadd.f32 %v715, %v3133
      %v3284 = vadd.f32 %v716, %v2459
      %v3285 = vadd.f32 %v717, %v3135
      %v3286 = vadd.f32 %v718, %v2462
      %v3287 = vadd.f32 %v719, %v3138
      %v3288 = vadd.f32 %v720, %v2464
      %v3289 = vadd.f32 %v721, %v3140
      %v3290 = vadd.f32 %v722, %v2467
      %v3291 = vadd.f32 %v723, %v3143
      %v3292 = vadd.f32 %v724, %v2469
      %v3293 = vadd.f32 %v725, %v3145
      %v3294 = vadd.f32 %v726, %v2472
      %v3295 = vadd.f32 %v727, %v3148
      %v3296 = vadd.f32 %v728, %v2474
      %v3297 = vadd.f32 %v729, %v3150
      %v3298 = vadd.f32 %v730, %v2477
      %v3299 = vadd.f32 %v731, %v3153
      %v3300 = vadd.f32 %v732, %v2479
      %v3301 = vadd.f32 %v733, %v3155
      %v3302 = vadd.f32 %v734, %v2482
      %v3303 = vadd.f32 %v735, %v3158
      %v3304 = vadd.f32 %v736, %v2484
      %v3305 = vadd.f32 %v737, %v3160
      %v3306 = vadd.f32 %v738, %v2487
      %v3307 = vadd.f32 %v739, %v3163
      %v3308 = vadd.f32 %v740, %v2489
      %v3309 = vadd.f32 %v741, %v3165
      %v3310 = vadd.f32 %v742, %v2492
      %v3311 = vadd.f32 %v743, %v3168
      %v3312 = vadd.f32 %v744, %v2494
      %v3313 = vadd.f32 %v745, %v3170
      %v3314 = vadd.f32 %v746, %v2497
      %v3315 = vadd.f32 %v747, %v3173
      %v3316 = vadd.f32 %v748, %v2499
      %v3317 = vadd.f32 %v749, %v3175
      %v3318 = vadd.f32 %v750, %v2502
      %v3319 = vadd.f32 %v751, %v3178
      %v3320 = vadd.f32 %v752, %v2504
      %v3321 = vadd.f32 %v753, %v3180
      %v3322 = vadd.f32 %v754, %v2507
      %v3323 = vadd.f32 %v755, %v3183
      %v3324 = vadd.f32 %v756, %v2509
      %v3325 = vadd.f32 %v757, %v3185
      %v3326 = vadd.f32 %v758, %v2512
      %v3327 = vadd.f32 %v759, %v3188
      %v3328 = vadd.f32 %v760, %v2514
      %v3329 = vadd.f32 %v761, %v3190
      %v3330 = vadd.f32 %v762, %v2517
      %v3331 = vadd.f32 %v763, %v3193
      %v3332 = vadd.f32 %v764, %v2519
      %v3333 = vadd.f32 %v765, %v3195
      %v3334 = vadd.f32 %v766, %v2522
      %v3335 = vadd.f32 %v767, %v3198
      %v3336 = vadd.f32 %v768, %v2524
      %v3337 = vadd.f32 %v769, %v3200
      %v3338 = vadd.f32 %v770, %v2527
      %v3339 = vadd.f32 %v771, %v3203
      %v3340 = vadd.f32 %v772, %v2529
      %v3341 = vadd.f32 %v773, %v3205
      %v3342 = vadd.f32 %v774, %v2532
      %v3343 = vadd.f32 %v775, %v3208
      %v3344 = vadd.f32 %v776, %v2534
      %v3345 = vadd.f32 %v777, %v3210
      %v3346 = vadd.f32 %v778, %v2537
      %v3347 = vadd.f32 %v779, %v3213
      %v3348 = vadd.f32 %v780, %v2539
      %v3349 = vadd.f32 %v781, %v3215
      %v3350 = vadd.f32 %v782, %v2542
      %v3351 = vadd.f32 %v783, %v3218
      %v3352 = vadd.f32 %v784, %v2544
      %v3353 = vadd.f32 %v785, %v3220
      %v3354 = vadd.f32 %v786, %v2547
      %v3355 = vadd.f32 %v787, %v3223
      %v3356 = vadd.f32 %v788, %v2549
      %v3357 = vadd.f32 %v789, %v3225
      %v3358 = vadd.f32 %v790, %v2552
      %v3359 = vadd.f32 %v791, %v3228
      %v3360 = vadd.f32 %v792, %v2554
      %v3361 = vadd.f32 %v793, %v3230
      %v3362 = vadd.f32 %v794, %v2557
      %v3363 = vadd.f32 %v795, %v3233
      %v3364 = vadd.f32 %v796, %v2559
      %v3365 = vadd.f32 %v797, %v3235
      %v3366 = vadd.f32 %v798, %v2562
      %v3367 = vadd.f32 %v799, %v3238
      %v3368 = vadd.f32 %v800, %v2564
      %v3369 = vadd.f32 %v801, %v3240
      %3370 = vst [vmem:[#allocation2] sm:$0xff] %v3242
      %3371 = vst [vmem:[#allocation2 + $0x8] sm:$0xff] %v3243
      %3372 = vst [vmem:[#allocation2 + $0x10] sm:$0xff] %v3244
      %3373 = vst [vmem:[#allocation2 + $0x18] sm:$0xff] %v3245
      %3374 = vst [vmem:[#allocation2 + $0x20] sm:$0xff] %v3246
      %3375 = vst [vmem:[#allocation2 + $0x28] sm:$0xff] %v3247
      %3376 = vst [vmem:[#allocation2 + $0x30] sm:$0xff] %v3248
      %3377 = vst [vmem:[#allocation2 + $0x38] sm:$0xff] %v3249
      %3378 = vst [vmem:[#allocation2 + $0x40] sm:$0xff] %v3250
      %3379 = vst [vmem:[#allocation2 + $0x48] sm:$0xff] %v3251
      %3380 = vst [vmem:[#allocation2 + $0x50] sm:$0xff] %v3252
      %3381 = vst [vmem:[#allocation2 + $0x58] sm:$0xff] %v3253
      %3382 = vst [vmem:[#allocation2 + $0x60] sm:$0xff] %v3254
      %3383 = vst [vmem:[#allocation2 + $0x68] sm:$0xff] %v3255
      %3384 = vst [vmem:[#allocation2 + $0x70] sm:$0xff] %v3256
      %3385 = vst [vmem:[#allocation2 + $0x78] sm:$0xff] %v3257
      %3386 = vst [vmem:[#allocation2 + $0x80] sm:$0xff] %v3258
      %3387 = vst [vmem:[#allocation2 + $0x88] sm:$0xff] %v3259
      %3388 = vst [vmem:[#allocation2 + $0x90] sm:$0xff] %v3260
      %3389 = vst [vmem:[#allocation2 + $0x98] sm:$0xff] %v3261
      %3390 = vst [vmem:[#allocation2 + $0xa0] sm:$0xff] %v3262
      %3391 = vst [vmem:[#allocation2 + $0xa8] sm:$0xff] %v3263
      %3392 = vst [vmem:[#allocation2 + $0xb0] sm:$0xff] %v3264
      %3393 = vst [vmem:[#allocation2 + $0xb8] sm:$0xff] %v3265
      %3394 = vst [vmem:[#allocation2 + $0xc0] sm:$0xff] %v3266
      %3395 = vst [vmem:[#allocation2 + $0xc8] sm:$0xff] %v3267
      %3396 = vst [vmem:[#allocation2 + $0xd0] sm:$0xff] %v3268
      %3397 = vst [vmem:[#allocation2 + $0xd8] sm:$0xff] %v3269
      %3398 = vst [vmem:[#allocation2 + $0xe0] sm:$0xff] %v3270
      %3399 = vst [vmem:[#allocation2 + $0xe8] sm:$0xff] %v3271
      %3400 = vst [vmem:[#allocation2 + $0xf0] sm:$0xff] %v3272
      %3401 = vst [vmem:[#allocation2 + $0xf8] sm:$0xff] %v3273
      %3402 = vst [vmem:[#allocation2 + $0x100] sm:$0xff] %v3274
      %3403 = vst [vmem:[#allocation2 + $0x108] sm:$0xff] %v3275
      %3404 = vst [vmem:[#allocation2 + $0x110] sm:$0xff] %v3276
      %3405 = vst [vmem:[#allocation2 + $0x118] sm:$0xff] %v3277
      %3406 = vst [vmem:[#allocation2 + $0x120] sm:$0xff] %v3278
      %3407 = vst [vmem:[#allocation2 + $0x128] sm:$0xff] %v3279
      %3408 = vst [vmem:[#allocation2 + $0x130] sm:$0xff] %v3280
      %3409 = vst [vmem:[#allocation2 + $0x138] sm:$0xff] %v3281
      %3410 = vst [vmem:[#allocation2 + $0x140] sm:$0xff] %v3282
      %3411 = vst [vmem:[#allocation2 + $0x148] sm:$0xff] %v3283
      %3412 = vst [vmem:[#allocation2 + $0x150] sm:$0xff] %v3284
      %3413 = vst [vmem:[#allocation2 + $0x158] sm:$0xff] %v3285
      %3414 = vst [vmem:[#allocation2 + $0x160] sm:$0xff] %v3286
      %3415 = vst [vmem:[#allocation2 + $0x168] sm:$0xff] %v3287
      %3416 = vst [vmem:[#allocation2 + $0x170] sm:$0xff] %v3288
      %3417 = vst [vmem:[#allocation2 + $0x178] sm:$0xff] %v3289
      %3418 = vst [vmem:[#allocation2 + $0x180] sm:$0xff] %v3290
      %3419 = vst [vmem:[#allocation2 + $0x188] sm:$0xff] %v3291
      %3420 = vst [vmem:[#allocation2 + $0x190] sm:$0xff] %v3292
      %3421 = vst [vmem:[#allocation2 + $0x198] sm:$0xff] %v3293
      %3422 = vst [vmem:[#allocation2 + $0x1a0] sm:$0xff] %v3294
      %3423 = vst [vmem:[#allocation2 + $0x1a8] sm:$0xff] %v3295
      %3424 = vst [vmem:[#allocation2 + $0x1b0] sm:$0xff] %v3296
      %3425 = vst [vmem:[#allocation2 + $0x1b8] sm:$0xff] %v3297
      %3426 = vst [vmem:[#allocation2 + $0x1c0] sm:$0xff] %v3298
      %3427 = vst [vmem:[#allocation2 + $0x1c8] sm:$0xff] %v3299
      %3428 = vst [vmem:[#allocation2 + $0x1d0] sm:$0xff] %v3300
      %3429 = vst [vmem:[#allocation2 + $0x1d8] sm:$0xff] %v3301
      %3430 = vst [vmem:[#allocation2 + $0x1e0] sm:$0xff] %v3302
      %3431 = vst [vmem:[#allocation2 + $0x1e8] sm:$0xff] %v3303
      %3432 = vst [vmem:[#allocation2 + $0x1f0] sm:$0xff] %v3304
      %3433 = vst [vmem:[#allocation2 + $0x1f8] sm:$0xff] %v3305
      %3434 = vst [vmem:[#allocation2 + $0x200] sm:$0xff] %v3306
      %3435 = vst [vmem:[#allocation2 + $0x208] sm:$0xff] %v3307
      %3436 = vst [vmem:[#allocation2 + $0x210] sm:$0xff] %v3308
      %3437 = vst [vmem:[#allocation2 + $0x218] sm:$0xff] %v3309
      %3438 = vst [vmem:[#allocation2 + $0x220] sm:$0xff] %v3310
      %3439 = vst [vmem:[#allocation2 + $0x228] sm:$0xff] %v3311
      %3440 = vst [vmem:[#allocation2 + $0x230] sm:$0xff] %v3312
      %3441 = vst [vmem:[#allocation2 + $0x238] sm:$0xff] %v3313
      %3442 = vst [vmem:[#allocation2 + $0x240] sm:$0xff] %v3314
      %3443 = vst [vmem:[#allocation2 + $0x248] sm:$0xff] %v3315
      %3444 = vst [vmem:[#allocation2 + $0x250] sm:$0xff] %v3316
      %3445 = vst [vmem:[#allocation2 + $0x258] sm:$0xff] %v3317
      %3446 = vst [vmem:[#allocation2 + $0x260] sm:$0xff] %v3318
      %3447 = vst [vmem:[#allocation2 + $0x268] sm:$0xff] %v3319
      %3448 = vst [vmem:[#allocation2 + $0x270] sm:$0xff] %v3320
      %3449 = vst [vmem:[#allocation2 + $0x278] sm:$0xff] %v3321
      %3450 = vst [vmem:[#allocation2 + $0x280] sm:$0xff] %v3322
      %3451 = vst [vmem:[#allocation2 + $0x288] sm:$0xff] %v3323
      %3452 = vst [vmem:[#allocation2 + $0x290] sm:$0xff] %v3324
      %3453 = vst [vmem:[#allocation2 + $0x298] sm:$0xff] %v3325
      %3454 = vst [vmem:[#allocation2 + $0x2a0] sm:$0xff] %v3326
      %3455 = vst [vmem:[#allocation2 + $0x2a8] sm:$0xff] %v3327
      %3456 = vst [vmem:[#allocation2 + $0x2b0] sm:$0xff] %v3328
      %3457 = vst [vmem:[#allocation2 + $0x2b8] sm:$0xff] %v3329
      %3458 = vst [vmem:[#allocation2 + $0x2c0] sm:$0xff] %v3330
      %3459 = vst [vmem:[#allocation2 + $0x2c8] sm:$0xff] %v3331
      %3460 = vst [vmem:[#allocation2 + $0x2d0] sm:$0xff] %v3332
      %3461 = vst [vmem:[#allocation2 + $0x2d8] sm:$0xff] %v3333
      %3462 = vst [vmem:[#allocation2 + $0x2e0] sm:$0xff] %v3334
      %3463 = vst [vmem:[#allocation2 + $0x2e8] sm:$0xff] %v3335
      %3464 = vst [vmem:[#allocation2 + $0x2f0] sm:$0xff] %v3336
      %3465 = vst [vmem:[#allocation2 + $0x2f8] sm:$0xff] %v3337
      %3466 = vst [vmem:[#allocation2 + $0x300] sm:$0xff] %v3338
      %3467 = vst [vmem:[#allocation2 + $0x308] sm:$0xff] %v3339
      %3468 = vst [vmem:[#allocation2 + $0x310] sm:$0xff] %v3340
      %3469 = vst [vmem:[#allocation2 + $0x318] sm:$0xff] %v3341
      %3470 = vst [vmem:[#allocation2 + $0x320] sm:$0xff] %v3342
      %3471 = vst [vmem:[#allocation2 + $0x328] sm:$0xff] %v3343
      %3472 = vst [vmem:[#allocation2 + $0x330] sm:$0xff] %v3344
      %3473 = vst [vmem:[#allocation2 + $0x338] sm:$0xff] %v3345
      %3474 = vst [vmem:[#allocation2 + $0x340] sm:$0xff] %v3346
      %3475 = vst [vmem:[#allocation2 + $0x348] sm:$0xff] %v3347
      %3476 = vst [vmem:[#allocation2 + $0x350] sm:$0xff] %v3348
      %3477 = vst [vmem:[#allocation2 + $0x358] sm:$0xff] %v3349
      %3478 = vst [vmem:[#allocation2 + $0x360] sm:$0xff] %v3350
      %3479 = vst [vmem:[#allocation2 + $0x368] sm:$0xff] %v3351
      %3480 = vst [vmem:[#allocation2 + $0x370] sm:$0xff] %v3352
      %3481 = vst [vmem:[#allocation2 + $0x378] sm:$0xff] %v3353
      %3482 = vst [vmem:[#allocation2 + $0x380] sm:$0xff] %v3354
      %3483 = vst [vmem:[#allocation2 + $0x388] sm:$0xff] %v3355
      %3484 = vst [vmem:[#allocation2 + $0x390] sm:$0xff] %v3356
      %3485 = vst [vmem:[#allocation2 + $0x398] sm:$0xff] %v3357
      %3486 = vst [vmem:[#allocation2 + $0x3a0] sm:$0xff] %v3358
      %3487 = vst [vmem:[#allocation2 + $0x3a8] sm:$0xff] %v3359
      %3488 = vst [vmem:[#allocation2 + $0x3b0] sm:$0xff] %v3360
      %3489 = vst [vmem:[#allocation2 + $0x3b8] sm:$0xff] %v3361
      %3490 = vst [vmem:[#allocation2 + $0x3c0] sm:$0xff] %v3362
      %3491 = vst [vmem:[#allocation2 + $0x3c8] sm:$0xff] %v3363
      %3492 = vst [vmem:[#allocation2 + $0x3d0] sm:$0xff] %v3364
      %3493 = vst [vmem:[#allocation2 + $0x3d8] sm:$0xff] %v3365
      %3494 = vst [vmem:[#allocation2 + $0x3e0] sm:$0xff] %v3366
      %3495 = vst [vmem:[#allocation2 + $0x3e8] sm:$0xff] %v3367
      %3496 = vst [vmem:[#allocation2 + $0x3f0] sm:$0xff] %v3368
      %3497 = vst [vmem:[#allocation2 + $0x3f8] sm:$0xff] %v3369
      %s3498 = smul.u32 %s26, 512
      %p3499 = scmp.eq.s32.totalorder %s25, 6
      // Predicated region
      $region64: #{orthogonal_gcn_forward.1} parent=35 // pred_check
        %p3500 = pneg %p305
      $region65: #{orthogonal_gcn_forward.1} parent=35 // pred_check_branch
        %3502 = sbr.rel (%p3500) target = $region67
      $region66: #{orthogonal_gcn_forward.1} parent=35 // pred_region
        %v3503 = vld [vmem:[#allocation2] sm:$0xff]
        %v3504 = vld [vmem:[#allocation2 + $0x8] sm:$0xff]
        %v3505 = vld [vmem:[#allocation2 + $0x10] sm:$0xff]
        %v3506 = vld [vmem:[#allocation2 + $0x18] sm:$0xff]
        %v3507 = vld [vmem:[#allocation2 + $0x20] sm:$0xff]
        %v3508 = vld [vmem:[#allocation2 + $0x28] sm:$0xff]
        %v3509 = vld [vmem:[#allocation2 + $0x30] sm:$0xff]
        %v3510 = vld [vmem:[#allocation2 + $0x38] sm:$0xff]
        %v3511 = vld [vmem:[#allocation2 + $0x40] sm:$0xff]
        %v3512 = vld [vmem:[#allocation2 + $0x48] sm:$0xff]
        %v3513 = vld [vmem:[#allocation2 + $0x50] sm:$0xff]
        %v3514 = vld [vmem:[#allocation2 + $0x58] sm:$0xff]
        %v3515 = vld [vmem:[#allocation2 + $0x60] sm:$0xff]
        %v3516 = vld [vmem:[#allocation2 + $0x68] sm:$0xff]
        %v3517 = vld [vmem:[#allocation2 + $0x70] sm:$0xff]
        %v3518 = vld [vmem:[#allocation2 + $0x78] sm:$0xff]
        %v3519 = vld [vmem:[#allocation2 + $0x80] sm:$0xff]
        %v3520 = vld [vmem:[#allocation2 + $0x88] sm:$0xff]
        %v3521 = vld [vmem:[#allocation2 + $0x90] sm:$0xff]
        %v3522 = vld [vmem:[#allocation2 + $0x98] sm:$0xff]
        %v3523 = vld [vmem:[#allocation2 + $0xa0] sm:$0xff]
        %v3524 = vld [vmem:[#allocation2 + $0xa8] sm:$0xff]
        %v3525 = vld [vmem:[#allocation2 + $0xb0] sm:$0xff]
        %v3526 = vld [vmem:[#allocation2 + $0xb8] sm:$0xff]
        %v3527 = vld [vmem:[#allocation2 + $0xc0] sm:$0xff]
        %v3528 = vld [vmem:[#allocation2 + $0xc8] sm:$0xff]
        %v3529 = vld [vmem:[#allocation2 + $0xd0] sm:$0xff]
        %v3530 = vld [vmem:[#allocation2 + $0xd8] sm:$0xff]
        %v3531 = vld [vmem:[#allocation2 + $0xe0] sm:$0xff]
        %v3532 = vld [vmem:[#allocation2 + $0xe8] sm:$0xff]
        %v3533 = vld [vmem:[#allocation2 + $0xf0] sm:$0xff]
        %v3534 = vld [vmem:[#allocation2 + $0xf8] sm:$0xff]
        %v3535 = vld [vmem:[#allocation2 + $0x100] sm:$0xff]
        %v3536 = vld [vmem:[#allocation2 + $0x108] sm:$0xff]
        %v3537 = vld [vmem:[#allocation2 + $0x110] sm:$0xff]
        %v3538 = vld [vmem:[#allocation2 + $0x118] sm:$0xff]
        %v3539 = vld [vmem:[#allocation2 + $0x120] sm:$0xff]
        %v3540 = vld [vmem:[#allocation2 + $0x128] sm:$0xff]
        %v3541 = vld [vmem:[#allocation2 + $0x130] sm:$0xff]
        %v3542 = vld [vmem:[#allocation2 + $0x138] sm:$0xff]
        %v3543 = vld [vmem:[#allocation2 + $0x140] sm:$0xff]
        %v3544 = vld [vmem:[#allocation2 + $0x148] sm:$0xff]
        %v3545 = vld [vmem:[#allocation2 + $0x150] sm:$0xff]
        %v3546 = vld [vmem:[#allocation2 + $0x158] sm:$0xff]
        %v3547 = vld [vmem:[#allocation2 + $0x160] sm:$0xff]
        %v3548 = vld [vmem:[#allocation2 + $0x168] sm:$0xff]
        %v3549 = vld [vmem:[#allocation2 + $0x170] sm:$0xff]
        %v3550 = vld [vmem:[#allocation2 + $0x178] sm:$0xff]
        %v3551 = vld [vmem:[#allocation2 + $0x180] sm:$0xff]
        %v3552 = vld [vmem:[#allocation2 + $0x188] sm:$0xff]
        %v3553 = vld [vmem:[#allocation2 + $0x190] sm:$0xff]
        %v3554 = vld [vmem:[#allocation2 + $0x198] sm:$0xff]
        %v3555 = vld [vmem:[#allocation2 + $0x1a0] sm:$0xff]
        %v3556 = vld [vmem:[#allocation2 + $0x1a8] sm:$0xff]
        %v3557 = vld [vmem:[#allocation2 + $0x1b0] sm:$0xff]
        %v3558 = vld [vmem:[#allocation2 + $0x1b8] sm:$0xff]
        %v3559 = vld [vmem:[#allocation2 + $0x1c0] sm:$0xff]
        %v3560 = vld [vmem:[#allocation2 + $0x1c8] sm:$0xff]
        %v3561 = vld [vmem:[#allocation2 + $0x1d0] sm:$0xff]
        %v3562 = vld [vmem:[#allocation2 + $0x1d8] sm:$0xff]
        %v3563 = vld [vmem:[#allocation2 + $0x1e0] sm:$0xff]
        %v3564 = vld [vmem:[#allocation2 + $0x1e8] sm:$0xff]
        %v3565 = vld [vmem:[#allocation2 + $0x1f0] sm:$0xff]
        %v3566 = vld [vmem:[#allocation2 + $0x1f8] sm:$0xff]
        %v3567 = vld [vmem:[#allocation2 + $0x200] sm:$0xff]
        %v3568 = vld [vmem:[#allocation2 + $0x208] sm:$0xff]
        %v3569 = vld [vmem:[#allocation2 + $0x210] sm:$0xff]
        %v3570 = vld [vmem:[#allocation2 + $0x218] sm:$0xff]
        %v3571 = vld [vmem:[#allocation2 + $0x220] sm:$0xff]
        %v3572 = vld [vmem:[#allocation2 + $0x228] sm:$0xff]
        %v3573 = vld [vmem:[#allocation2 + $0x230] sm:$0xff]
        %v3574 = vld [vmem:[#allocation2 + $0x238] sm:$0xff]
        %v3575 = vld [vmem:[#allocation2 + $0x240] sm:$0xff]
        %v3576 = vld [vmem:[#allocation2 + $0x248] sm:$0xff]
        %v3577 = vld [vmem:[#allocation2 + $0x250] sm:$0xff]
        %v3578 = vld [vmem:[#allocation2 + $0x258] sm:$0xff]
        %v3579 = vld [vmem:[#allocation2 + $0x260] sm:$0xff]
        %v3580 = vld [vmem:[#allocation2 + $0x268] sm:$0xff]
        %v3581 = vld [vmem:[#allocation2 + $0x270] sm:$0xff]
        %v3582 = vld [vmem:[#allocation2 + $0x278] sm:$0xff]
        %v3583 = vld [vmem:[#allocation2 + $0x280] sm:$0xff]
        %v3584 = vld [vmem:[#allocation2 + $0x288] sm:$0xff]
        %v3585 = vld [vmem:[#allocation2 + $0x290] sm:$0xff]
        %v3586 = vld [vmem:[#allocation2 + $0x298] sm:$0xff]
        %v3587 = vld [vmem:[#allocation2 + $0x2a0] sm:$0xff]
        %v3588 = vld [vmem:[#allocation2 + $0x2a8] sm:$0xff]
        %v3589 = vld [vmem:[#allocation2 + $0x2b0] sm:$0xff]
        %v3590 = vld [vmem:[#allocation2 + $0x2b8] sm:$0xff]
        %v3591 = vld [vmem:[#allocation2 + $0x2c0] sm:$0xff]
        %v3592 = vld [vmem:[#allocation2 + $0x2c8] sm:$0xff]
        %v3593 = vld [vmem:[#allocation2 + $0x2d0] sm:$0xff]
        %v3594 = vld [vmem:[#allocation2 + $0x2d8] sm:$0xff]
        %v3595 = vld [vmem:[#allocation2 + $0x2e0] sm:$0xff]
        %v3596 = vld [vmem:[#allocation2 + $0x2e8] sm:$0xff]
        %v3597 = vld [vmem:[#allocation2 + $0x2f0] sm:$0xff]
        %v3598 = vld [vmem:[#allocation2 + $0x2f8] sm:$0xff]
        %v3599 = vld [vmem:[#allocation2 + $0x300] sm:$0xff]
        %v3600 = vld [vmem:[#allocation2 + $0x308] sm:$0xff]
        %v3601 = vld [vmem:[#allocation2 + $0x310] sm:$0xff]
        %v3602 = vld [vmem:[#allocation2 + $0x318] sm:$0xff]
        %v3603 = vld [vmem:[#allocation2 + $0x320] sm:$0xff]
        %v3604 = vld [vmem:[#allocation2 + $0x328] sm:$0xff]
        %v3605 = vld [vmem:[#allocation2 + $0x330] sm:$0xff]
        %v3606 = vld [vmem:[#allocation2 + $0x338] sm:$0xff]
        %v3607 = vld [vmem:[#allocation2 + $0x340] sm:$0xff]
        %v3608 = vld [vmem:[#allocation2 + $0x348] sm:$0xff]
        %v3609 = vld [vmem:[#allocation2 + $0x350] sm:$0xff]
        %v3610 = vld [vmem:[#allocation2 + $0x358] sm:$0xff]
        %v3611 = vld [vmem:[#allocation2 + $0x360] sm:$0xff]
        %v3612 = vld [vmem:[#allocation2 + $0x368] sm:$0xff]
        %v3613 = vld [vmem:[#allocation2 + $0x370] sm:$0xff]
        %v3614 = vld [vmem:[#allocation2 + $0x378] sm:$0xff]
        %v3615 = vld [vmem:[#allocation2 + $0x380] sm:$0xff]
        %v3616 = vld [vmem:[#allocation2 + $0x388] sm:$0xff]
        %v3617 = vld [vmem:[#allocation2 + $0x390] sm:$0xff]
        %v3618 = vld [vmem:[#allocation2 + $0x398] sm:$0xff]
        %v3619 = vld [vmem:[#allocation2 + $0x3a0] sm:$0xff]
        %v3620 = vld [vmem:[#allocation2 + $0x3a8] sm:$0xff]
        %v3621 = vld [vmem:[#allocation2 + $0x3b0] sm:$0xff]
        %v3622 = vld [vmem:[#allocation2 + $0x3b8] sm:$0xff]
        %v3623 = vld [vmem:[#allocation2 + $0x3c0] sm:$0xff]
        %v3624 = vld [vmem:[#allocation2 + $0x3c8] sm:$0xff]
        %v3625 = vld [vmem:[#allocation2 + $0x3d0] sm:$0xff]
        %v3626 = vld [vmem:[#allocation2 + $0x3d8] sm:$0xff]
        %v3627 = vld [vmem:[#allocation2 + $0x3e0] sm:$0xff]
        %v3628 = vld [vmem:[#allocation2 + $0x3e8] sm:$0xff]
        %v3629 = vld [vmem:[#allocation2 + $0x3f0] sm:$0xff]
        %v3630 = vld [vmem:[#allocation2 + $0x3f8] sm:$0xff]
        %v3631 = vpack.c.bf16 %v3505, %v3503
        %v3632 = vpack.c.bf16 %v3506, %v3504
        %v3633 = vpack.c.bf16 %v3509, %v3507
        %v3634 = vpack.c.bf16 %v3510, %v3508
        %v3635 = vpack.c.bf16 %v3513, %v3511
        %v3636 = vpack.c.bf16 %v3514, %v3512
        %v3637 = vpack.c.bf16 %v3517, %v3515
        %v3638 = vpack.c.bf16 %v3518, %v3516
        %v3639 = vpack.c.bf16 %v3521, %v3519
        %v3640 = vpack.c.bf16 %v3522, %v3520
        %v3641 = vpack.c.bf16 %v3525, %v3523
        %v3642 = vpack.c.bf16 %v3526, %v3524
        %v3643 = vpack.c.bf16 %v3529, %v3527
        %v3644 = vpack.c.bf16 %v3530, %v3528
        %v3645 = vpack.c.bf16 %v3533, %v3531
        %v3646 = vpack.c.bf16 %v3534, %v3532
        %v3647 = vpack.c.bf16 %v3537, %v3535
        %v3648 = vpack.c.bf16 %v3538, %v3536
        %v3649 = vpack.c.bf16 %v3541, %v3539
        %v3650 = vpack.c.bf16 %v3542, %v3540
        %v3651 = vpack.c.bf16 %v3545, %v3543
        %v3652 = vpack.c.bf16 %v3546, %v3544
        %v3653 = vpack.c.bf16 %v3549, %v3547
        %v3654 = vpack.c.bf16 %v3550, %v3548
        %v3655 = vpack.c.bf16 %v3553, %v3551
        %v3656 = vpack.c.bf16 %v3554, %v3552
        %v3657 = vpack.c.bf16 %v3557, %v3555
        %v3658 = vpack.c.bf16 %v3558, %v3556
        %v3659 = vpack.c.bf16 %v3561, %v3559
        %v3660 = vpack.c.bf16 %v3562, %v3560
        %v3661 = vpack.c.bf16 %v3565, %v3563
        %v3662 = vpack.c.bf16 %v3566, %v3564
        %v3663 = vpack.c.bf16 %v3569, %v3567
        %v3664 = vpack.c.bf16 %v3570, %v3568
        %v3665 = vpack.c.bf16 %v3573, %v3571
        %v3666 = vpack.c.bf16 %v3574, %v3572
        %v3667 = vpack.c.bf16 %v3577, %v3575
        %v3668 = vpack.c.bf16 %v3578, %v3576
        %v3669 = vpack.c.bf16 %v3581, %v3579
        %v3670 = vpack.c.bf16 %v3582, %v3580
        %v3671 = vpack.c.bf16 %v3585, %v3583
        %v3672 = vpack.c.bf16 %v3586, %v3584
        %v3673 = vpack.c.bf16 %v3589, %v3587
        %v3674 = vpack.c.bf16 %v3590, %v3588
        %v3675 = vpack.c.bf16 %v3593, %v3591
        %v3676 = vpack.c.bf16 %v3594, %v3592
        %v3677 = vpack.c.bf16 %v3597, %v3595
        %v3678 = vpack.c.bf16 %v3598, %v3596
        %v3679 = vpack.c.bf16 %v3601, %v3599
        %v3680 = vpack.c.bf16 %v3602, %v3600
        %v3681 = vpack.c.bf16 %v3605, %v3603
        %v3682 = vpack.c.bf16 %v3606, %v3604
        %v3683 = vpack.c.bf16 %v3609, %v3607
        %v3684 = vpack.c.bf16 %v3610, %v3608
        %v3685 = vpack.c.bf16 %v3613, %v3611
        %v3686 = vpack.c.bf16 %v3614, %v3612
        %v3687 = vpack.c.bf16 %v3617, %v3615
        %v3688 = vpack.c.bf16 %v3618, %v3616
        %v3689 = vpack.c.bf16 %v3621, %v3619
        %v3690 = vpack.c.bf16 %v3622, %v3620
        %v3691 = vpack.c.bf16 %v3625, %v3623
        %v3692 = vpack.c.bf16 %v3626, %v3624
        %v3693 = vpack.c.bf16 %v3629, %v3627
        %v3694 = vpack.c.bf16 %v3630, %v3628
        %v3695 = vld [vmem:[%s286] sm:$0xff]
        %v3696 = vld [vmem:[%s286 + $0x8] sm:$0xff]
        %v3697 = vld [vmem:[%s286 + $0x10] sm:$0xff]
        %v3698 = vld [vmem:[%s286 + $0x18] sm:$0xff]
        %v3699 = vld [vmem:[%s286 + $0x20] sm:$0xff]
        %v3700 = vld [vmem:[%s286 + $0x28] sm:$0xff]
        %v3701 = vld [vmem:[%s286 + $0x30] sm:$0xff]
        %v3702 = vld [vmem:[%s286 + $0x38] sm:$0xff]
        %v3703 = vld [vmem:[%s286 + $0x40] sm:$0xff]
        %v3704 = vld [vmem:[%s286 + $0x48] sm:$0xff]
        %v3705 = vld [vmem:[%s286 + $0x50] sm:$0xff]
        %v3706 = vld [vmem:[%s286 + $0x58] sm:$0xff]
        %v3707 = vld [vmem:[%s286 + $0x60] sm:$0xff]
        %v3708 = vld [vmem:[%s286 + $0x68] sm:$0xff]
        %v3709 = vld [vmem:[%s286 + $0x70] sm:$0xff]
        %v3710 = vld [vmem:[%s286 + $0x78] sm:$0xff]
        %v3711 = vld [vmem:[%s286 + $0x80] sm:$0xff]
        %v3712 = vld [vmem:[%s286 + $0x88] sm:$0xff]
        %v3713 = vld [vmem:[%s286 + $0x90] sm:$0xff]
        %v3714 = vld [vmem:[%s286 + $0x98] sm:$0xff]
        %v3715 = vld [vmem:[%s286 + $0xa0] sm:$0xff]
        %v3716 = vld [vmem:[%s286 + $0xa8] sm:$0xff]
        %v3717 = vld [vmem:[%s286 + $0xb0] sm:$0xff]
        %v3718 = vld [vmem:[%s286 + $0xb8] sm:$0xff]
        %v3719 = vld [vmem:[%s286 + $0xc0] sm:$0xff]
        %v3720 = vld [vmem:[%s286 + $0xc8] sm:$0xff]
        %v3721 = vld [vmem:[%s286 + $0xd0] sm:$0xff]
        %v3722 = vld [vmem:[%s286 + $0xd8] sm:$0xff]
        %v3723 = vld [vmem:[%s286 + $0xe0] sm:$0xff]
        %v3724 = vld [vmem:[%s286 + $0xe8] sm:$0xff]
        %v3725 = vld [vmem:[%s286 + $0xf0] sm:$0xff]
        %v3726 = vld [vmem:[%s286 + $0xf8] sm:$0xff]
        %v3727 = vld [vmem:[%s290] sm:$0x3]
        %v3729 = vperm.slane %v3727, 0
        %v3730 = vperm.slane %v3727, 1
        %v3765 = vunpack.c.l.b16 %v3695
        %v3766 = vunpack.c.h.b16 %v3695
        %v3767 = vunpack.c.l.b16 %v3696
        %v3768 = vunpack.c.h.b16 %v3696
        %v3769 = vunpack.c.l.b16 %v3697
        %v3770 = vunpack.c.h.b16 %v3697
        %v3771 = vunpack.c.l.b16 %v3698
        %v3772 = vunpack.c.h.b16 %v3698
        %v3773 = vunpack.c.l.b16 %v3699
        %v3774 = vunpack.c.h.b16 %v3699
        %v3775 = vunpack.c.l.b16 %v3700
        %v3776 = vunpack.c.h.b16 %v3700
        %v3777 = vunpack.c.l.b16 %v3701
        %v3778 = vunpack.c.h.b16 %v3701
        %v3779 = vunpack.c.l.b16 %v3702
        %v3780 = vunpack.c.h.b16 %v3702
        %v3781 = vunpack.c.l.b16 %v3703
        %v3782 = vunpack.c.h.b16 %v3703
        %v3783 = vunpack.c.l.b16 %v3704
        %v3784 = vunpack.c.h.b16 %v3704
        %v3785 = vunpack.c.l.b16 %v3705
        %v3786 = vunpack.c.h.b16 %v3705
        %v3787 = vunpack.c.l.b16 %v3706
        %v3788 = vunpack.c.h.b16 %v3706
        %v3789 = vunpack.c.l.b16 %v3707
        %v3790 = vunpack.c.h.b16 %v3707
        %v3791 = vunpack.c.l.b16 %v3708
        %v3792 = vunpack.c.h.b16 %v3708
        %v3793 = vunpack.c.l.b16 %v3709
        %v3794 = vunpack.c.h.b16 %v3709
        %v3795 = vunpack.c.l.b16 %v3710
        %v3796 = vunpack.c.h.b16 %v3710
        %v3797 = vunpack.c.l.b16 %v3711
        %v3798 = vunpack.c.h.b16 %v3711
        %v3799 = vunpack.c.l.b16 %v3712
        %v3800 = vunpack.c.h.b16 %v3712
        %v3801 = vunpack.c.l.b16 %v3713
        %v3802 = vunpack.c.h.b16 %v3713
        %v3803 = vunpack.c.l.b16 %v3714
        %v3804 = vunpack.c.h.b16 %v3714
        %v3805 = vunpack.c.l.b16 %v3715
        %v3806 = vunpack.c.h.b16 %v3715
        %v3807 = vunpack.c.l.b16 %v3716
        %v3808 = vunpack.c.h.b16 %v3716
        %v3809 = vunpack.c.l.b16 %v3717
        %v3810 = vunpack.c.h.b16 %v3717
        %v3811 = vunpack.c.l.b16 %v3718
        %v3812 = vunpack.c.h.b16 %v3718
        %v3813 = vunpack.c.l.b16 %v3719
        %v3814 = vunpack.c.h.b16 %v3719
        %v3815 = vunpack.c.l.b16 %v3720
        %v3816 = vunpack.c.h.b16 %v3720
        %v3817 = vunpack.c.l.b16 %v3721
        %v3818 = vunpack.c.h.b16 %v3721
        %v3819 = vunpack.c.l.b16 %v3722
        %v3820 = vunpack.c.h.b16 %v3722
        %v3821 = vunpack.c.l.b16 %v3723
        %v3822 = vunpack.c.h.b16 %v3723
        %v3823 = vunpack.c.l.b16 %v3724
        %v3824 = vunpack.c.h.b16 %v3724
        %v3825 = vunpack.c.l.b16 %v3725
        %v3826 = vunpack.c.h.b16 %v3725
        %v3827 = vunpack.c.l.b16 %v3726
        %v3828 = vunpack.c.h.b16 %v3726
        %v3829 = vpack.c.b16 %v3767, %v3765
        %v3830 = vpack.c.b16 %v3768, %v3766
        %v3831 = vpack.c.b16 %v3771, %v3769
        %v3832 = vpack.c.b16 %v3772, %v3770
        %v3833 = vpack.c.b16 %v3775, %v3773
        %v3834 = vpack.c.b16 %v3776, %v3774
        %v3835 = vpack.c.b16 %v3779, %v3777
        %v3836 = vpack.c.b16 %v3780, %v3778
        %v3837 = vpack.c.b16 %v3783, %v3781
        %v3838 = vpack.c.b16 %v3784, %v3782
        %v3839 = vpack.c.b16 %v3787, %v3785
        %v3840 = vpack.c.b16 %v3788, %v3786
        %v3841 = vpack.c.b16 %v3791, %v3789
        %v3842 = vpack.c.b16 %v3792, %v3790
        %v3843 = vpack.c.b16 %v3795, %v3793
        %v3844 = vpack.c.b16 %v3796, %v3794
        %v3845 = vpack.c.b16 %v3799, %v3797
        %v3846 = vpack.c.b16 %v3800, %v3798
        %v3847 = vpack.c.b16 %v3803, %v3801
        %v3848 = vpack.c.b16 %v3804, %v3802
        %v3849 = vpack.c.b16 %v3807, %v3805
        %v3850 = vpack.c.b16 %v3808, %v3806
        %v3851 = vpack.c.b16 %v3811, %v3809
        %v3852 = vpack.c.b16 %v3812, %v3810
        %v3853 = vpack.c.b16 %v3815, %v3813
        %v3854 = vpack.c.b16 %v3816, %v3814
        %v3855 = vpack.c.b16 %v3819, %v3817
        %v3856 = vpack.c.b16 %v3820, %v3818
        %v3857 = vpack.c.b16 %v3823, %v3821
        %v3858 = vpack.c.b16 %v3824, %v3822
        %v3859 = vpack.c.b16 %v3827, %v3825
        %v3860 = vpack.c.b16 %v3828, %v3826
        %3893 = vmatpush.bf16.msra.mxu0 %v3843
        %3894 = vmatpush.bf16.msra.mxu0 %v3841
        %3895 = vmatpush.bf16.msra.mxu0 %v3839
        %3896 = vmatpush.bf16.msra.mxu0 %v3837
        %3897 = vmatpush.bf16.msra.mxu0 %v3835
        %3898 = vmatpush.bf16.msra.mxu0 %v3833
        %3899 = vmatpush.bf16.msra.mxu0 %v3831
        %3900 = vmatpush.bf16.msra.mxu0 %v3829
        %3901 = vmatmul.bf16.gmra.mxu0 %v3631
        %v3902 = vpop.f32.mrf.mxu0
        %v3903 = vadd.f32 %v3729, %v3902
        %v3904 = vpop.f32.mrf.mxu0
        %v3905 = vadd.f32 %v3729, %v3904
        %3906 = vmatmul.bf16.gmra.mxu0 %v3633
        %v3907 = vpop.f32.mrf.mxu0
        %v3908 = vadd.f32 %v3729, %v3907
        %v3909 = vpop.f32.mrf.mxu0
        %v3910 = vadd.f32 %v3729, %v3909
        %3911 = vmatmul.bf16.gmra.mxu0 %v3635
        %v3912 = vpop.f32.mrf.mxu0
        %v3913 = vadd.f32 %v3729, %v3912
        %v3914 = vpop.f32.mrf.mxu0
        %v3915 = vadd.f32 %v3729, %v3914
        %3916 = vmatmul.bf16.gmra.mxu0 %v3637
        %v3917 = vpop.f32.mrf.mxu0
        %v3918 = vadd.f32 %v3729, %v3917
        %v3919 = vpop.f32.mrf.mxu0
        %v3920 = vadd.f32 %v3729, %v3919
        %3921 = vmatmul.bf16.gmra.mxu0 %v3639
        %v3922 = vpop.f32.mrf.mxu0
        %v3923 = vadd.f32 %v3729, %v3922
        %v3924 = vpop.f32.mrf.mxu0
        %v3925 = vadd.f32 %v3729, %v3924
        %3926 = vmatmul.bf16.gmra.mxu0 %v3641
        %v3927 = vpop.f32.mrf.mxu0
        %v3928 = vadd.f32 %v3729, %v3927
        %v3929 = vpop.f32.mrf.mxu0
        %v3930 = vadd.f32 %v3729, %v3929
        %3931 = vmatmul.bf16.gmra.mxu0 %v3643
        %v3932 = vpop.f32.mrf.mxu0
        %v3933 = vadd.f32 %v3729, %v3932
        %v3934 = vpop.f32.mrf.mxu0
        %v3935 = vadd.f32 %v3729, %v3934
        %3936 = vmatmul.bf16.gmra.mxu0 %v3645
        %v3937 = vpop.f32.mrf.mxu0
        %v3938 = vadd.f32 %v3729, %v3937
        %v3939 = vpop.f32.mrf.mxu0
        %v3940 = vadd.f32 %v3729, %v3939
        %3941 = vmatmul.bf16.gmra.mxu0 %v3647
        %v3942 = vpop.f32.mrf.mxu0
        %v3943 = vadd.f32 %v3729, %v3942
        %v3944 = vpop.f32.mrf.mxu0
        %v3945 = vadd.f32 %v3729, %v3944
        %3946 = vmatmul.bf16.gmra.mxu0 %v3649
        %v3947 = vpop.f32.mrf.mxu0
        %v3948 = vadd.f32 %v3729, %v3947
        %v3949 = vpop.f32.mrf.mxu0
        %v3950 = vadd.f32 %v3729, %v3949
        %3951 = vmatmul.bf16.gmra.mxu0 %v3651
        %v3952 = vpop.f32.mrf.mxu0
        %v3953 = vadd.f32 %v3729, %v3952
        %v3954 = vpop.f32.mrf.mxu0
        %v3955 = vadd.f32 %v3729, %v3954
        %3956 = vmatmul.bf16.gmra.mxu0 %v3653
        %v3957 = vpop.f32.mrf.mxu0
        %v3958 = vadd.f32 %v3729, %v3957
        %v3959 = vpop.f32.mrf.mxu0
        %v3960 = vadd.f32 %v3729, %v3959
        %3961 = vmatmul.bf16.gmra.mxu0 %v3655
        %v3962 = vpop.f32.mrf.mxu0
        %v3963 = vadd.f32 %v3729, %v3962
        %v3964 = vpop.f32.mrf.mxu0
        %v3965 = vadd.f32 %v3729, %v3964
        %3966 = vmatmul.bf16.gmra.mxu0 %v3657
        %v3967 = vpop.f32.mrf.mxu0
        %v3968 = vadd.f32 %v3729, %v3967
        %v3969 = vpop.f32.mrf.mxu0
        %v3970 = vadd.f32 %v3729, %v3969
        %3971 = vmatmul.bf16.gmra.mxu0 %v3659
        %v3972 = vpop.f32.mrf.mxu0
        %v3973 = vadd.f32 %v3729, %v3972
        %v3974 = vpop.f32.mrf.mxu0
        %v3975 = vadd.f32 %v3729, %v3974
        %3976 = vmatmul.bf16.gmra.mxu0 %v3661
        %v3977 = vpop.f32.mrf.mxu0
        %v3978 = vadd.f32 %v3729, %v3977
        %v3979 = vpop.f32.mrf.mxu0
        %v3980 = vadd.f32 %v3729, %v3979
        %3981 = vmatmul.bf16.gmra.mxu0 %v3663
        %v3982 = vpop.f32.mrf.mxu0
        %v3983 = vadd.f32 %v3729, %v3982
        %v3984 = vpop.f32.mrf.mxu0
        %v3985 = vadd.f32 %v3729, %v3984
        %3986 = vmatmul.bf16.gmra.mxu0 %v3665
        %v3987 = vpop.f32.mrf.mxu0
        %v3988 = vadd.f32 %v3729, %v3987
        %v3989 = vpop.f32.mrf.mxu0
        %v3990 = vadd.f32 %v3729, %v3989
        %3991 = vmatmul.bf16.gmra.mxu0 %v3667
        %v3992 = vpop.f32.mrf.mxu0
        %v3993 = vadd.f32 %v3729, %v3992
        %v3994 = vpop.f32.mrf.mxu0
        %v3995 = vadd.f32 %v3729, %v3994
        %3996 = vmatmul.bf16.gmra.mxu0 %v3669
        %v3997 = vpop.f32.mrf.mxu0
        %v3998 = vadd.f32 %v3729, %v3997
        %v3999 = vpop.f32.mrf.mxu0
        %v4000 = vadd.f32 %v3729, %v3999
        %4001 = vmatmul.bf16.gmra.mxu0 %v3671
        %v4002 = vpop.f32.mrf.mxu0
        %v4003 = vadd.f32 %v3729, %v4002
        %v4004 = vpop.f32.mrf.mxu0
        %v4005 = vadd.f32 %v3729, %v4004
        %4006 = vmatmul.bf16.gmra.mxu0 %v3673
        %v4007 = vpop.f32.mrf.mxu0
        %v4008 = vadd.f32 %v3729, %v4007
        %v4009 = vpop.f32.mrf.mxu0
        %v4010 = vadd.f32 %v3729, %v4009
        %4011 = vmatmul.bf16.gmra.mxu0 %v3675
        %v4012 = vpop.f32.mrf.mxu0
        %v4013 = vadd.f32 %v3729, %v4012
        %v4014 = vpop.f32.mrf.mxu0
        %v4015 = vadd.f32 %v3729, %v4014
        %4016 = vmatmul.bf16.gmra.mxu0 %v3677
        %v4017 = vpop.f32.mrf.mxu0
        %v4018 = vadd.f32 %v3729, %v4017
        %v4019 = vpop.f32.mrf.mxu0
        %v4020 = vadd.f32 %v3729, %v4019
        %4021 = vmatmul.bf16.gmra.mxu0 %v3679
        %v4022 = vpop.f32.mrf.mxu0
        %v4023 = vadd.f32 %v3729, %v4022
        %v4024 = vpop.f32.mrf.mxu0
        %v4025 = vadd.f32 %v3729, %v4024
        %4026 = vmatmul.bf16.gmra.mxu0 %v3681
        %v4027 = vpop.f32.mrf.mxu0
        %v4028 = vadd.f32 %v3729, %v4027
        %v4029 = vpop.f32.mrf.mxu0
        %v4030 = vadd.f32 %v3729, %v4029
        %4031 = vmatmul.bf16.gmra.mxu0 %v3683
        %v4032 = vpop.f32.mrf.mxu0
        %v4033 = vadd.f32 %v3729, %v4032
        %v4034 = vpop.f32.mrf.mxu0
        %v4035 = vadd.f32 %v3729, %v4034
        %4036 = vmatmul.bf16.gmra.mxu0 %v3685
        %v4037 = vpop.f32.mrf.mxu0
        %v4038 = vadd.f32 %v3729, %v4037
        %v4039 = vpop.f32.mrf.mxu0
        %v4040 = vadd.f32 %v3729, %v4039
        %4041 = vmatmul.bf16.gmra.mxu0 %v3687
        %v4042 = vpop.f32.mrf.mxu0
        %v4043 = vadd.f32 %v3729, %v4042
        %v4044 = vpop.f32.mrf.mxu0
        %v4045 = vadd.f32 %v3729, %v4044
        %4046 = vmatmul.bf16.gmra.mxu0 %v3689
        %v4047 = vpop.f32.mrf.mxu0
        %v4048 = vadd.f32 %v3729, %v4047
        %v4049 = vpop.f32.mrf.mxu0
        %v4050 = vadd.f32 %v3729, %v4049
        %4051 = vmatmul.bf16.gmra.mxu0 %v3691
        %v4052 = vpop.f32.mrf.mxu0
        %v4053 = vadd.f32 %v3729, %v4052
        %v4054 = vpop.f32.mrf.mxu0
        %v4055 = vadd.f32 %v3729, %v4054
        %4056 = vmatmul.bf16.gmra.mxu0 %v3693
        %v4057 = vpop.f32.mrf.mxu0
        %v4058 = vadd.f32 %v3729, %v4057
        %v4059 = vpop.f32.mrf.mxu0
        %v4060 = vadd.f32 %v3729, %v4059
        %4061 = vdwg.mxu0
        %4062 = vmatpush.bf16.msra.mxu0 %v3859
        %4063 = vmatpush.bf16.msra.mxu0 %v3857
        %4064 = vmatpush.bf16.msra.mxu0 %v3855
        %4065 = vmatpush.bf16.msra.mxu0 %v3853
        %4066 = vmatpush.bf16.msra.mxu0 %v3851
        %4067 = vmatpush.bf16.msra.mxu0 %v3849
        %4068 = vmatpush.bf16.msra.mxu0 %v3847
        %4069 = vmatpush.bf16.msra.mxu0 %v3845
        %4070 = vmatmul.bf16.gmra.mxu0 %v3632
        %v4071 = vpop.f32.mrf.mxu0
        %v4072 = vadd.f32 %v3903, %v4071
        %v4073 = vpop.f32.mrf.mxu0
        %v4074 = vadd.f32 %v3905, %v4073
        %4075 = vmatmul.bf16.gmra.mxu0 %v3634
        %v4076 = vpop.f32.mrf.mxu0
        %v4077 = vadd.f32 %v3908, %v4076
        %v4078 = vpop.f32.mrf.mxu0
        %v4079 = vadd.f32 %v3910, %v4078
        %4080 = vmatmul.bf16.gmra.mxu0 %v3636
        %v4081 = vpop.f32.mrf.mxu0
        %v4082 = vadd.f32 %v3913, %v4081
        %v4083 = vpop.f32.mrf.mxu0
        %v4084 = vadd.f32 %v3915, %v4083
        %4085 = vmatmul.bf16.gmra.mxu0 %v3638
        %v4086 = vpop.f32.mrf.mxu0
        %v4087 = vadd.f32 %v3918, %v4086
        %v4088 = vpop.f32.mrf.mxu0
        %v4089 = vadd.f32 %v3920, %v4088
        %4090 = vmatmul.bf16.gmra.mxu0 %v3640
        %v4091 = vpop.f32.mrf.mxu0
        %v4092 = vadd.f32 %v3923, %v4091
        %v4093 = vpop.f32.mrf.mxu0
        %v4094 = vadd.f32 %v3925, %v4093
        %4095 = vmatmul.bf16.gmra.mxu0 %v3642
        %v4096 = vpop.f32.mrf.mxu0
        %v4097 = vadd.f32 %v3928, %v4096
        %v4098 = vpop.f32.mrf.mxu0
        %v4099 = vadd.f32 %v3930, %v4098
        %4100 = vmatmul.bf16.gmra.mxu0 %v3644
        %v4101 = vpop.f32.mrf.mxu0
        %v4102 = vadd.f32 %v3933, %v4101
        %v4103 = vpop.f32.mrf.mxu0
        %v4104 = vadd.f32 %v3935, %v4103
        %4105 = vmatmul.bf16.gmra.mxu0 %v3646
        %v4106 = vpop.f32.mrf.mxu0
        %v4107 = vadd.f32 %v3938, %v4106
        %v4108 = vpop.f32.mrf.mxu0
        %v4109 = vadd.f32 %v3940, %v4108
        %4110 = vmatmul.bf16.gmra.mxu0 %v3648
        %v4111 = vpop.f32.mrf.mxu0
        %v4112 = vadd.f32 %v3943, %v4111
        %v4113 = vpop.f32.mrf.mxu0
        %v4114 = vadd.f32 %v3945, %v4113
        %4115 = vmatmul.bf16.gmra.mxu0 %v3650
        %v4116 = vpop.f32.mrf.mxu0
        %v4117 = vadd.f32 %v3948, %v4116
        %v4118 = vpop.f32.mrf.mxu0
        %v4119 = vadd.f32 %v3950, %v4118
        %4120 = vmatmul.bf16.gmra.mxu0 %v3652
        %v4121 = vpop.f32.mrf.mxu0
        %v4122 = vadd.f32 %v3953, %v4121
        %v4123 = vpop.f32.mrf.mxu0
        %v4124 = vadd.f32 %v3955, %v4123
        %4125 = vmatmul.bf16.gmra.mxu0 %v3654
        %v4126 = vpop.f32.mrf.mxu0
        %v4127 = vadd.f32 %v3958, %v4126
        %v4128 = vpop.f32.mrf.mxu0
        %v4129 = vadd.f32 %v3960, %v4128
        %4130 = vmatmul.bf16.gmra.mxu0 %v3656
        %v4131 = vpop.f32.mrf.mxu0
        %v4132 = vadd.f32 %v3963, %v4131
        %v4133 = vpop.f32.mrf.mxu0
        %v4134 = vadd.f32 %v3965, %v4133
        %4135 = vmatmul.bf16.gmra.mxu0 %v3658
        %v4136 = vpop.f32.mrf.mxu0
        %v4137 = vadd.f32 %v3968, %v4136
        %v4138 = vpop.f32.mrf.mxu0
        %v4139 = vadd.f32 %v3970, %v4138
        %4140 = vmatmul.bf16.gmra.mxu0 %v3660
        %v4141 = vpop.f32.mrf.mxu0
        %v4142 = vadd.f32 %v3973, %v4141
        %v4143 = vpop.f32.mrf.mxu0
        %v4144 = vadd.f32 %v3975, %v4143
        %4145 = vmatmul.bf16.gmra.mxu0 %v3662
        %v4146 = vpop.f32.mrf.mxu0
        %v4147 = vadd.f32 %v3978, %v4146
        %v4148 = vpop.f32.mrf.mxu0
        %v4149 = vadd.f32 %v3980, %v4148
        %4150 = vmatmul.bf16.gmra.mxu0 %v3664
        %v4151 = vpop.f32.mrf.mxu0
        %v4152 = vadd.f32 %v3983, %v4151
        %v4153 = vpop.f32.mrf.mxu0
        %v4154 = vadd.f32 %v3985, %v4153
        %4155 = vmatmul.bf16.gmra.mxu0 %v3666
        %v4156 = vpop.f32.mrf.mxu0
        %v4157 = vadd.f32 %v3988, %v4156
        %v4158 = vpop.f32.mrf.mxu0
        %v4159 = vadd.f32 %v3990, %v4158
        %4160 = vmatmul.bf16.gmra.mxu0 %v3668
        %v4161 = vpop.f32.mrf.mxu0
        %v4162 = vadd.f32 %v3993, %v4161
        %v4163 = vpop.f32.mrf.mxu0
        %v4164 = vadd.f32 %v3995, %v4163
        %4165 = vmatmul.bf16.gmra.mxu0 %v3670
        %v4166 = vpop.f32.mrf.mxu0
        %v4167 = vadd.f32 %v3998, %v4166
        %v4168 = vpop.f32.mrf.mxu0
        %v4169 = vadd.f32 %v4000, %v4168
        %4170 = vmatmul.bf16.gmra.mxu0 %v3672
        %v4171 = vpop.f32.mrf.mxu0
        %v4172 = vadd.f32 %v4003, %v4171
        %v4173 = vpop.f32.mrf.mxu0
        %v4174 = vadd.f32 %v4005, %v4173
        %4175 = vmatmul.bf16.gmra.mxu0 %v3674
        %v4176 = vpop.f32.mrf.mxu0
        %v4177 = vadd.f32 %v4008, %v4176
        %v4178 = vpop.f32.mrf.mxu0
        %v4179 = vadd.f32 %v4010, %v4178
        %4180 = vmatmul.bf16.gmra.mxu0 %v3676
        %v4181 = vpop.f32.mrf.mxu0
        %v4182 = vadd.f32 %v4013, %v4181
        %v4183 = vpop.f32.mrf.mxu0
        %v4184 = vadd.f32 %v4015, %v4183
        %4185 = vmatmul.bf16.gmra.mxu0 %v3678
        %v4186 = vpop.f32.mrf.mxu0
        %v4187 = vadd.f32 %v4018, %v4186
        %v4188 = vpop.f32.mrf.mxu0
        %v4189 = vadd.f32 %v4020, %v4188
        %4190 = vmatmul.bf16.gmra.mxu0 %v3680
        %v4191 = vpop.f32.mrf.mxu0
        %v4192 = vadd.f32 %v4023, %v4191
        %v4193 = vpop.f32.mrf.mxu0
        %v4194 = vadd.f32 %v4025, %v4193
        %4195 = vmatmul.bf16.gmra.mxu0 %v3682
        %v4196 = vpop.f32.mrf.mxu0
        %v4197 = vadd.f32 %v4028, %v4196
        %v4198 = vpop.f32.mrf.mxu0
        %v4199 = vadd.f32 %v4030, %v4198
        %4200 = vmatmul.bf16.gmra.mxu0 %v3684
        %v4201 = vpop.f32.mrf.mxu0
        %v4202 = vadd.f32 %v4033, %v4201
        %v4203 = vpop.f32.mrf.mxu0
        %v4204 = vadd.f32 %v4035, %v4203
        %4205 = vmatmul.bf16.gmra.mxu0 %v3686
        %v4206 = vpop.f32.mrf.mxu0
        %v4207 = vadd.f32 %v4038, %v4206
        %v4208 = vpop.f32.mrf.mxu0
        %v4209 = vadd.f32 %v4040, %v4208
        %4210 = vmatmul.bf16.gmra.mxu0 %v3688
        %v4211 = vpop.f32.mrf.mxu0
        %v4212 = vadd.f32 %v4043, %v4211
        %v4213 = vpop.f32.mrf.mxu0
        %v4214 = vadd.f32 %v4045, %v4213
        %4215 = vmatmul.bf16.gmra.mxu0 %v3690
        %v4216 = vpop.f32.mrf.mxu0
        %v4217 = vadd.f32 %v4048, %v4216
        %v4218 = vpop.f32.mrf.mxu0
        %v4219 = vadd.f32 %v4050, %v4218
        %4220 = vmatmul.bf16.gmra.mxu0 %v3692
        %v4221 = vpop.f32.mrf.mxu0
        %v4222 = vadd.f32 %v4053, %v4221
        %v4223 = vpop.f32.mrf.mxu0
        %v4224 = vadd.f32 %v4055, %v4223
        %4225 = vmatmul.bf16.gmra.mxu0 %v3694
        %v4226 = vpop.f32.mrf.mxu0
        %v4227 = vadd.f32 %v4058, %v4226
        %v4228 = vpop.f32.mrf.mxu0
        %v4229 = vadd.f32 %v4060, %v4228
        %4230 = vdwg.mxu0
        %4231 = vmatpush.bf16.msra.mxu0 %v3844
        %4232 = vmatpush.bf16.msra.mxu0 %v3842
        %4233 = vmatpush.bf16.msra.mxu0 %v3840
        %4234 = vmatpush.bf16.msra.mxu0 %v3838
        %4235 = vmatpush.bf16.msra.mxu0 %v3836
        %4236 = vmatpush.bf16.msra.mxu0 %v3834
        %4237 = vmatpush.bf16.msra.mxu0 %v3832
        %4238 = vmatpush.bf16.msra.mxu0 %v3830
        %4239 = vmatmul.bf16.gmra.mxu0 %v3631
        %v4240 = vpop.f32.mrf.mxu0
        %v4241 = vadd.f32 %v3730, %v4240
        %v4242 = vpop.f32.mrf.mxu0
        %v4243 = vadd.f32 %v3730, %v4242
        %4244 = vmatmul.bf16.gmra.mxu0 %v3633
        %v4245 = vpop.f32.mrf.mxu0
        %v4246 = vadd.f32 %v3730, %v4245
        %v4247 = vpop.f32.mrf.mxu0
        %v4248 = vadd.f32 %v3730, %v4247
        %4249 = vmatmul.bf16.gmra.mxu0 %v3635
        %v4250 = vpop.f32.mrf.mxu0
        %v4251 = vadd.f32 %v3730, %v4250
        %v4252 = vpop.f32.mrf.mxu0
        %v4253 = vadd.f32 %v3730, %v4252
        %4254 = vmatmul.bf16.gmra.mxu0 %v3637
        %v4255 = vpop.f32.mrf.mxu0
        %v4256 = vadd.f32 %v3730, %v4255
        %v4257 = vpop.f32.mrf.mxu0
        %v4258 = vadd.f32 %v3730, %v4257
        %4259 = vmatmul.bf16.gmra.mxu0 %v3639
        %v4260 = vpop.f32.mrf.mxu0
        %v4261 = vadd.f32 %v3730, %v4260
        %v4262 = vpop.f32.mrf.mxu0
        %v4263 = vadd.f32 %v3730, %v4262
        %4264 = vmatmul.bf16.gmra.mxu0 %v3641
        %v4265 = vpop.f32.mrf.mxu0
        %v4266 = vadd.f32 %v3730, %v4265
        %v4267 = vpop.f32.mrf.mxu0
        %v4268 = vadd.f32 %v3730, %v4267
        %4269 = vmatmul.bf16.gmra.mxu0 %v3643
        %v4270 = vpop.f32.mrf.mxu0
        %v4271 = vadd.f32 %v3730, %v4270
        %v4272 = vpop.f32.mrf.mxu0
        %v4273 = vadd.f32 %v3730, %v4272
        %4274 = vmatmul.bf16.gmra.mxu0 %v3645
        %v4275 = vpop.f32.mrf.mxu0
        %v4276 = vadd.f32 %v3730, %v4275
        %v4277 = vpop.f32.mrf.mxu0
        %v4278 = vadd.f32 %v3730, %v4277
        %4279 = vmatmul.bf16.gmra.mxu0 %v3647
        %v4280 = vpop.f32.mrf.mxu0
        %v4281 = vadd.f32 %v3730, %v4280
        %v4282 = vpop.f32.mrf.mxu0
        %v4283 = vadd.f32 %v3730, %v4282
        %4284 = vmatmul.bf16.gmra.mxu0 %v3649
        %v4285 = vpop.f32.mrf.mxu0
        %v4286 = vadd.f32 %v3730, %v4285
        %v4287 = vpop.f32.mrf.mxu0
        %v4288 = vadd.f32 %v3730, %v4287
        %4289 = vmatmul.bf16.gmra.mxu0 %v3651
        %v4290 = vpop.f32.mrf.mxu0
        %v4291 = vadd.f32 %v3730, %v4290
        %v4292 = vpop.f32.mrf.mxu0
        %v4293 = vadd.f32 %v3730, %v4292
        %4294 = vmatmul.bf16.gmra.mxu0 %v3653
        %v4295 = vpop.f32.mrf.mxu0
        %v4296 = vadd.f32 %v3730, %v4295
        %v4297 = vpop.f32.mrf.mxu0
        %v4298 = vadd.f32 %v3730, %v4297
        %4299 = vmatmul.bf16.gmra.mxu0 %v3655
        %v4300 = vpop.f32.mrf.mxu0
        %v4301 = vadd.f32 %v3730, %v4300
        %v4302 = vpop.f32.mrf.mxu0
        %v4303 = vadd.f32 %v3730, %v4302
        %4304 = vmatmul.bf16.gmra.mxu0 %v3657
        %v4305 = vpop.f32.mrf.mxu0
        %v4306 = vadd.f32 %v3730, %v4305
        %v4307 = vpop.f32.mrf.mxu0
        %v4308 = vadd.f32 %v3730, %v4307
        %4309 = vmatmul.bf16.gmra.mxu0 %v3659
        %v4310 = vpop.f32.mrf.mxu0
        %v4311 = vadd.f32 %v3730, %v4310
        %v4312 = vpop.f32.mrf.mxu0
        %v4313 = vadd.f32 %v3730, %v4312
        %4314 = vmatmul.bf16.gmra.mxu0 %v3661
        %v4315 = vpop.f32.mrf.mxu0
        %v4316 = vadd.f32 %v3730, %v4315
        %v4317 = vpop.f32.mrf.mxu0
        %v4318 = vadd.f32 %v3730, %v4317
        %4319 = vmatmul.bf16.gmra.mxu0 %v3663
        %v4320 = vpop.f32.mrf.mxu0
        %v4321 = vadd.f32 %v3730, %v4320
        %v4322 = vpop.f32.mrf.mxu0
        %v4323 = vadd.f32 %v3730, %v4322
        %4324 = vmatmul.bf16.gmra.mxu0 %v3665
        %v4325 = vpop.f32.mrf.mxu0
        %v4326 = vadd.f32 %v3730, %v4325
        %v4327 = vpop.f32.mrf.mxu0
        %v4328 = vadd.f32 %v3730, %v4327
        %4329 = vmatmul.bf16.gmra.mxu0 %v3667
        %v4330 = vpop.f32.mrf.mxu0
        %v4331 = vadd.f32 %v3730, %v4330
        %v4332 = vpop.f32.mrf.mxu0
        %v4333 = vadd.f32 %v3730, %v4332
        %4334 = vmatmul.bf16.gmra.mxu0 %v3669
        %v4335 = vpop.f32.mrf.mxu0
        %v4336 = vadd.f32 %v3730, %v4335
        %v4337 = vpop.f32.mrf.mxu0
        %v4338 = vadd.f32 %v3730, %v4337
        %4339 = vmatmul.bf16.gmra.mxu0 %v3671
        %v4340 = vpop.f32.mrf.mxu0
        %v4341 = vadd.f32 %v3730, %v4340
        %v4342 = vpop.f32.mrf.mxu0
        %v4343 = vadd.f32 %v3730, %v4342
        %4344 = vmatmul.bf16.gmra.mxu0 %v3673
        %v4345 = vpop.f32.mrf.mxu0
        %v4346 = vadd.f32 %v3730, %v4345
        %v4347 = vpop.f32.mrf.mxu0
        %v4348 = vadd.f32 %v3730, %v4347
        %4349 = vmatmul.bf16.gmra.mxu0 %v3675
        %v4350 = vpop.f32.mrf.mxu0
        %v4351 = vadd.f32 %v3730, %v4350
        %v4352 = vpop.f32.mrf.mxu0
        %v4353 = vadd.f32 %v3730, %v4352
        %4354 = vmatmul.bf16.gmra.mxu0 %v3677
        %v4355 = vpop.f32.mrf.mxu0
        %v4356 = vadd.f32 %v3730, %v4355
        %v4357 = vpop.f32.mrf.mxu0
        %v4358 = vadd.f32 %v3730, %v4357
        %4359 = vmatmul.bf16.gmra.mxu0 %v3679
        %v4360 = vpop.f32.mrf.mxu0
        %v4361 = vadd.f32 %v3730, %v4360
        %v4362 = vpop.f32.mrf.mxu0
        %v4363 = vadd.f32 %v3730, %v4362
        %4364 = vmatmul.bf16.gmra.mxu0 %v3681
        %v4365 = vpop.f32.mrf.mxu0
        %v4366 = vadd.f32 %v3730, %v4365
        %v4367 = vpop.f32.mrf.mxu0
        %v4368 = vadd.f32 %v3730, %v4367
        %4369 = vmatmul.bf16.gmra.mxu0 %v3683
        %v4370 = vpop.f32.mrf.mxu0
        %v4371 = vadd.f32 %v3730, %v4370
        %v4372 = vpop.f32.mrf.mxu0
        %v4373 = vadd.f32 %v3730, %v4372
        %4374 = vmatmul.bf16.gmra.mxu0 %v3685
        %v4375 = vpop.f32.mrf.mxu0
        %v4376 = vadd.f32 %v3730, %v4375
        %v4377 = vpop.f32.mrf.mxu0
        %v4378 = vadd.f32 %v3730, %v4377
        %4379 = vmatmul.bf16.gmra.mxu0 %v3687
        %v4380 = vpop.f32.mrf.mxu0
        %v4381 = vadd.f32 %v3730, %v4380
        %v4382 = vpop.f32.mrf.mxu0
        %v4383 = vadd.f32 %v3730, %v4382
        %4384 = vmatmul.bf16.gmra.mxu0 %v3689
        %v4385 = vpop.f32.mrf.mxu0
        %v4386 = vadd.f32 %v3730, %v4385
        %v4387 = vpop.f32.mrf.mxu0
        %v4388 = vadd.f32 %v3730, %v4387
        %4389 = vmatmul.bf16.gmra.mxu0 %v3691
        %v4390 = vpop.f32.mrf.mxu0
        %v4391 = vadd.f32 %v3730, %v4390
        %v4392 = vpop.f32.mrf.mxu0
        %v4393 = vadd.f32 %v3730, %v4392
        %4394 = vmatmul.bf16.gmra.mxu0 %v3693
        %v4395 = vpop.f32.mrf.mxu0
        %v4396 = vadd.f32 %v3730, %v4395
        %v4397 = vpop.f32.mrf.mxu0
        %v4398 = vadd.f32 %v3730, %v4397
        %4399 = vdwg.mxu0
        %4400 = vmatpush.bf16.msra.mxu0 %v3860
        %4401 = vmatpush.bf16.msra.mxu0 %v3858
        %4402 = vmatpush.bf16.msra.mxu0 %v3856
        %4403 = vmatpush.bf16.msra.mxu0 %v3854
        %4404 = vmatpush.bf16.msra.mxu0 %v3852
        %4405 = vmatpush.bf16.msra.mxu0 %v3850
        %4406 = vmatpush.bf16.msra.mxu0 %v3848
        %4407 = vmatpush.bf16.msra.mxu0 %v3846
        %4408 = vmatmul.bf16.gmra.mxu0 %v3632
        %v4409 = vpop.f32.mrf.mxu0
        %v4410 = vadd.f32 %v4241, %v4409
        %v4411 = vpop.f32.mrf.mxu0
        %v4412 = vadd.f32 %v4243, %v4411
        %4413 = vmatmul.bf16.gmra.mxu0 %v3634
        %v4414 = vpop.f32.mrf.mxu0
        %v4415 = vadd.f32 %v4246, %v4414
        %v4416 = vpop.f32.mrf.mxu0
        %v4417 = vadd.f32 %v4248, %v4416
        %4418 = vmatmul.bf16.gmra.mxu0 %v3636
        %v4419 = vpop.f32.mrf.mxu0
        %v4420 = vadd.f32 %v4251, %v4419
        %v4421 = vpop.f32.mrf.mxu0
        %v4422 = vadd.f32 %v4253, %v4421
        %4423 = vmatmul.bf16.gmra.mxu0 %v3638
        %v4424 = vpop.f32.mrf.mxu0
        %v4425 = vadd.f32 %v4256, %v4424
        %v4426 = vpop.f32.mrf.mxu0
        %v4427 = vadd.f32 %v4258, %v4426
        %4428 = vmatmul.bf16.gmra.mxu0 %v3640
        %v4429 = vpop.f32.mrf.mxu0
        %v4430 = vadd.f32 %v4261, %v4429
        %v4431 = vpop.f32.mrf.mxu0
        %v4432 = vadd.f32 %v4263, %v4431
        %4433 = vmatmul.bf16.gmra.mxu0 %v3642
        %v4434 = vpop.f32.mrf.mxu0
        %v4435 = vadd.f32 %v4266, %v4434
        %v4436 = vpop.f32.mrf.mxu0
        %v4437 = vadd.f32 %v4268, %v4436
        %4438 = vmatmul.bf16.gmra.mxu0 %v3644
        %v4439 = vpop.f32.mrf.mxu0
        %v4440 = vadd.f32 %v4271, %v4439
        %v4441 = vpop.f32.mrf.mxu0
        %v4442 = vadd.f32 %v4273, %v4441
        %4443 = vmatmul.bf16.gmra.mxu0 %v3646
        %v4444 = vpop.f32.mrf.mxu0
        %v4445 = vadd.f32 %v4276, %v4444
        %v4446 = vpop.f32.mrf.mxu0
        %v4447 = vadd.f32 %v4278, %v4446
        %4448 = vmatmul.bf16.gmra.mxu0 %v3648
        %v4449 = vpop.f32.mrf.mxu0
        %v4450 = vadd.f32 %v4281, %v4449
        %v4451 = vpop.f32.mrf.mxu0
        %v4452 = vadd.f32 %v4283, %v4451
        %4453 = vmatmul.bf16.gmra.mxu0 %v3650
        %v4454 = vpop.f32.mrf.mxu0
        %v4455 = vadd.f32 %v4286, %v4454
        %v4456 = vpop.f32.mrf.mxu0
        %v4457 = vadd.f32 %v4288, %v4456
        %4458 = vmatmul.bf16.gmra.mxu0 %v3652
        %v4459 = vpop.f32.mrf.mxu0
        %v4460 = vadd.f32 %v4291, %v4459
        %v4461 = vpop.f32.mrf.mxu0
        %v4462 = vadd.f32 %v4293, %v4461
        %4463 = vmatmul.bf16.gmra.mxu0 %v3654
        %v4464 = vpop.f32.mrf.mxu0
        %v4465 = vadd.f32 %v4296, %v4464
        %v4466 = vpop.f32.mrf.mxu0
        %v4467 = vadd.f32 %v4298, %v4466
        %4468 = vmatmul.bf16.gmra.mxu0 %v3656
        %v4469 = vpop.f32.mrf.mxu0
        %v4470 = vadd.f32 %v4301, %v4469
        %v4471 = vpop.f32.mrf.mxu0
        %v4472 = vadd.f32 %v4303, %v4471
        %4473 = vmatmul.bf16.gmra.mxu0 %v3658
        %v4474 = vpop.f32.mrf.mxu0
        %v4475 = vadd.f32 %v4306, %v4474
        %v4476 = vpop.f32.mrf.mxu0
        %v4477 = vadd.f32 %v4308, %v4476
        %4478 = vmatmul.bf16.gmra.mxu0 %v3660
        %v4479 = vpop.f32.mrf.mxu0
        %v4480 = vadd.f32 %v4311, %v4479
        %v4481 = vpop.f32.mrf.mxu0
        %v4482 = vadd.f32 %v4313, %v4481
        %4483 = vmatmul.bf16.gmra.mxu0 %v3662
        %v4484 = vpop.f32.mrf.mxu0
        %v4485 = vadd.f32 %v4316, %v4484
        %v4486 = vpop.f32.mrf.mxu0
        %v4487 = vadd.f32 %v4318, %v4486
        %4488 = vmatmul.bf16.gmra.mxu0 %v3664
        %v4489 = vpop.f32.mrf.mxu0
        %v4490 = vadd.f32 %v4321, %v4489
        %v4491 = vpop.f32.mrf.mxu0
        %v4492 = vadd.f32 %v4323, %v4491
        %4493 = vmatmul.bf16.gmra.mxu0 %v3666
        %v4494 = vpop.f32.mrf.mxu0
        %v4495 = vadd.f32 %v4326, %v4494
        %v4496 = vpop.f32.mrf.mxu0
        %v4497 = vadd.f32 %v4328, %v4496
        %4498 = vmatmul.bf16.gmra.mxu0 %v3668
        %v4499 = vpop.f32.mrf.mxu0
        %v4500 = vadd.f32 %v4331, %v4499
        %v4501 = vpop.f32.mrf.mxu0
        %v4502 = vadd.f32 %v4333, %v4501
        %4503 = vmatmul.bf16.gmra.mxu0 %v3670
        %v4504 = vpop.f32.mrf.mxu0
        %v4505 = vadd.f32 %v4336, %v4504
        %v4506 = vpop.f32.mrf.mxu0
        %v4507 = vadd.f32 %v4338, %v4506
        %4508 = vmatmul.bf16.gmra.mxu0 %v3672
        %v4509 = vpop.f32.mrf.mxu0
        %v4510 = vadd.f32 %v4341, %v4509
        %v4511 = vpop.f32.mrf.mxu0
        %v4512 = vadd.f32 %v4343, %v4511
        %4513 = vmatmul.bf16.gmra.mxu0 %v3674
        %v4514 = vpop.f32.mrf.mxu0
        %v4515 = vadd.f32 %v4346, %v4514
        %v4516 = vpop.f32.mrf.mxu0
        %v4517 = vadd.f32 %v4348, %v4516
        %4518 = vmatmul.bf16.gmra.mxu0 %v3676
        %v4519 = vpop.f32.mrf.mxu0
        %v4520 = vadd.f32 %v4351, %v4519
        %v4521 = vpop.f32.mrf.mxu0
        %v4522 = vadd.f32 %v4353, %v4521
        %4523 = vmatmul.bf16.gmra.mxu0 %v3678
        %v4524 = vpop.f32.mrf.mxu0
        %v4525 = vadd.f32 %v4356, %v4524
        %v4526 = vpop.f32.mrf.mxu0
        %v4527 = vadd.f32 %v4358, %v4526
        %4528 = vmatmul.bf16.gmra.mxu0 %v3680
        %v4529 = vpop.f32.mrf.mxu0
        %v4530 = vadd.f32 %v4361, %v4529
        %v4531 = vpop.f32.mrf.mxu0
        %v4532 = vadd.f32 %v4363, %v4531
        %4533 = vmatmul.bf16.gmra.mxu0 %v3682
        %v4534 = vpop.f32.mrf.mxu0
        %v4535 = vadd.f32 %v4366, %v4534
        %v4536 = vpop.f32.mrf.mxu0
        %v4537 = vadd.f32 %v4368, %v4536
        %4538 = vmatmul.bf16.gmra.mxu0 %v3684
        %v4539 = vpop.f32.mrf.mxu0
        %v4540 = vadd.f32 %v4371, %v4539
        %v4541 = vpop.f32.mrf.mxu0
        %v4542 = vadd.f32 %v4373, %v4541
        %4543 = vmatmul.bf16.gmra.mxu0 %v3686
        %v4544 = vpop.f32.mrf.mxu0
        %v4545 = vadd.f32 %v4376, %v4544
        %v4546 = vpop.f32.mrf.mxu0
        %v4547 = vadd.f32 %v4378, %v4546
        %4548 = vmatmul.bf16.gmra.mxu0 %v3688
        %v4549 = vpop.f32.mrf.mxu0
        %v4550 = vadd.f32 %v4381, %v4549
        %v4551 = vpop.f32.mrf.mxu0
        %v4552 = vadd.f32 %v4383, %v4551
        %4553 = vmatmul.bf16.gmra.mxu0 %v3690
        %v4554 = vpop.f32.mrf.mxu0
        %v4555 = vadd.f32 %v4386, %v4554
        %v4556 = vpop.f32.mrf.mxu0
        %v4557 = vadd.f32 %v4388, %v4556
        %4558 = vmatmul.bf16.gmra.mxu0 %v3692
        %v4559 = vpop.f32.mrf.mxu0
        %v4560 = vadd.f32 %v4391, %v4559
        %v4561 = vpop.f32.mrf.mxu0
        %v4562 = vadd.f32 %v4393, %v4561
        %4563 = vmatmul.bf16.gmra.mxu0 %v3694
        %v4564 = vpop.f32.mrf.mxu0
        %v4565 = vadd.f32 %v4396, %v4564
        %v4566 = vpop.f32.mrf.mxu0
        %v4567 = vadd.f32 %v4398, %v4566
        %4568 = vdwg.mxu0
        %v4569 = vmax.f32 %v4072, 0.0
        %v4570 = vmax.f32 %v4410, 0.0
        %v4571 = vmax.f32 %v4074, 0.0
        %v4572 = vmax.f32 %v4412, 0.0
        %v4573 = vmax.f32 %v4077, 0.0
        %v4574 = vmax.f32 %v4415, 0.0
        %v4575 = vmax.f32 %v4079, 0.0
        %v4576 = vmax.f32 %v4417, 0.0
        %v4577 = vmax.f32 %v4082, 0.0
        %v4578 = vmax.f32 %v4420, 0.0
        %v4579 = vmax.f32 %v4084, 0.0
        %v4580 = vmax.f32 %v4422, 0.0
        %v4581 = vmax.f32 %v4087, 0.0
        %v4582 = vmax.f32 %v4425, 0.0
        %v4583 = vmax.f32 %v4089, 0.0
        %v4584 = vmax.f32 %v4427, 0.0
        %v4585 = vmax.f32 %v4092, 0.0
        %v4586 = vmax.f32 %v4430, 0.0
        %v4587 = vmax.f32 %v4094, 0.0
        %v4588 = vmax.f32 %v4432, 0.0
        %v4589 = vmax.f32 %v4097, 0.0
        %v4590 = vmax.f32 %v4435, 0.0
        %v4591 = vmax.f32 %v4099, 0.0
        %v4592 = vmax.f32 %v4437, 0.0
        %v4593 = vmax.f32 %v4102, 0.0
        %v4594 = vmax.f32 %v4440, 0.0
        %v4595 = vmax.f32 %v4104, 0.0
        %v4596 = vmax.f32 %v4442, 0.0
        %v4597 = vmax.f32 %v4107, 0.0
        %v4598 = vmax.f32 %v4445, 0.0
        %v4599 = vmax.f32 %v4109, 0.0
        %v4600 = vmax.f32 %v4447, 0.0
        %v4601 = vmax.f32 %v4112, 0.0
        %v4602 = vmax.f32 %v4450, 0.0
        %v4603 = vmax.f32 %v4114, 0.0
        %v4604 = vmax.f32 %v4452, 0.0
        %v4605 = vmax.f32 %v4117, 0.0
        %v4606 = vmax.f32 %v4455, 0.0
        %v4607 = vmax.f32 %v4119, 0.0
        %v4608 = vmax.f32 %v4457, 0.0
        %v4609 = vmax.f32 %v4122, 0.0
        %v4610 = vmax.f32 %v4460, 0.0
        %v4611 = vmax.f32 %v4124, 0.0
        %v4612 = vmax.f32 %v4462, 0.0
        %v4613 = vmax.f32 %v4127, 0.0
        %v4614 = vmax.f32 %v4465, 0.0
        %v4615 = vmax.f32 %v4129, 0.0
        %v4616 = vmax.f32 %v4467, 0.0
        %v4617 = vmax.f32 %v4132, 0.0
        %v4618 = vmax.f32 %v4470, 0.0
        %v4619 = vmax.f32 %v4134, 0.0
        %v4620 = vmax.f32 %v4472, 0.0
        %v4621 = vmax.f32 %v4137, 0.0
        %v4622 = vmax.f32 %v4475, 0.0
        %v4623 = vmax.f32 %v4139, 0.0
        %v4624 = vmax.f32 %v4477, 0.0
        %v4625 = vmax.f32 %v4142, 0.0
        %v4626 = vmax.f32 %v4480, 0.0
        %v4627 = vmax.f32 %v4144, 0.0
        %v4628 = vmax.f32 %v4482, 0.0
        %v4629 = vmax.f32 %v4147, 0.0
        %v4630 = vmax.f32 %v4485, 0.0
        %v4631 = vmax.f32 %v4149, 0.0
        %v4632 = vmax.f32 %v4487, 0.0
        %v4633 = vmax.f32 %v4152, 0.0
        %v4634 = vmax.f32 %v4490, 0.0
        %v4635 = vmax.f32 %v4154, 0.0
        %v4636 = vmax.f32 %v4492, 0.0
        %v4637 = vmax.f32 %v4157, 0.0
        %v4638 = vmax.f32 %v4495, 0.0
        %v4639 = vmax.f32 %v4159, 0.0
        %v4640 = vmax.f32 %v4497, 0.0
        %v4641 = vmax.f32 %v4162, 0.0
        %v4642 = vmax.f32 %v4500, 0.0
        %v4643 = vmax.f32 %v4164, 0.0
        %v4644 = vmax.f32 %v4502, 0.0
        %v4645 = vmax.f32 %v4167, 0.0
        %v4646 = vmax.f32 %v4505, 0.0
        %v4647 = vmax.f32 %v4169, 0.0
        %v4648 = vmax.f32 %v4507, 0.0
        %v4649 = vmax.f32 %v4172, 0.0
        %v4650 = vmax.f32 %v4510, 0.0
        %v4651 = vmax.f32 %v4174, 0.0
        %v4652 = vmax.f32 %v4512, 0.0
        %v4653 = vmax.f32 %v4177, 0.0
        %v4654 = vmax.f32 %v4515, 0.0
        %v4655 = vmax.f32 %v4179, 0.0
        %v4656 = vmax.f32 %v4517, 0.0
        %v4657 = vmax.f32 %v4182, 0.0
        %v4658 = vmax.f32 %v4520, 0.0
        %v4659 = vmax.f32 %v4184, 0.0
        %v4660 = vmax.f32 %v4522, 0.0
        %v4661 = vmax.f32 %v4187, 0.0
        %v4662 = vmax.f32 %v4525, 0.0
        %v4663 = vmax.f32 %v4189, 0.0
        %v4664 = vmax.f32 %v4527, 0.0
        %v4665 = vmax.f32 %v4192, 0.0
        %v4666 = vmax.f32 %v4530, 0.0
        %v4667 = vmax.f32 %v4194, 0.0
        %v4668 = vmax.f32 %v4532, 0.0
        %v4669 = vmax.f32 %v4197, 0.0
        %v4670 = vmax.f32 %v4535, 0.0
        %v4671 = vmax.f32 %v4199, 0.0
        %v4672 = vmax.f32 %v4537, 0.0
        %v4673 = vmax.f32 %v4202, 0.0
        %v4674 = vmax.f32 %v4540, 0.0
        %v4675 = vmax.f32 %v4204, 0.0
        %v4676 = vmax.f32 %v4542, 0.0
        %v4677 = vmax.f32 %v4207, 0.0
        %v4678 = vmax.f32 %v4545, 0.0
        %v4679 = vmax.f32 %v4209, 0.0
        %v4680 = vmax.f32 %v4547, 0.0
        %v4681 = vmax.f32 %v4212, 0.0
        %v4682 = vmax.f32 %v4550, 0.0
        %v4683 = vmax.f32 %v4214, 0.0
        %v4684 = vmax.f32 %v4552, 0.0
        %v4685 = vmax.f32 %v4217, 0.0
        %v4686 = vmax.f32 %v4555, 0.0
        %v4687 = vmax.f32 %v4219, 0.0
        %v4688 = vmax.f32 %v4557, 0.0
        %v4689 = vmax.f32 %v4222, 0.0
        %v4690 = vmax.f32 %v4560, 0.0
        %v4691 = vmax.f32 %v4224, 0.0
        %v4692 = vmax.f32 %v4562, 0.0
        %v4693 = vmax.f32 %v4227, 0.0
        %v4694 = vmax.f32 %v4565, 0.0
        %v4695 = vmax.f32 %v4229, 0.0
        %v4696 = vmax.f32 %v4567, 0.0
        %v4697 = vpack.c.bf16 %v4570, %v4569
        %v4698 = vpack.c.bf16 %v4572, %v4571
        %v4699 = vpack.c.bf16 %v4574, %v4573
        %v4700 = vpack.c.bf16 %v4576, %v4575
        %v4701 = vpack.c.bf16 %v4578, %v4577
        %v4702 = vpack.c.bf16 %v4580, %v4579
        %v4703 = vpack.c.bf16 %v4582, %v4581
        %v4704 = vpack.c.bf16 %v4584, %v4583
        %v4705 = vpack.c.bf16 %v4586, %v4585
        %v4706 = vpack.c.bf16 %v4588, %v4587
        %v4707 = vpack.c.bf16 %v4590, %v4589
        %v4708 = vpack.c.bf16 %v4592, %v4591
        %v4709 = vpack.c.bf16 %v4594, %v4593
        %v4710 = vpack.c.bf16 %v4596, %v4595
        %v4711 = vpack.c.bf16 %v4598, %v4597
        %v4712 = vpack.c.bf16 %v4600, %v4599
        %v4713 = vpack.c.bf16 %v4602, %v4601
        %v4714 = vpack.c.bf16 %v4604, %v4603
        %v4715 = vpack.c.bf16 %v4606, %v4605
        %v4716 = vpack.c.bf16 %v4608, %v4607
        %v4717 = vpack.c.bf16 %v4610, %v4609
        %v4718 = vpack.c.bf16 %v4612, %v4611
        %v4719 = vpack.c.bf16 %v4614, %v4613
        %v4720 = vpack.c.bf16 %v4616, %v4615
        %v4721 = vpack.c.bf16 %v4618, %v4617
        %v4722 = vpack.c.bf16 %v4620, %v4619
        %v4723 = vpack.c.bf16 %v4622, %v4621
        %v4724 = vpack.c.bf16 %v4624, %v4623
        %v4725 = vpack.c.bf16 %v4626, %v4625
        %v4726 = vpack.c.bf16 %v4628, %v4627
        %v4727 = vpack.c.bf16 %v4630, %v4629
        %v4728 = vpack.c.bf16 %v4632, %v4631
        %v4729 = vpack.c.bf16 %v4634, %v4633
        %v4730 = vpack.c.bf16 %v4636, %v4635
        %v4731 = vpack.c.bf16 %v4638, %v4637
        %v4732 = vpack.c.bf16 %v4640, %v4639
        %v4733 = vpack.c.bf16 %v4642, %v4641
        %v4734 = vpack.c.bf16 %v4644, %v4643
        %v4735 = vpack.c.bf16 %v4646, %v4645
        %v4736 = vpack.c.bf16 %v4648, %v4647
        %v4737 = vpack.c.bf16 %v4650, %v4649
        %v4738 = vpack.c.bf16 %v4652, %v4651
        %v4739 = vpack.c.bf16 %v4654, %v4653
        %v4740 = vpack.c.bf16 %v4656, %v4655
        %v4741 = vpack.c.bf16 %v4658, %v4657
        %v4742 = vpack.c.bf16 %v4660, %v4659
        %v4743 = vpack.c.bf16 %v4662, %v4661
        %v4744 = vpack.c.bf16 %v4664, %v4663
        %v4745 = vpack.c.bf16 %v4666, %v4665
        %v4746 = vpack.c.bf16 %v4668, %v4667
        %v4747 = vpack.c.bf16 %v4670, %v4669
        %v4748 = vpack.c.bf16 %v4672, %v4671
        %v4749 = vpack.c.bf16 %v4674, %v4673
        %v4750 = vpack.c.bf16 %v4676, %v4675
        %v4751 = vpack.c.bf16 %v4678, %v4677
        %v4752 = vpack.c.bf16 %v4680, %v4679
        %v4753 = vpack.c.bf16 %v4682, %v4681
        %v4754 = vpack.c.bf16 %v4684, %v4683
        %v4755 = vpack.c.bf16 %v4686, %v4685
        %v4756 = vpack.c.bf16 %v4688, %v4687
        %v4757 = vpack.c.bf16 %v4690, %v4689
        %v4758 = vpack.c.bf16 %v4692, %v4691
        %v4759 = vpack.c.bf16 %v4694, %v4693
        %v4760 = vpack.c.bf16 %v4696, %v4695
        %s4761 = sadd.s32 %s471, %s3498
        %s4762 = sshra.s32 %s4761, 3
        %s4763 = sand.u32 %s4761, 7
        %s4764 = smul.u32 %s4762, 2
        %s4765 = smul.addr %s4764, 4
        %s4766 = scalar_lea.vmem [#allocation4], %s4765
        %4767 = vst [vmem:[%s4766] sm:$0xff] %v4697
        %4768 = vst [vmem:[%s4766 + $0x8] sm:$0xff] %v4698
        %4769 = vst [vmem:[%s4766 + $0x10] sm:$0xff] %v4699
        %4770 = vst [vmem:[%s4766 + $0x18] sm:$0xff] %v4700
        %4771 = vst [vmem:[%s4766 + $0x20] sm:$0xff] %v4701
        %4772 = vst [vmem:[%s4766 + $0x28] sm:$0xff] %v4702
        %4773 = vst [vmem:[%s4766 + $0x30] sm:$0xff] %v4703
        %4774 = vst [vmem:[%s4766 + $0x38] sm:$0xff] %v4704
        %4775 = vst [vmem:[%s4766 + $0x40] sm:$0xff] %v4705
        %4776 = vst [vmem:[%s4766 + $0x48] sm:$0xff] %v4706
        %4777 = vst [vmem:[%s4766 + $0x50] sm:$0xff] %v4707
        %4778 = vst [vmem:[%s4766 + $0x58] sm:$0xff] %v4708
        %4779 = vst [vmem:[%s4766 + $0x60] sm:$0xff] %v4709
        %4780 = vst [vmem:[%s4766 + $0x68] sm:$0xff] %v4710
        %4781 = vst [vmem:[%s4766 + $0x70] sm:$0xff] %v4711
        %4782 = vst [vmem:[%s4766 + $0x78] sm:$0xff] %v4712
        %4783 = vst [vmem:[%s4766 + $0x80] sm:$0xff] %v4713
        %4784 = vst [vmem:[%s4766 + $0x88] sm:$0xff] %v4714
        %4785 = vst [vmem:[%s4766 + $0x90] sm:$0xff] %v4715
        %4786 = vst [vmem:[%s4766 + $0x98] sm:$0xff] %v4716
        %4787 = vst [vmem:[%s4766 + $0xa0] sm:$0xff] %v4717
        %4788 = vst [vmem:[%s4766 + $0xa8] sm:$0xff] %v4718
        %4789 = vst [vmem:[%s4766 + $0xb0] sm:$0xff] %v4719
        %4790 = vst [vmem:[%s4766 + $0xb8] sm:$0xff] %v4720
        %4791 = vst [vmem:[%s4766 + $0xc0] sm:$0xff] %v4721
        %4792 = vst [vmem:[%s4766 + $0xc8] sm:$0xff] %v4722
        %4793 = vst [vmem:[%s4766 + $0xd0] sm:$0xff] %v4723
        %4794 = vst [vmem:[%s4766 + $0xd8] sm:$0xff] %v4724
        %4795 = vst [vmem:[%s4766 + $0xe0] sm:$0xff] %v4725
        %4796 = vst [vmem:[%s4766 + $0xe8] sm:$0xff] %v4726
        %4797 = vst [vmem:[%s4766 + $0xf0] sm:$0xff] %v4727
        %4798 = vst [vmem:[%s4766 + $0xf8] sm:$0xff] %v4728
        %4799 = vst [vmem:[%s4766 + $0x100] sm:$0xff] %v4729
        %4800 = vst [vmem:[%s4766 + $0x108] sm:$0xff] %v4730
        %4801 = vst [vmem:[%s4766 + $0x110] sm:$0xff] %v4731
        %4802 = vst [vmem:[%s4766 + $0x118] sm:$0xff] %v4732
        %4803 = vst [vmem:[%s4766 + $0x120] sm:$0xff] %v4733
        %4804 = vst [vmem:[%s4766 + $0x128] sm:$0xff] %v4734
        %4805 = vst [vmem:[%s4766 + $0x130] sm:$0xff] %v4735
        %4806 = vst [vmem:[%s4766 + $0x138] sm:$0xff] %v4736
        %4807 = vst [vmem:[%s4766 + $0x140] sm:$0xff] %v4737
        %4808 = vst [vmem:[%s4766 + $0x148] sm:$0xff] %v4738
        %4809 = vst [vmem:[%s4766 + $0x150] sm:$0xff] %v4739
        %4810 = vst [vmem:[%s4766 + $0x158] sm:$0xff] %v4740
        %4811 = vst [vmem:[%s4766 + $0x160] sm:$0xff] %v4741
        %4812 = vst [vmem:[%s4766 + $0x168] sm:$0xff] %v4742
        %4813 = vst [vmem:[%s4766 + $0x170] sm:$0xff] %v4743
        %4814 = vst [vmem:[%s4766 + $0x178] sm:$0xff] %v4744
        %4815 = vst [vmem:[%s4766 + $0x180] sm:$0xff] %v4745
        %4816 = vst [vmem:[%s4766 + $0x188] sm:$0xff] %v4746
        %4817 = vst [vmem:[%s4766 + $0x190] sm:$0xff] %v4747
        %4818 = vst [vmem:[%s4766 + $0x198] sm:$0xff] %v4748
        %4819 = vst [vmem:[%s4766 + $0x1a0] sm:$0xff] %v4749
        %4820 = vst [vmem:[%s4766 + $0x1a8] sm:$0xff] %v4750
        %4821 = vst [vmem:[%s4766 + $0x1b0] sm:$0xff] %v4751
        %4822 = vst [vmem:[%s4766 + $0x1b8] sm:$0xff] %v4752
        %4823 = vst [vmem:[%s4766 + $0x1c0] sm:$0xff] %v4753
        %4824 = vst [vmem:[%s4766 + $0x1c8] sm:$0xff] %v4754
        %4825 = vst [vmem:[%s4766 + $0x1d0] sm:$0xff] %v4755
        %4826 = vst [vmem:[%s4766 + $0x1d8] sm:$0xff] %v4756
        %4827 = vst [vmem:[%s4766 + $0x1e0] sm:$0xff] %v4757
        %4828 = vst [vmem:[%s4766 + $0x1e8] sm:$0xff] %v4758
        %4829 = vst [vmem:[%s4766 + $0x1f0] sm:$0xff] %v4759
        %4830 = vst [vmem:[%s4766 + $0x1f8] sm:$0xff] %v4760
      $region67: #{orthogonal_gcn_forward.1} parent=35 // pred_fallthru
        _
      %p4831 = pnand %p305, %p3499
      %p4832 = pneg %p4831
      %p4833 = pnand %p4832, %p302
      %p4834 = pneg %p4833
      // Predicated region
      $region68: #{orthogonal_gcn_forward.1} parent=35 // pred_check
        _
      $region69: #{orthogonal_gcn_forward.1} parent=35 // pred_check_branch
        %4836 = sbr.rel (%p4833) target = $region71
      $region70: #{orthogonal_gcn_forward.1} parent=35 // pred_region
        %4837 = vst [vmem:[#allocation3] sm:$0xff] 0.0
        %4838 = vst [vmem:[#allocation3 + $0x8] sm:$0xff] 0.0
      $region71: #{orthogonal_gcn_forward.1} parent=35 // pred_fallthru
        _
      // Predicated region
      $region72: #{orthogonal_gcn_forward.1} parent=35 // pred_check
        _
      $region73: #{orthogonal_gcn_forward.1} parent=35 // pred_check_branch
        %4840 = sbr.rel (%p4831) target = $region75
      $region74: #{orthogonal_gcn_forward.1} parent=35 // pred_region
        %s4841 = sadd.s32 %s471, %s3498
        %s4842 = sshra.s32 %s4841, 3
        %s4843 = sand.u32 %s4841, 7
        %s4844 = smul.u32 %s4842, 2
        %s4845 = smul.addr %s4844, 4
        %s4846 = scalar_lea.vmem [#allocation4], %s4845
        %v4847 = vld [vmem:[%s4846] sm:$0xff]
        %v4848 = vld [vmem:[%s4846 + $0x8] sm:$0xff]
        %v4849 = vld [vmem:[%s4846 + $0x10] sm:$0xff]
        %v4850 = vld [vmem:[%s4846 + $0x18] sm:$0xff]
        %v4851 = vld [vmem:[%s4846 + $0x20] sm:$0xff]
        %v4852 = vld [vmem:[%s4846 + $0x28] sm:$0xff]
        %v4853 = vld [vmem:[%s4846 + $0x30] sm:$0xff]
        %v4854 = vld [vmem:[%s4846 + $0x38] sm:$0xff]
        %v4855 = vld [vmem:[%s4846 + $0x40] sm:$0xff]
        %v4856 = vld [vmem:[%s4846 + $0x48] sm:$0xff]
        %v4857 = vld [vmem:[%s4846 + $0x50] sm:$0xff]
        %v4858 = vld [vmem:[%s4846 + $0x58] sm:$0xff]
        %v4859 = vld [vmem:[%s4846 + $0x60] sm:$0xff]
        %v4860 = vld [vmem:[%s4846 + $0x68] sm:$0xff]
        %v4861 = vld [vmem:[%s4846 + $0x70] sm:$0xff]
        %v4862 = vld [vmem:[%s4846 + $0x78] sm:$0xff]
        %v4863 = vld [vmem:[%s4846 + $0x80] sm:$0xff]
        %v4864 = vld [vmem:[%s4846 + $0x88] sm:$0xff]
        %v4865 = vld [vmem:[%s4846 + $0x90] sm:$0xff]
        %v4866 = vld [vmem:[%s4846 + $0x98] sm:$0xff]
        %v4867 = vld [vmem:[%s4846 + $0xa0] sm:$0xff]
        %v4868 = vld [vmem:[%s4846 + $0xa8] sm:$0xff]
        %v4869 = vld [vmem:[%s4846 + $0xb0] sm:$0xff]
        %v4870 = vld [vmem:[%s4846 + $0xb8] sm:$0xff]
        %v4871 = vld [vmem:[%s4846 + $0xc0] sm:$0xff]
        %v4872 = vld [vmem:[%s4846 + $0xc8] sm:$0xff]
        %v4873 = vld [vmem:[%s4846 + $0xd0] sm:$0xff]
        %v4874 = vld [vmem:[%s4846 + $0xd8] sm:$0xff]
        %v4875 = vld [vmem:[%s4846 + $0xe0] sm:$0xff]
        %v4876 = vld [vmem:[%s4846 + $0xe8] sm:$0xff]
        %v4877 = vld [vmem:[%s4846 + $0xf0] sm:$0xff]
        %v4878 = vld [vmem:[%s4846 + $0xf8] sm:$0xff]
        %v4879 = vld [vmem:[%s4846 + $0x100] sm:$0xff]
        %v4880 = vld [vmem:[%s4846 + $0x108] sm:$0xff]
        %v4881 = vld [vmem:[%s4846 + $0x110] sm:$0xff]
        %v4882 = vld [vmem:[%s4846 + $0x118] sm:$0xff]
        %v4883 = vld [vmem:[%s4846 + $0x120] sm:$0xff]
        %v4884 = vld [vmem:[%s4846 + $0x128] sm:$0xff]
        %v4885 = vld [vmem:[%s4846 + $0x130] sm:$0xff]
        %v4886 = vld [vmem:[%s4846 + $0x138] sm:$0xff]
        %v4887 = vld [vmem:[%s4846 + $0x140] sm:$0xff]
        %v4888 = vld [vmem:[%s4846 + $0x148] sm:$0xff]
        %v4889 = vld [vmem:[%s4846 + $0x150] sm:$0xff]
        %v4890 = vld [vmem:[%s4846 + $0x158] sm:$0xff]
        %v4891 = vld [vmem:[%s4846 + $0x160] sm:$0xff]
        %v4892 = vld [vmem:[%s4846 + $0x168] sm:$0xff]
        %v4893 = vld [vmem:[%s4846 + $0x170] sm:$0xff]
        %v4894 = vld [vmem:[%s4846 + $0x178] sm:$0xff]
        %v4895 = vld [vmem:[%s4846 + $0x180] sm:$0xff]
        %v4896 = vld [vmem:[%s4846 + $0x188] sm:$0xff]
        %v4897 = vld [vmem:[%s4846 + $0x190] sm:$0xff]
        %v4898 = vld [vmem:[%s4846 + $0x198] sm:$0xff]
        %v4899 = vld [vmem:[%s4846 + $0x1a0] sm:$0xff]
        %v4900 = vld [vmem:[%s4846 + $0x1a8] sm:$0xff]
        %v4901 = vld [vmem:[%s4846 + $0x1b0] sm:$0xff]
        %v4902 = vld [vmem:[%s4846 + $0x1b8] sm:$0xff]
        %v4903 = vld [vmem:[%s4846 + $0x1c0] sm:$0xff]
        %v4904 = vld [vmem:[%s4846 + $0x1c8] sm:$0xff]
        %v4905 = vld [vmem:[%s4846 + $0x1d0] sm:$0xff]
        %v4906 = vld [vmem:[%s4846 + $0x1d8] sm:$0xff]
        %v4907 = vld [vmem:[%s4846 + $0x1e0] sm:$0xff]
        %v4908 = vld [vmem:[%s4846 + $0x1e8] sm:$0xff]
        %v4909 = vld [vmem:[%s4846 + $0x1f0] sm:$0xff]
        %v4910 = vld [vmem:[%s4846 + $0x1f8] sm:$0xff]
        %v4911 = vld [vmem:[#allocation3] sm:$0xff]
        %v4912 = vld [vmem:[#allocation3 + $0x8] sm:$0xff]
        %v4913 = vld [vmem:[%s297] sm:$0xff]
        %v4914 = vld [vmem:[%s297 + $0x8] sm:$0xff]
        %v4917 = vunpack.c.l.b16 %v4913
        %v4918 = vunpack.c.h.b16 %v4913
        %v4919 = vunpack.c.l.b16 %v4914
        %v4920 = vunpack.c.h.b16 %v4914
        %v4921 = vpack.c.b16 %v4917, %v4917
        %v4922 = vpack.c.b16 %v4918, %v4918
        %v4923 = vpack.c.b16 %v4919, %v4919
        %v4924 = vpack.c.b16 %v4920, %v4920
        %v4993 = vunpack.c.l.b16 %v4847
        %v4994 = vunpack.c.h.b16 %v4847
        %v4995 = vunpack.c.l.b16 %v4848
        %v4996 = vunpack.c.h.b16 %v4848
        %v4997 = vunpack.c.l.b16 %v4849
        %v4998 = vunpack.c.h.b16 %v4849
        %v4999 = vunpack.c.l.b16 %v4850
        %v5000 = vunpack.c.h.b16 %v4850
        %v5001 = vunpack.c.l.b16 %v4851
        %v5002 = vunpack.c.h.b16 %v4851
        %v5003 = vunpack.c.l.b16 %v4852
        %v5004 = vunpack.c.h.b16 %v4852
        %v5005 = vunpack.c.l.b16 %v4853
        %v5006 = vunpack.c.h.b16 %v4853
        %v5007 = vunpack.c.l.b16 %v4854
        %v5008 = vunpack.c.h.b16 %v4854
        %v5009 = vunpack.c.l.b16 %v4855
        %v5010 = vunpack.c.h.b16 %v4855
        %v5011 = vunpack.c.l.b16 %v4856
        %v5012 = vunpack.c.h.b16 %v4856
        %v5013 = vunpack.c.l.b16 %v4857
        %v5014 = vunpack.c.h.b16 %v4857
        %v5015 = vunpack.c.l.b16 %v4858
        %v5016 = vunpack.c.h.b16 %v4858
        %v5017 = vunpack.c.l.b16 %v4859
        %v5018 = vunpack.c.h.b16 %v4859
        %v5019 = vunpack.c.l.b16 %v4860
        %v5020 = vunpack.c.h.b16 %v4860
        %v5021 = vunpack.c.l.b16 %v4861
        %v5022 = vunpack.c.h.b16 %v4861
        %v5023 = vunpack.c.l.b16 %v4862
        %v5024 = vunpack.c.h.b16 %v4862
        %v5025 = vunpack.c.l.b16 %v4863
        %v5026 = vunpack.c.h.b16 %v4863
        %v5027 = vunpack.c.l.b16 %v4864
        %v5028 = vunpack.c.h.b16 %v4864
        %v5029 = vunpack.c.l.b16 %v4865
        %v5030 = vunpack.c.h.b16 %v4865
        %v5031 = vunpack.c.l.b16 %v4866
        %v5032 = vunpack.c.h.b16 %v4866
        %v5033 = vunpack.c.l.b16 %v4867
        %v5034 = vunpack.c.h.b16 %v4867
        %v5035 = vunpack.c.l.b16 %v4868
        %v5036 = vunpack.c.h.b16 %v4868
        %v5037 = vunpack.c.l.b16 %v4869
        %v5038 = vunpack.c.h.b16 %v4869
        %v5039 = vunpack.c.l.b16 %v4870
        %v5040 = vunpack.c.h.b16 %v4870
        %v5041 = vunpack.c.l.b16 %v4871
        %v5042 = vunpack.c.h.b16 %v4871
        %v5043 = vunpack.c.l.b16 %v4872
        %v5044 = vunpack.c.h.b16 %v4872
        %v5045 = vunpack.c.l.b16 %v4873
        %v5046 = vunpack.c.h.b16 %v4873
        %v5047 = vunpack.c.l.b16 %v4874
        %v5048 = vunpack.c.h.b16 %v4874
        %v5049 = vunpack.c.l.b16 %v4875
        %v5050 = vunpack.c.h.b16 %v4875
        %v5051 = vunpack.c.l.b16 %v4876
        %v5052 = vunpack.c.h.b16 %v4876
        %v5053 = vunpack.c.l.b16 %v4877
        %v5054 = vunpack.c.h.b16 %v4877
        %v5055 = vunpack.c.l.b16 %v4878
        %v5056 = vunpack.c.h.b16 %v4878
        %v5057 = vunpack.c.l.b16 %v4879
        %v5058 = vunpack.c.h.b16 %v4879
        %v5059 = vunpack.c.l.b16 %v4880
        %v5060 = vunpack.c.h.b16 %v4880
        %v5061 = vunpack.c.l.b16 %v4881
        %v5062 = vunpack.c.h.b16 %v4881
        %v5063 = vunpack.c.l.b16 %v4882
        %v5064 = vunpack.c.h.b16 %v4882
        %v5065 = vunpack.c.l.b16 %v4883
        %v5066 = vunpack.c.h.b16 %v4883
        %v5067 = vunpack.c.l.b16 %v4884
        %v5068 = vunpack.c.h.b16 %v4884
        %v5069 = vunpack.c.l.b16 %v4885
        %v5070 = vunpack.c.h.b16 %v4885
        %v5071 = vunpack.c.l.b16 %v4886
        %v5072 = vunpack.c.h.b16 %v4886
        %v5073 = vunpack.c.l.b16 %v4887
        %v5074 = vunpack.c.h.b16 %v4887
        %v5075 = vunpack.c.l.b16 %v4888
        %v5076 = vunpack.c.h.b16 %v4888
        %v5077 = vunpack.c.l.b16 %v4889
        %v5078 = vunpack.c.h.b16 %v4889
        %v5079 = vunpack.c.l.b16 %v4890
        %v5080 = vunpack.c.h.b16 %v4890
        %v5081 = vunpack.c.l.b16 %v4891
        %v5082 = vunpack.c.h.b16 %v4891
        %v5083 = vunpack.c.l.b16 %v4892
        %v5084 = vunpack.c.h.b16 %v4892
        %v5085 = vunpack.c.l.b16 %v4893
        %v5086 = vunpack.c.h.b16 %v4893
        %v5087 = vunpack.c.l.b16 %v4894
        %v5088 = vunpack.c.h.b16 %v4894
        %v5089 = vunpack.c.l.b16 %v4895
        %v5090 = vunpack.c.h.b16 %v4895
        %v5091 = vunpack.c.l.b16 %v4896
        %v5092 = vunpack.c.h.b16 %v4896
        %v5093 = vunpack.c.l.b16 %v4897
        %v5094 = vunpack.c.h.b16 %v4897
        %v5095 = vunpack.c.l.b16 %v4898
        %v5096 = vunpack.c.h.b16 %v4898
        %v5097 = vunpack.c.l.b16 %v4899
        %v5098 = vunpack.c.h.b16 %v4899
        %v5099 = vunpack.c.l.b16 %v4900
        %v5100 = vunpack.c.h.b16 %v4900
        %v5101 = vunpack.c.l.b16 %v4901
        %v5102 = vunpack.c.h.b16 %v4901
        %v5103 = vunpack.c.l.b16 %v4902
        %v5104 = vunpack.c.h.b16 %v4902
        %v5105 = vunpack.c.l.b16 %v4903
        %v5106 = vunpack.c.h.b16 %v4903
        %v5107 = vunpack.c.l.b16 %v4904
        %v5108 = vunpack.c.h.b16 %v4904
        %v5109 = vunpack.c.l.b16 %v4905
        %v5110 = vunpack.c.h.b16 %v4905
        %v5111 = vunpack.c.l.b16 %v4906
        %v5112 = vunpack.c.h.b16 %v4906
        %v5113 = vunpack.c.l.b16 %v4907
        %v5114 = vunpack.c.h.b16 %v4907
        %v5115 = vunpack.c.l.b16 %v4908
        %v5116 = vunpack.c.h.b16 %v4908
        %v5117 = vunpack.c.l.b16 %v4909
        %v5118 = vunpack.c.h.b16 %v4909
        %v5119 = vunpack.c.l.b16 %v4910
        %v5120 = vunpack.c.h.b16 %v4910
        %v5121 = vpack.c.b16 %v4995, %v4993
        %v5122 = vpack.c.b16 %v4996, %v4994
        %v5123 = vpack.c.b16 %v4999, %v4997
        %v5124 = vpack.c.b16 %v5000, %v4998
        %v5125 = vpack.c.b16 %v5003, %v5001
        %v5126 = vpack.c.b16 %v5004, %v5002
        %v5127 = vpack.c.b16 %v5007, %v5005
        %v5128 = vpack.c.b16 %v5008, %v5006
        %v5129 = vpack.c.b16 %v5011, %v5009
        %v5130 = vpack.c.b16 %v5012, %v5010
        %v5131 = vpack.c.b16 %v5015, %v5013
        %v5132 = vpack.c.b16 %v5016, %v5014
        %v5133 = vpack.c.b16 %v5019, %v5017
        %v5134 = vpack.c.b16 %v5020, %v5018
        %v5135 = vpack.c.b16 %v5023, %v5021
        %v5136 = vpack.c.b16 %v5024, %v5022
        %v5137 = vpack.c.b16 %v5027, %v5025
        %v5138 = vpack.c.b16 %v5028, %v5026
        %v5139 = vpack.c.b16 %v5031, %v5029
        %v5140 = vpack.c.b16 %v5032, %v5030
        %v5141 = vpack.c.b16 %v5035, %v5033
        %v5142 = vpack.c.b16 %v5036, %v5034
        %v5143 = vpack.c.b16 %v5039, %v5037
        %v5144 = vpack.c.b16 %v5040, %v5038
        %v5145 = vpack.c.b16 %v5043, %v5041
        %v5146 = vpack.c.b16 %v5044, %v5042
        %v5147 = vpack.c.b16 %v5047, %v5045
        %v5148 = vpack.c.b16 %v5048, %v5046
        %v5149 = vpack.c.b16 %v5051, %v5049
        %v5150 = vpack.c.b16 %v5052, %v5050
        %v5151 = vpack.c.b16 %v5055, %v5053
        %v5152 = vpack.c.b16 %v5056, %v5054
        %v5153 = vpack.c.b16 %v5059, %v5057
        %v5154 = vpack.c.b16 %v5060, %v5058
        %v5155 = vpack.c.b16 %v5063, %v5061
        %v5156 = vpack.c.b16 %v5064, %v5062
        %v5157 = vpack.c.b16 %v5067, %v5065
        %v5158 = vpack.c.b16 %v5068, %v5066
        %v5159 = vpack.c.b16 %v5071, %v5069
        %v5160 = vpack.c.b16 %v5072, %v5070
        %v5161 = vpack.c.b16 %v5075, %v5073
        %v5162 = vpack.c.b16 %v5076, %v5074
        %v5163 = vpack.c.b16 %v5079, %v5077
        %v5164 = vpack.c.b16 %v5080, %v5078
        %v5165 = vpack.c.b16 %v5083, %v5081
        %v5166 = vpack.c.b16 %v5084, %v5082
        %v5167 = vpack.c.b16 %v5087, %v5085
        %v5168 = vpack.c.b16 %v5088, %v5086
        %v5169 = vpack.c.b16 %v5091, %v5089
        %v5170 = vpack.c.b16 %v5092, %v5090
        %v5171 = vpack.c.b16 %v5095, %v5093
        %v5172 = vpack.c.b16 %v5096, %v5094
        %v5173 = vpack.c.b16 %v5099, %v5097
        %v5174 = vpack.c.b16 %v5100, %v5098
        %v5175 = vpack.c.b16 %v5103, %v5101
        %v5176 = vpack.c.b16 %v5104, %v5102
        %v5177 = vpack.c.b16 %v5107, %v5105
        %v5178 = vpack.c.b16 %v5108, %v5106
        %v5179 = vpack.c.b16 %v5111, %v5109
        %v5180 = vpack.c.b16 %v5112, %v5110
        %v5181 = vpack.c.b16 %v5115, %v5113
        %v5182 = vpack.c.b16 %v5116, %v5114
        %v5183 = vpack.c.b16 %v5119, %v5117
        %v5184 = vpack.c.b16 %v5120, %v5118
        %5249 = vmatpush.bf16.msra.mxu0 %v5135
        %5250 = vmatpush.bf16.msra.mxu0 %v5133
        %5251 = vmatpush.bf16.msra.mxu0 %v5131
        %5252 = vmatpush.bf16.msra.mxu0 %v5129
        %5253 = vmatpush.bf16.msra.mxu0 %v5127
        %5254 = vmatpush.bf16.msra.mxu0 %v5125
        %5255 = vmatpush.bf16.msra.mxu0 %v5123
        %5256 = vmatpush.bf16.msra.mxu0 %v5121
        %5257 = vmatmul.bf16.gmra.mxu0 %v4921
        %v5258 = vpop.f32.mrf.mxu0
        %v5259 = vadd.f32 0.0, %v5258
        %v5260 = vpop.f32.mrf.mxu0
        %5261 = vdwg.mxu0
        %5262 = vmatpush.bf16.msra.mxu0 %v5151
        %5263 = vmatpush.bf16.msra.mxu0 %v5149
        %5264 = vmatpush.bf16.msra.mxu0 %v5147
        %5265 = vmatpush.bf16.msra.mxu0 %v5145
        %5266 = vmatpush.bf16.msra.mxu0 %v5143
        %5267 = vmatpush.bf16.msra.mxu0 %v5141
        %5268 = vmatpush.bf16.msra.mxu0 %v5139
        %5269 = vmatpush.bf16.msra.mxu0 %v5137
        %5270 = vmatmul.bf16.gmra.mxu0 %v4922
        %v5271 = vpop.f32.mrf.mxu0
        %v5272 = vadd.f32 %v5259, %v5271
        %v5273 = vpop.f32.mrf.mxu0
        %5274 = vdwg.mxu0
        %5275 = vmatpush.bf16.msra.mxu0 %v5167
        %5276 = vmatpush.bf16.msra.mxu0 %v5165
        %5277 = vmatpush.bf16.msra.mxu0 %v5163
        %5278 = vmatpush.bf16.msra.mxu0 %v5161
        %5279 = vmatpush.bf16.msra.mxu0 %v5159
        %5280 = vmatpush.bf16.msra.mxu0 %v5157
        %5281 = vmatpush.bf16.msra.mxu0 %v5155
        %5282 = vmatpush.bf16.msra.mxu0 %v5153
        %5283 = vmatmul.bf16.gmra.mxu0 %v4923
        %v5284 = vpop.f32.mrf.mxu0
        %v5285 = vadd.f32 %v5272, %v5284
        %v5286 = vpop.f32.mrf.mxu0
        %5287 = vdwg.mxu0
        %5288 = vmatpush.bf16.msra.mxu0 %v5183
        %5289 = vmatpush.bf16.msra.mxu0 %v5181
        %5290 = vmatpush.bf16.msra.mxu0 %v5179
        %5291 = vmatpush.bf16.msra.mxu0 %v5177
        %5292 = vmatpush.bf16.msra.mxu0 %v5175
        %5293 = vmatpush.bf16.msra.mxu0 %v5173
        %5294 = vmatpush.bf16.msra.mxu0 %v5171
        %5295 = vmatpush.bf16.msra.mxu0 %v5169
        %5296 = vmatmul.bf16.gmra.mxu0 %v4924
        %v5297 = vpop.f32.mrf.mxu0
        %v5298 = vadd.f32 %v5285, %v5297
        %v5299 = vpop.f32.mrf.mxu0
        %5300 = vdwg.mxu0
        %5301 = vmatpush.bf16.msra.mxu0 %v5136
        %5302 = vmatpush.bf16.msra.mxu0 %v5134
        %5303 = vmatpush.bf16.msra.mxu0 %v5132
        %5304 = vmatpush.bf16.msra.mxu0 %v5130
        %5305 = vmatpush.bf16.msra.mxu0 %v5128
        %5306 = vmatpush.bf16.msra.mxu0 %v5126
        %5307 = vmatpush.bf16.msra.mxu0 %v5124
        %5308 = vmatpush.bf16.msra.mxu0 %v5122
        %5309 = vmatmul.bf16.gmra.mxu0 %v4921
        %v5310 = vpop.f32.mrf.mxu0
        %v5311 = vadd.f32 0.0, %v5310
        %v5312 = vpop.f32.mrf.mxu0
        %5313 = vdwg.mxu0
        %5314 = vmatpush.bf16.msra.mxu0 %v5152
        %5315 = vmatpush.bf16.msra.mxu0 %v5150
        %5316 = vmatpush.bf16.msra.mxu0 %v5148
        %5317 = vmatpush.bf16.msra.mxu0 %v5146
        %5318 = vmatpush.bf16.msra.mxu0 %v5144
        %5319 = vmatpush.bf16.msra.mxu0 %v5142
        %5320 = vmatpush.bf16.msra.mxu0 %v5140
        %5321 = vmatpush.bf16.msra.mxu0 %v5138
        %5322 = vmatmul.bf16.gmra.mxu0 %v4922
        %v5323 = vpop.f32.mrf.mxu0
        %v5324 = vadd.f32 %v5311, %v5323
        %v5325 = vpop.f32.mrf.mxu0
        %5326 = vdwg.mxu0
        %5327 = vmatpush.bf16.msra.mxu0 %v5168
        %5328 = vmatpush.bf16.msra.mxu0 %v5166
        %5329 = vmatpush.bf16.msra.mxu0 %v5164
        %5330 = vmatpush.bf16.msra.mxu0 %v5162
        %5331 = vmatpush.bf16.msra.mxu0 %v5160
        %5332 = vmatpush.bf16.msra.mxu0 %v5158
        %5333 = vmatpush.bf16.msra.mxu0 %v5156
        %5334 = vmatpush.bf16.msra.mxu0 %v5154
        %5335 = vmatmul.bf16.gmra.mxu0 %v4923
        %v5336 = vpop.f32.mrf.mxu0
        %v5337 = vadd.f32 %v5324, %v5336
        %v5338 = vpop.f32.mrf.mxu0
        %5339 = vdwg.mxu0
        %5340 = vmatpush.bf16.msra.mxu0 %v5184
        %5341 = vmatpush.bf16.msra.mxu0 %v5182
        %5342 = vmatpush.bf16.msra.mxu0 %v5180
        %5343 = vmatpush.bf16.msra.mxu0 %v5178
        %5344 = vmatpush.bf16.msra.mxu0 %v5176
        %5345 = vmatpush.bf16.msra.mxu0 %v5174
        %5346 = vmatpush.bf16.msra.mxu0 %v5172
        %5347 = vmatpush.bf16.msra.mxu0 %v5170
        %5348 = vmatmul.bf16.gmra.mxu0 %v4924
        %v5349 = vpop.f32.mrf.mxu0
        %v5350 = vadd.f32 %v5337, %v5349
        %v5351 = vpop.f32.mrf.mxu0
        %5352 = vdwg.mxu0
        %v5353 = vadd.f32 %v4911, %v5298
        %v5354 = vadd.f32 %v4912, %v5350
        %5355 = vst [vmem:[#allocation3] sm:$0xff] %v5353
        %5356 = vst [vmem:[#allocation3 + $0x8] sm:$0xff] %v5354
      $region75: #{orthogonal_gcn_forward.1} parent=35 // pred_fallthru
        _
      // Predicated region
      $region76: #{orthogonal_gcn_forward.1} parent=35 // pred_check
        _
      $region77: #{orthogonal_gcn_forward.1} parent=35 // pred_check_branch
        %5358 = sbr.rel (%p4833) target = $region79
      $region78: #{orthogonal_gcn_forward.1} parent=35 // pred_region
        $region80: #{orthogonal_gcn_forward.1} parent=78
          #allocation7 [shape = 'u8[262144]{0}', space=vmem, size = 0x40000, scoped, tag = 'scoped memory for orthogonal_gcn_forward.1']
          #allocation8 [shape = 'u8[1024]{0}', space=vmem, size = 0x400, scoped, tag = 'scoped memory for orthogonal_gcn_forward.1']
          #allocation9 [shape = 'u8[131072]{0}', space=vmem, size = 0x20000, scoped, tag = 'scoped memory for orthogonal_gcn_forward.1']
          #allocation10 [shape = 'u8[512]{0}', space=vmem, size = 0x400, scoped, tag = 'scoped memory for orthogonal_gcn_forward.1']
          // Predicated region
          $region81: #{orthogonal_gcn_forward.1} parent=80 // pred_check
            _
          $region82: #{orthogonal_gcn_forward.1} parent=80 // pred_check_branch
            %5360 = sbr.rel (0) target = $region84
          $region83: #{orthogonal_gcn_forward.1} parent=80 // pred_region
            loop: start=0, step=1, limit=1
            $region85: #{orthogonal_gcn_forward.1} parent=83 // loop_pre_header
              _
            $region86: #{orthogonal_gcn_forward.1} parent=83 // loop_header
              %s5362 = sphi 0, %s5366
              %p5363 = scmp.ge.s32.totalorder %s5362, 1
              %s5367 = sphi %s5, %s5
              %s5368 = sphi [#allocation7], [#allocation7]
            $region87: #{orthogonal_gcn_forward.1} parent=83 // loop_header_branch
              %5365 = sbr.rel (%p5363) target = $region91
            $region88: #{orthogonal_gcn_forward.1} parent=83 // loop_body
              %v5369 = vld [vmem:[%s5367] sm:$0xff]
              %5370 = vst [vmem:[%s5368] sm:$0xff] %v5369
              %v5371 = vld [vmem:[%s5367 + $0x8] sm:$0xff]
              %5372 = vst [vmem:[%s5368 + $0x8] sm:$0xff] %v5371
              %v5373 = vld [vmem:[%s5367 + $0x10] sm:$0xff]
              %5374 = vst [vmem:[%s5368 + $0x10] sm:$0xff] %v5373
              %v5375 = vld [vmem:[%s5367 + $0x18] sm:$0xff]
              %5376 = vst [vmem:[%s5368 + $0x18] sm:$0xff] %v5375
              %v5377 = vld [vmem:[%s5367 + $0x20] sm:$0xff]
              %5378 = vst [vmem:[%s5368 + $0x20] sm:$0xff] %v5377
              %v5379 = vld [vmem:[%s5367 + $0x28] sm:$0xff]
              %5380 = vst [vmem:[%s5368 + $0x28] sm:$0xff] %v5379
              %v5381 = vld [vmem:[%s5367 + $0x30] sm:$0xff]
              %5382 = vst [vmem:[%s5368 + $0x30] sm:$0xff] %v5381
              %v5383 = vld [vmem:[%s5367 + $0x38] sm:$0xff]
              %5384 = vst [vmem:[%s5368 + $0x38] sm:$0xff] %v5383
              %v5385 = vld [vmem:[%s5367 + $0x40] sm:$0xff]
              %5386 = vst [vmem:[%s5368 + $0x40] sm:$0xff] %v5385
              %v5387 = vld [vmem:[%s5367 + $0x48] sm:$0xff]
              %5388 = vst [vmem:[%s5368 + $0x48] sm:$0xff] %v5387
              %v5389 = vld [vmem:[%s5367 + $0x50] sm:$0xff]
              %5390 = vst [vmem:[%s5368 + $0x50] sm:$0xff] %v5389
              %v5391 = vld [vmem:[%s5367 + $0x58] sm:$0xff]
              %5392 = vst [vmem:[%s5368 + $0x58] sm:$0xff] %v5391
              %v5393 = vld [vmem:[%s5367 + $0x60] sm:$0xff]
              %5394 = vst [vmem:[%s5368 + $0x60] sm:$0xff] %v5393
              %v5395 = vld [vmem:[%s5367 + $0x68] sm:$0xff]
              %5396 = vst [vmem:[%s5368 + $0x68] sm:$0xff] %v5395
              %v5397 = vld [vmem:[%s5367 + $0x70] sm:$0xff]
              %5398 = vst [vmem:[%s5368 + $0x70] sm:$0xff] %v5397
              %v5399 = vld [vmem:[%s5367 + $0x78] sm:$0xff]
              %5400 = vst [vmem:[%s5368 + $0x78] sm:$0xff] %v5399
              %v5401 = vld [vmem:[%s5367 + $0x80] sm:$0xff]
              %5402 = vst [vmem:[%s5368 + $0x80] sm:$0xff] %v5401
              %v5403 = vld [vmem:[%s5367 + $0x88] sm:$0xff]
              %5404 = vst [vmem:[%s5368 + $0x88] sm:$0xff] %v5403
              %v5405 = vld [vmem:[%s5367 + $0x90] sm:$0xff]
              %5406 = vst [vmem:[%s5368 + $0x90] sm:$0xff] %v5405
              %v5407 = vld [vmem:[%s5367 + $0x98] sm:$0xff]
              %5408 = vst [vmem:[%s5368 + $0x98] sm:$0xff] %v5407
              %v5409 = vld [vmem:[%s5367 + $0xa0] sm:$0xff]
              %5410 = vst [vmem:[%s5368 + $0xa0] sm:$0xff] %v5409
              %v5411 = vld [vmem:[%s5367 + $0xa8] sm:$0xff]
              %5412 = vst [vmem:[%s5368 + $0xa8] sm:$0xff] %v5411
              %v5413 = vld [vmem:[%s5367 + $0xb0] sm:$0xff]
              %5414 = vst [vmem:[%s5368 + $0xb0] sm:$0xff] %v5413
              %v5415 = vld [vmem:[%s5367 + $0xb8] sm:$0xff]
              %5416 = vst [vmem:[%s5368 + $0xb8] sm:$0xff] %v5415
              %v5417 = vld [vmem:[%s5367 + $0xc0] sm:$0xff]
              %5418 = vst [vmem:[%s5368 + $0xc0] sm:$0xff] %v5417
              %v5419 = vld [vmem:[%s5367 + $0xc8] sm:$0xff]
              %5420 = vst [vmem:[%s5368 + $0xc8] sm:$0xff] %v5419
              %v5421 = vld [vmem:[%s5367 + $0xd0] sm:$0xff]
              %5422 = vst [vmem:[%s5368 + $0xd0] sm:$0xff] %v5421
              %v5423 = vld [vmem:[%s5367 + $0xd8] sm:$0xff]
              %5424 = vst [vmem:[%s5368 + $0xd8] sm:$0xff] %v5423
              %v5425 = vld [vmem:[%s5367 + $0xe0] sm:$0xff]
              %5426 = vst [vmem:[%s5368 + $0xe0] sm:$0xff] %v5425
              %v5427 = vld [vmem:[%s5367 + $0xe8] sm:$0xff]
              %5428 = vst [vmem:[%s5368 + $0xe8] sm:$0xff] %v5427
              %v5429 = vld [vmem:[%s5367 + $0xf0] sm:$0xff]
              %5430 = vst [vmem:[%s5368 + $0xf0] sm:$0xff] %v5429
              %v5431 = vld [vmem:[%s5367 + $0xf8] sm:$0xff]
              %5432 = vst [vmem:[%s5368 + $0xf8] sm:$0xff] %v5431
              %v5433 = vld [vmem:[%s5367 + $0x100] sm:$0xff]
              %5434 = vst [vmem:[%s5368 + $0x100] sm:$0xff] %v5433
              %v5435 = vld [vmem:[%s5367 + $0x108] sm:$0xff]
              %5436 = vst [vmem:[%s5368 + $0x108] sm:$0xff] %v5435
              %v5437 = vld [vmem:[%s5367 + $0x110] sm:$0xff]
              %5438 = vst [vmem:[%s5368 + $0x110] sm:$0xff] %v5437
              %v5439 = vld [vmem:[%s5367 + $0x118] sm:$0xff]
              %5440 = vst [vmem:[%s5368 + $0x118] sm:$0xff] %v5439
              %v5441 = vld [vmem:[%s5367 + $0x120] sm:$0xff]
              %5442 = vst [vmem:[%s5368 + $0x120] sm:$0xff] %v5441
              %v5443 = vld [vmem:[%s5367 + $0x128] sm:$0xff]
              %5444 = vst [vmem:[%s5368 + $0x128] sm:$0xff] %v5443
              %v5445 = vld [vmem:[%s5367 + $0x130] sm:$0xff]
              %5446 = vst [vmem:[%s5368 + $0x130] sm:$0xff] %v5445
              %v5447 = vld [vmem:[%s5367 + $0x138] sm:$0xff]
              %5448 = vst [vmem:[%s5368 + $0x138] sm:$0xff] %v5447
              %v5449 = vld [vmem:[%s5367 + $0x140] sm:$0xff]
              %5450 = vst [vmem:[%s5368 + $0x140] sm:$0xff] %v5449
              %v5451 = vld [vmem:[%s5367 + $0x148] sm:$0xff]
              %5452 = vst [vmem:[%s5368 + $0x148] sm:$0xff] %v5451
              %v5453 = vld [vmem:[%s5367 + $0x150] sm:$0xff]
              %5454 = vst [vmem:[%s5368 + $0x150] sm:$0xff] %v5453
              %v5455 = vld [vmem:[%s5367 + $0x158] sm:$0xff]
              %5456 = vst [vmem:[%s5368 + $0x158] sm:$0xff] %v5455
              %v5457 = vld [vmem:[%s5367 + $0x160] sm:$0xff]
              %5458 = vst [vmem:[%s5368 + $0x160] sm:$0xff] %v5457
              %v5459 = vld [vmem:[%s5367 + $0x168] sm:$0xff]
              %5460 = vst [vmem:[%s5368 + $0x168] sm:$0xff] %v5459
              %v5461 = vld [vmem:[%s5367 + $0x170] sm:$0xff]
              %5462 = vst [vmem:[%s5368 + $0x170] sm:$0xff] %v5461
              %v5463 = vld [vmem:[%s5367 + $0x178] sm:$0xff]
              %5464 = vst [vmem:[%s5368 + $0x178] sm:$0xff] %v5463
              %v5465 = vld [vmem:[%s5367 + $0x180] sm:$0xff]
              %5466 = vst [vmem:[%s5368 + $0x180] sm:$0xff] %v5465
              %v5467 = vld [vmem:[%s5367 + $0x188] sm:$0xff]
              %5468 = vst [vmem:[%s5368 + $0x188] sm:$0xff] %v5467
              %v5469 = vld [vmem:[%s5367 + $0x190] sm:$0xff]
              %5470 = vst [vmem:[%s5368 + $0x190] sm:$0xff] %v5469
              %v5471 = vld [vmem:[%s5367 + $0x198] sm:$0xff]
              %5472 = vst [vmem:[%s5368 + $0x198] sm:$0xff] %v5471
              %v5473 = vld [vmem:[%s5367 + $0x1a0] sm:$0xff]
              %5474 = vst [vmem:[%s5368 + $0x1a0] sm:$0xff] %v5473
              %v5475 = vld [vmem:[%s5367 + $0x1a8] sm:$0xff]
              %5476 = vst [vmem:[%s5368 + $0x1a8] sm:$0xff] %v5475
              %v5477 = vld [vmem:[%s5367 + $0x1b0] sm:$0xff]
              %5478 = vst [vmem:[%s5368 + $0x1b0] sm:$0xff] %v5477
              %v5479 = vld [vmem:[%s5367 + $0x1b8] sm:$0xff]
              %5480 = vst [vmem:[%s5368 + $0x1b8] sm:$0xff] %v5479
              %v5481 = vld [vmem:[%s5367 + $0x1c0] sm:$0xff]
              %5482 = vst [vmem:[%s5368 + $0x1c0] sm:$0xff] %v5481
              %v5483 = vld [vmem:[%s5367 + $0x1c8] sm:$0xff]
              %5484 = vst [vmem:[%s5368 + $0x1c8] sm:$0xff] %v5483
              %v5485 = vld [vmem:[%s5367 + $0x1d0] sm:$0xff]
              %5486 = vst [vmem:[%s5368 + $0x1d0] sm:$0xff] %v5485
              %v5487 = vld [vmem:[%s5367 + $0x1d8] sm:$0xff]
              %5488 = vst [vmem:[%s5368 + $0x1d8] sm:$0xff] %v5487
              %v5489 = vld [vmem:[%s5367 + $0x1e0] sm:$0xff]
              %5490 = vst [vmem:[%s5368 + $0x1e0] sm:$0xff] %v5489
              %v5491 = vld [vmem:[%s5367 + $0x1e8] sm:$0xff]
              %5492 = vst [vmem:[%s5368 + $0x1e8] sm:$0xff] %v5491
              %v5493 = vld [vmem:[%s5367 + $0x1f0] sm:$0xff]
              %5494 = vst [vmem:[%s5368 + $0x1f0] sm:$0xff] %v5493
              %v5495 = vld [vmem:[%s5367 + $0x1f8] sm:$0xff]
              %5496 = vst [vmem:[%s5368 + $0x1f8] sm:$0xff] %v5495
            $region89: #{orthogonal_gcn_forward.1} parent=83 // loop_footer
              %s5366 = sadd.s32 1, %s5362
            $region90: #{orthogonal_gcn_forward.1} parent=83 // loop_footer_branch
              %5361 = sbr.rel target = $region86
            $region91: #{orthogonal_gcn_forward.1} parent=83 // loop_exit
              _
          $region84: #{orthogonal_gcn_forward.1} parent=80 // pred_fallthru
            _
          // Predicated region
          $region92: #{orthogonal_gcn_forward.1} parent=80 // pred_check
            _
          $region93: #{orthogonal_gcn_forward.1} parent=80 // pred_check_branch
            %5498 = sbr.rel target = $region95
          $region94: #{orthogonal_gcn_forward.1} parent=80 // pred_region
            _
          $region95: #{orthogonal_gcn_forward.1} parent=80 // pred_fallthru
            _
          // Predicated region
          $region96: #{orthogonal_gcn_forward.1} parent=80 // pred_check
            _
          $region97: #{orthogonal_gcn_forward.1} parent=80 // pred_check_branch
            %5501 = sbr.rel (0) target = $region99
          $region98: #{orthogonal_gcn_forward.1} parent=80 // pred_region
            %5502 = vsyncadd [#allocation5], 8192
          $region99: #{orthogonal_gcn_forward.1} parent=80 // pred_fallthru
            _
          %s5503 = smul.u32 8, 32
          %s5504 = smul.u32 %s5503, 2
          %s5505 = sshll.u32 %s5504, 4
          %5506 = dma.done [#allocation5], %s5505
          // Predicated region
          $region100: #{orthogonal_gcn_forward.1} parent=80 // pred_check
            _
          $region101: #{orthogonal_gcn_forward.1} parent=80 // pred_check_branch
            %5508 = sbr.rel target = $region103
          $region102: #{orthogonal_gcn_forward.1} parent=80 // pred_region
            // Predicated region
            $region115: #{orthogonal_gcn_forward.1} parent=102 // pred_check
              _
            $region116: #{orthogonal_gcn_forward.1} parent=102 // pred_check_branch
              %5524 = sbr.rel (0) target = $region118
            $region117: #{orthogonal_gcn_forward.1} parent=102 // pred_region
              %s5526 = ssub.s32 4, 1
              loop: start=0, step=1, limit=1
              $region119: #{orthogonal_gcn_forward.1} parent=117 // loop_pre_header
                _
              $region120: #{orthogonal_gcn_forward.1} parent=117 // loop_header
                %s5528 = sphi 0, %s5532
                %p5529 = scmp.ge.s32.totalorder %s5528, 1
                %s5533 = sphi %s6, %s6
                %s5534 = sphi [#allocation8], [#allocation8]
              $region121: #{orthogonal_gcn_forward.1} parent=117 // loop_header_branch
                %5531 = sbr.rel (%p5529) target = $region125
              $region122: #{orthogonal_gcn_forward.1} parent=117 // loop_body
                %v5535 = vld [vmem:[%s5533] sm:%s5526]
                %5536 = vst [vmem:[%s5534] sm:%s5526] %v5535
              $region123: #{orthogonal_gcn_forward.1} parent=117 // loop_footer
                %s5532 = sadd.s32 1, %s5528
              $region124: #{orthogonal_gcn_forward.1} parent=117 // loop_footer_branch
                %5527 = sbr.rel target = $region120
              $region125: #{orthogonal_gcn_forward.1} parent=117 // loop_exit
                _
            $region118: #{orthogonal_gcn_forward.1} parent=102 // pred_fallthru
              _
          $region103: #{orthogonal_gcn_forward.1} parent=80 // pred_fallthru
            _
          // Predicated region
          $region104: #{orthogonal_gcn_forward.1} parent=80 // pred_check
            _
          $region105: #{orthogonal_gcn_forward.1} parent=80 // pred_check_branch
            %5510 = sbr.rel (0) target = $region107
          $region106: #{orthogonal_gcn_forward.1} parent=80 // pred_region
            %s5512 = ssub.s32 4, 1
            loop: start=0, step=1, limit=1
            $region108: #{orthogonal_gcn_forward.1} parent=106 // loop_pre_header
              _
            $region109: #{orthogonal_gcn_forward.1} parent=106 // loop_header
              %s5514 = sphi 0, %s5518
              %p5515 = scmp.ge.s32.totalorder %s5514, 1
              %s5519 = sphi %s6, %s6
              %s5520 = sphi [#allocation8], [#allocation8]
            $region110: #{orthogonal_gcn_forward.1} parent=106 // loop_header_branch
              %5517 = sbr.rel (%p5515) target = $region114
            $region111: #{orthogonal_gcn_forward.1} parent=106 // loop_body
              %v5521 = vld [vmem:[%s5519] sm:%s5512]
              %5522 = vst [vmem:[%s5520] sm:%s5512] %v5521
            $region112: #{orthogonal_gcn_forward.1} parent=106 // loop_footer
              %s5518 = sadd.s32 1, %s5514
            $region113: #{orthogonal_gcn_forward.1} parent=106 // loop_footer_branch
              %5513 = sbr.rel target = $region109
            $region114: #{orthogonal_gcn_forward.1} parent=106 // loop_exit
              _
          $region107: #{orthogonal_gcn_forward.1} parent=80 // pred_fallthru
            _
          // Predicated region
          $region126: #{orthogonal_gcn_forward.1} parent=80 // pred_check
            _
          $region127: #{orthogonal_gcn_forward.1} parent=80 // pred_check_branch
            %5539 = sbr.rel (0) target = $region129
          $region128: #{orthogonal_gcn_forward.1} parent=80 // pred_region
            %5540 = vsyncadd [#allocation5], 32
          $region129: #{orthogonal_gcn_forward.1} parent=80 // pred_fallthru
            _
          %s5541 = smul.u32 1, 2
          %s5542 = sshll.u32 %s5541, 4
          %5543 = dma.done [#allocation5], %s5542
          // Predicated region
          $region130: #{orthogonal_gcn_forward.1} parent=80 // pred_check
            _
          $region131: #{orthogonal_gcn_forward.1} parent=80 // pred_check_branch
            %5545 = sbr.rel (0) target = $region133
          $region132: #{orthogonal_gcn_forward.1} parent=80 // pred_region
            loop: start=0, step=1, limit=1
            $region134: #{orthogonal_gcn_forward.1} parent=132 // loop_pre_header
              _
            $region135: #{orthogonal_gcn_forward.1} parent=132 // loop_header
              %s5547 = sphi 0, %s5551
              %p5548 = scmp.ge.s32.totalorder %s5547, 1
              %s5552 = sphi %s7, %s7
              %s5553 = sphi [#allocation9], [#allocation9]
            $region136: #{orthogonal_gcn_forward.1} parent=132 // loop_header_branch
              %5550 = sbr.rel (%p5548) target = $region140
            $region137: #{orthogonal_gcn_forward.1} parent=132 // loop_body
              %v5554 = vld [vmem:[%s5552] sm:$0xff]
              %5555 = vst [vmem:[%s5553] sm:$0xff] %v5554
              %v5556 = vld [vmem:[%s5552 + $0x8] sm:$0xff]
              %5557 = vst [vmem:[%s5553 + $0x8] sm:$0xff] %v5556
              %v5558 = vld [vmem:[%s5552 + $0x10] sm:$0xff]
              %5559 = vst [vmem:[%s5553 + $0x10] sm:$0xff] %v5558
              %v5560 = vld [vmem:[%s5552 + $0x18] sm:$0xff]
              %5561 = vst [vmem:[%s5553 + $0x18] sm:$0xff] %v5560
              %v5562 = vld [vmem:[%s5552 + $0x20] sm:$0xff]
              %5563 = vst [vmem:[%s5553 + $0x20] sm:$0xff] %v5562
              %v5564 = vld [vmem:[%s5552 + $0x28] sm:$0xff]
              %5565 = vst [vmem:[%s5553 + $0x28] sm:$0xff] %v5564
              %v5566 = vld [vmem:[%s5552 + $0x30] sm:$0xff]
              %5567 = vst [vmem:[%s5553 + $0x30] sm:$0xff] %v5566
              %v5568 = vld [vmem:[%s5552 + $0x38] sm:$0xff]
              %5569 = vst [vmem:[%s5553 + $0x38] sm:$0xff] %v5568
              %v5570 = vld [vmem:[%s5552 + $0x40] sm:$0xff]
              %5571 = vst [vmem:[%s5553 + $0x40] sm:$0xff] %v5570
              %v5572 = vld [vmem:[%s5552 + $0x48] sm:$0xff]
              %5573 = vst [vmem:[%s5553 + $0x48] sm:$0xff] %v5572
              %v5574 = vld [vmem:[%s5552 + $0x50] sm:$0xff]
              %5575 = vst [vmem:[%s5553 + $0x50] sm:$0xff] %v5574
              %v5576 = vld [vmem:[%s5552 + $0x58] sm:$0xff]
              %5577 = vst [vmem:[%s5553 + $0x58] sm:$0xff] %v5576
              %v5578 = vld [vmem:[%s5552 + $0x60] sm:$0xff]
              %5579 = vst [vmem:[%s5553 + $0x60] sm:$0xff] %v5578
              %v5580 = vld [vmem:[%s5552 + $0x68] sm:$0xff]
              %5581 = vst [vmem:[%s5553 + $0x68] sm:$0xff] %v5580
              %v5582 = vld [vmem:[%s5552 + $0x70] sm:$0xff]
              %5583 = vst [vmem:[%s5553 + $0x70] sm:$0xff] %v5582
              %v5584 = vld [vmem:[%s5552 + $0x78] sm:$0xff]
              %5585 = vst [vmem:[%s5553 + $0x78] sm:$0xff] %v5584
              %v5586 = vld [vmem:[%s5552 + $0x80] sm:$0xff]
              %5587 = vst [vmem:[%s5553 + $0x80] sm:$0xff] %v5586
              %v5588 = vld [vmem:[%s5552 + $0x88] sm:$0xff]
              %5589 = vst [vmem:[%s5553 + $0x88] sm:$0xff] %v5588
              %v5590 = vld [vmem:[%s5552 + $0x90] sm:$0xff]
              %5591 = vst [vmem:[%s5553 + $0x90] sm:$0xff] %v5590
              %v5592 = vld [vmem:[%s5552 + $0x98] sm:$0xff]
              %5593 = vst [vmem:[%s5553 + $0x98] sm:$0xff] %v5592
              %v5594 = vld [vmem:[%s5552 + $0xa0] sm:$0xff]
              %5595 = vst [vmem:[%s5553 + $0xa0] sm:$0xff] %v5594
              %v5596 = vld [vmem:[%s5552 + $0xa8] sm:$0xff]
              %5597 = vst [vmem:[%s5553 + $0xa8] sm:$0xff] %v5596
              %v5598 = vld [vmem:[%s5552 + $0xb0] sm:$0xff]
              %5599 = vst [vmem:[%s5553 + $0xb0] sm:$0xff] %v5598
              %v5600 = vld [vmem:[%s5552 + $0xb8] sm:$0xff]
              %5601 = vst [vmem:[%s5553 + $0xb8] sm:$0xff] %v5600
              %v5602 = vld [vmem:[%s5552 + $0xc0] sm:$0xff]
              %5603 = vst [vmem:[%s5553 + $0xc0] sm:$0xff] %v5602
              %v5604 = vld [vmem:[%s5552 + $0xc8] sm:$0xff]
              %5605 = vst [vmem:[%s5553 + $0xc8] sm:$0xff] %v5604
              %v5606 = vld [vmem:[%s5552 + $0xd0] sm:$0xff]
              %5607 = vst [vmem:[%s5553 + $0xd0] sm:$0xff] %v5606
              %v5608 = vld [vmem:[%s5552 + $0xd8] sm:$0xff]
              %5609 = vst [vmem:[%s5553 + $0xd8] sm:$0xff] %v5608
              %v5610 = vld [vmem:[%s5552 + $0xe0] sm:$0xff]
              %5611 = vst [vmem:[%s5553 + $0xe0] sm:$0xff] %v5610
              %v5612 = vld [vmem:[%s5552 + $0xe8] sm:$0xff]
              %5613 = vst [vmem:[%s5553 + $0xe8] sm:$0xff] %v5612
              %v5614 = vld [vmem:[%s5552 + $0xf0] sm:$0xff]
              %5615 = vst [vmem:[%s5553 + $0xf0] sm:$0xff] %v5614
              %v5616 = vld [vmem:[%s5552 + $0xf8] sm:$0xff]
              %5617 = vst [vmem:[%s5553 + $0xf8] sm:$0xff] %v5616
            $region138: #{orthogonal_gcn_forward.1} parent=132 // loop_footer
              %s5551 = sadd.s32 1, %s5547
            $region139: #{orthogonal_gcn_forward.1} parent=132 // loop_footer_branch
              %5546 = sbr.rel target = $region135
            $region140: #{orthogonal_gcn_forward.1} parent=132 // loop_exit
              _
          $region133: #{orthogonal_gcn_forward.1} parent=80 // pred_fallthru
            _
          // Predicated region
          $region141: #{orthogonal_gcn_forward.1} parent=80 // pred_check
            _
          $region142: #{orthogonal_gcn_forward.1} parent=80 // pred_check_branch
            %5619 = sbr.rel target = $region144
          $region143: #{orthogonal_gcn_forward.1} parent=80 // pred_region
            _
          $region144: #{orthogonal_gcn_forward.1} parent=80 // pred_fallthru
            _
          // Predicated region
          $region145: #{orthogonal_gcn_forward.1} parent=80 // pred_check
            _
          $region146: #{orthogonal_gcn_forward.1} parent=80 // pred_check_branch
            %5622 = sbr.rel (0) target = $region148
          $region147: #{orthogonal_gcn_forward.1} parent=80 // pred_region
            %5623 = vsyncadd [#allocation5], 4096
          $region148: #{orthogonal_gcn_forward.1} parent=80 // pred_fallthru
            _
          %s5624 = smul.u32 256, 1
          %s5625 = sshll.u32 %s5624, 4
          %5626 = dma.done [#allocation5], %s5625
          // Predicated region
          $region149: #{orthogonal_gcn_forward.1} parent=80 // pred_check
            _
          $region150: #{orthogonal_gcn_forward.1} parent=80 // pred_check_branch
            %5628 = sbr.rel target = $region152
          $region151: #{orthogonal_gcn_forward.1} parent=80 // pred_region
            // Predicated region
            $region164: #{orthogonal_gcn_forward.1} parent=151 // pred_check
              _
            $region165: #{orthogonal_gcn_forward.1} parent=151 // pred_check_branch
              %5644 = sbr.rel (0) target = $region167
            $region166: #{orthogonal_gcn_forward.1} parent=151 // pred_region
              %s5646 = ssub.s32 2, 1
              loop: start=0, step=1, limit=1
              $region168: #{orthogonal_gcn_forward.1} parent=166 // loop_pre_header
                _
              $region169: #{orthogonal_gcn_forward.1} parent=166 // loop_header
                %s5648 = sphi 0, %s5652
                %p5649 = scmp.ge.s32.totalorder %s5648, 1
                %s5653 = sphi %s8, %s8
                %s5654 = sphi [#allocation10], [#allocation10]
              $region170: #{orthogonal_gcn_forward.1} parent=166 // loop_header_branch
                %5651 = sbr.rel (%p5649) target = $region174
              $region171: #{orthogonal_gcn_forward.1} parent=166 // loop_body
                %v5655 = vld [vmem:[%s5653] sm:%s5646]
                %5656 = vst [vmem:[%s5654] sm:%s5646] %v5655
              $region172: #{orthogonal_gcn_forward.1} parent=166 // loop_footer
                %s5652 = sadd.s32 1, %s5648
              $region173: #{orthogonal_gcn_forward.1} parent=166 // loop_footer_branch
                %5647 = sbr.rel target = $region169
              $region174: #{orthogonal_gcn_forward.1} parent=166 // loop_exit
                _
            $region167: #{orthogonal_gcn_forward.1} parent=151 // pred_fallthru
              _
          $region152: #{orthogonal_gcn_forward.1} parent=80 // pred_fallthru
            _
          // Predicated region
          $region153: #{orthogonal_gcn_forward.1} parent=80 // pred_check
            _
          $region154: #{orthogonal_gcn_forward.1} parent=80 // pred_check_branch
            %5630 = sbr.rel (0) target = $region156
          $region155: #{orthogonal_gcn_forward.1} parent=80 // pred_region
            %s5632 = ssub.s32 2, 1
            loop: start=0, step=1, limit=1
            $region157: #{orthogonal_gcn_forward.1} parent=155 // loop_pre_header
              _
            $region158: #{orthogonal_gcn_forward.1} parent=155 // loop_header
              %s5634 = sphi 0, %s5638
              %p5635 = scmp.ge.s32.totalorder %s5634, 1
              %s5639 = sphi %s8, %s8
              %s5640 = sphi [#allocation10], [#allocation10]
            $region159: #{orthogonal_gcn_forward.1} parent=155 // loop_header_branch
              %5637 = sbr.rel (%p5635) target = $region163
            $region160: #{orthogonal_gcn_forward.1} parent=155 // loop_body
              %v5641 = vld [vmem:[%s5639] sm:%s5632]
              %5642 = vst [vmem:[%s5640] sm:%s5632] %v5641
            $region161: #{orthogonal_gcn_forward.1} parent=155 // loop_footer
              %s5638 = sadd.s32 1, %s5634
            $region162: #{orthogonal_gcn_forward.1} parent=155 // loop_footer_branch
              %5633 = sbr.rel target = $region158
            $region163: #{orthogonal_gcn_forward.1} parent=155 // loop_exit
              _
          $region156: #{orthogonal_gcn_forward.1} parent=80 // pred_fallthru
            _
          // Predicated region
          $region175: #{orthogonal_gcn_forward.1} parent=80 // pred_check
            _
          $region176: #{orthogonal_gcn_forward.1} parent=80 // pred_check_branch
            %5659 = sbr.rel (0) target = $region178
          $region177: #{orthogonal_gcn_forward.1} parent=80 // pred_region
            %5660 = vsyncadd [#allocation5], 16
          $region178: #{orthogonal_gcn_forward.1} parent=80 // pred_fallthru
            _
          %s5661 = smul.u32 1, 1
          %s5662 = sshll.u32 %s5661, 4
          %5663 = dma.done [#allocation5], %s5662
          %v5664 = vld [vmem:[#allocation3] sm:$0xff]
          %v5665 = vld [vmem:[#allocation3 + $0x8] sm:$0xff]
          %v5666 = vld [vmem:[#allocation7] sm:$0xff]
          %v5667 = vld [vmem:[#allocation7 + $0x8] sm:$0xff]
          %v5668 = vld [vmem:[#allocation7 + $0x10] sm:$0xff]
          %v5669 = vld [vmem:[#allocation7 + $0x18] sm:$0xff]
          %v5670 = vld [vmem:[#allocation7 + $0x20] sm:$0xff]
          %v5671 = vld [vmem:[#allocation7 + $0x28] sm:$0xff]
          %v5672 = vld [vmem:[#allocation7 + $0x30] sm:$0xff]
          %v5673 = vld [vmem:[#allocation7 + $0x38] sm:$0xff]
          %v5674 = vld [vmem:[#allocation7 + $0x40] sm:$0xff]
          %v5675 = vld [vmem:[#allocation7 + $0x48] sm:$0xff]
          %v5676 = vld [vmem:[#allocation7 + $0x50] sm:$0xff]
          %v5677 = vld [vmem:[#allocation7 + $0x58] sm:$0xff]
          %v5678 = vld [vmem:[#allocation7 + $0x60] sm:$0xff]
          %v5679 = vld [vmem:[#allocation7 + $0x68] sm:$0xff]
          %v5680 = vld [vmem:[#allocation7 + $0x70] sm:$0xff]
          %v5681 = vld [vmem:[#allocation7 + $0x78] sm:$0xff]
          %v5682 = vld [vmem:[#allocation7 + $0x80] sm:$0xff]
          %v5683 = vld [vmem:[#allocation7 + $0x88] sm:$0xff]
          %v5684 = vld [vmem:[#allocation7 + $0x90] sm:$0xff]
          %v5685 = vld [vmem:[#allocation7 + $0x98] sm:$0xff]
          %v5686 = vld [vmem:[#allocation7 + $0xa0] sm:$0xff]
          %v5687 = vld [vmem:[#allocation7 + $0xa8] sm:$0xff]
          %v5688 = vld [vmem:[#allocation7 + $0xb0] sm:$0xff]
          %v5689 = vld [vmem:[#allocation7 + $0xb8] sm:$0xff]
          %v5690 = vld [vmem:[#allocation7 + $0xc0] sm:$0xff]
          %v5691 = vld [vmem:[#allocation7 + $0xc8] sm:$0xff]
          %v5692 = vld [vmem:[#allocation7 + $0xd0] sm:$0xff]
          %v5693 = vld [vmem:[#allocation7 + $0xd8] sm:$0xff]
          %v5694 = vld [vmem:[#allocation7 + $0xe0] sm:$0xff]
          %v5695 = vld [vmem:[#allocation7 + $0xe8] sm:$0xff]
          %v5696 = vld [vmem:[#allocation7 + $0xf0] sm:$0xff]
          %v5697 = vld [vmem:[#allocation7 + $0xf8] sm:$0xff]
          %v5698 = vld [vmem:[#allocation7 + $0x100] sm:$0xff]
          %v5699 = vld [vmem:[#allocation7 + $0x108] sm:$0xff]
          %v5700 = vld [vmem:[#allocation7 + $0x110] sm:$0xff]
          %v5701 = vld [vmem:[#allocation7 + $0x118] sm:$0xff]
          %v5702 = vld [vmem:[#allocation7 + $0x120] sm:$0xff]
          %v5703 = vld [vmem:[#allocation7 + $0x128] sm:$0xff]
          %v5704 = vld [vmem:[#allocation7 + $0x130] sm:$0xff]
          %v5705 = vld [vmem:[#allocation7 + $0x138] sm:$0xff]
          %v5706 = vld [vmem:[#allocation7 + $0x140] sm:$0xff]
          %v5707 = vld [vmem:[#allocation7 + $0x148] sm:$0xff]
          %v5708 = vld [vmem:[#allocation7 + $0x150] sm:$0xff]
          %v5709 = vld [vmem:[#allocation7 + $0x158] sm:$0xff]
          %v5710 = vld [vmem:[#allocation7 + $0x160] sm:$0xff]
          %v5711 = vld [vmem:[#allocation7 + $0x168] sm:$0xff]
          %v5712 = vld [vmem:[#allocation7 + $0x170] sm:$0xff]
          %v5713 = vld [vmem:[#allocation7 + $0x178] sm:$0xff]
          %v5714 = vld [vmem:[#allocation7 + $0x180] sm:$0xff]
          %v5715 = vld [vmem:[#allocation7 + $0x188] sm:$0xff]
          %v5716 = vld [vmem:[#allocation7 + $0x190] sm:$0xff]
          %v5717 = vld [vmem:[#allocation7 + $0x198] sm:$0xff]
          %v5718 = vld [vmem:[#allocation7 + $0x1a0] sm:$0xff]
          %v5719 = vld [vmem:[#allocation7 + $0x1a8] sm:$0xff]
          %v5720 = vld [vmem:[#allocation7 + $0x1b0] sm:$0xff]
          %v5721 = vld [vmem:[#allocation7 + $0x1b8] sm:$0xff]
          %v5722 = vld [vmem:[#allocation7 + $0x1c0] sm:$0xff]
          %v5723 = vld [vmem:[#allocation7 + $0x1c8] sm:$0xff]
          %v5724 = vld [vmem:[#allocation7 + $0x1d0] sm:$0xff]
          %v5725 = vld [vmem:[#allocation7 + $0x1d8] sm:$0xff]
          %v5726 = vld [vmem:[#allocation7 + $0x1e0] sm:$0xff]
          %v5727 = vld [vmem:[#allocation7 + $0x1e8] sm:$0xff]
          %v5728 = vld [vmem:[#allocation7 + $0x1f0] sm:$0xff]
          %v5729 = vld [vmem:[#allocation7 + $0x1f8] sm:$0xff]
          %v5730 = vld [vmem:[#allocation8] sm:$0x3]
          %v5732 = vperm.slane %v5730, 0
          %v5733 = vperm.slane %v5730, 1
          %5736 = vmatpush.msra.mxu0 %v5696
          %5737 = vmatpush.msra.mxu0 %v5694
          %5738 = vmatpush.msra.mxu0 %v5692
          %5739 = vmatpush.msra.mxu0 %v5690
          %5740 = vmatpush.msra.mxu0 %v5688
          %5741 = vmatpush.msra.mxu0 %v5686
          %5742 = vmatpush.msra.mxu0 %v5684
          %5743 = vmatpush.msra.mxu0 %v5682
          %5744 = vmatpush.msra.mxu0 %v5680
          %5745 = vmatpush.msra.mxu0 %v5678
          %5746 = vmatpush.msra.mxu0 %v5676
          %5747 = vmatpush.msra.mxu0 %v5674
          %5748 = vmatpush.msra.mxu0 %v5672
          %5749 = vmatpush.msra.mxu0 %v5670
          %5750 = vmatpush.msra.mxu0 %v5668
          %5751 = vmatpush.msra.mxu0 %v5666
          %5752 = vmatmul.f32.gmra.mxu0 %v5664
          %v5753 = vpop.f32.mrf.mxu0
          %v5754 = vadd.f32 %v5732, %v5753
          %5755 = vdwg.mxu0
          %5756 = vmatpush.msra.mxu0 %v5728
          %5757 = vmatpush.msra.mxu0 %v5726
          %5758 = vmatpush.msra.mxu0 %v5724
          %5759 = vmatpush.msra.mxu0 %v5722
          %5760 = vmatpush.msra.mxu0 %v5720
          %5761 = vmatpush.msra.mxu0 %v5718
          %5762 = vmatpush.msra.mxu0 %v5716
          %5763 = vmatpush.msra.mxu0 %v5714
          %5764 = vmatpush.msra.mxu0 %v5712
          %5765 = vmatpush.msra.mxu0 %v5710
          %5766 = vmatpush.msra.mxu0 %v5708
          %5767 = vmatpush.msra.mxu0 %v5706
          %5768 = vmatpush.msra.mxu0 %v5704
          %5769 = vmatpush.msra.mxu0 %v5702
          %5770 = vmatpush.msra.mxu0 %v5700
          %5771 = vmatpush.msra.mxu0 %v5698
          %5772 = vmatmul.f32.gmra.mxu0 %v5665
          %v5773 = vpop.f32.mrf.mxu0
          %v5774 = vadd.f32 %v5754, %v5773
          %5775 = vdwg.mxu0
          %5776 = vmatpush.msra.mxu0 %v5697
          %5777 = vmatpush.msra.mxu0 %v5695
          %5778 = vmatpush.msra.mxu0 %v5693
          %5779 = vmatpush.msra.mxu0 %v5691
          %5780 = vmatpush.msra.mxu0 %v5689
          %5781 = vmatpush.msra.mxu0 %v5687
          %5782 = vmatpush.msra.mxu0 %v5685
          %5783 = vmatpush.msra.mxu0 %v5683
          %5784 = vmatpush.msra.mxu0 %v5681
          %5785 = vmatpush.msra.mxu0 %v5679
          %5786 = vmatpush.msra.mxu0 %v5677
          %5787 = vmatpush.msra.mxu0 %v5675
          %5788 = vmatpush.msra.mxu0 %v5673
          %5789 = vmatpush.msra.mxu0 %v5671
          %5790 = vmatpush.msra.mxu0 %v5669
          %5791 = vmatpush.msra.mxu0 %v5667
          %5792 = vmatmul.f32.gmra.mxu0 %v5664
          %v5793 = vpop.f32.mrf.mxu0
          %v5794 = vadd.f32 %v5733, %v5793
          %5795 = vdwg.mxu0
          %5796 = vmatpush.msra.mxu0 %v5729
          %5797 = vmatpush.msra.mxu0 %v5727
          %5798 = vmatpush.msra.mxu0 %v5725
          %5799 = vmatpush.msra.mxu0 %v5723
          %5800 = vmatpush.msra.mxu0 %v5721
          %5801 = vmatpush.msra.mxu0 %v5719
          %5802 = vmatpush.msra.mxu0 %v5717
          %5803 = vmatpush.msra.mxu0 %v5715
          %5804 = vmatpush.msra.mxu0 %v5713
          %5805 = vmatpush.msra.mxu0 %v5711
          %5806 = vmatpush.msra.mxu0 %v5709
          %5807 = vmatpush.msra.mxu0 %v5707
          %5808 = vmatpush.msra.mxu0 %v5705
          %5809 = vmatpush.msra.mxu0 %v5703
          %5810 = vmatpush.msra.mxu0 %v5701
          %5811 = vmatpush.msra.mxu0 %v5699
          %5812 = vmatmul.f32.gmra.mxu0 %v5665
          %v5813 = vpop.f32.mrf.mxu0
          %v5814 = vadd.f32 %v5794, %v5813
          %5815 = vdwg.mxu0
          %v5816 = vmax.f32 %v5774, 0.0
          %v5817 = vmax.f32 %v5814, 0.0
          %v5818 = vld [vmem:[#allocation9] sm:$0xff]
          %v5819 = vld [vmem:[#allocation9 + $0x8] sm:$0xff]
          %v5820 = vld [vmem:[#allocation9 + $0x10] sm:$0xff]
          %v5821 = vld [vmem:[#allocation9 + $0x18] sm:$0xff]
          %v5822 = vld [vmem:[#allocation9 + $0x20] sm:$0xff]
          %v5823 = vld [vmem:[#allocation9 + $0x28] sm:$0xff]
          %v5824 = vld [vmem:[#allocation9 + $0x30] sm:$0xff]
          %v5825 = vld [vmem:[#allocation9 + $0x38] sm:$0xff]
          %v5826 = vld [vmem:[#allocation9 + $0x40] sm:$0xff]
          %v5827 = vld [vmem:[#allocation9 + $0x48] sm:$0xff]
          %v5828 = vld [vmem:[#allocation9 + $0x50] sm:$0xff]
          %v5829 = vld [vmem:[#allocation9 + $0x58] sm:$0xff]
          %v5830 = vld [vmem:[#allocation9 + $0x60] sm:$0xff]
          %v5831 = vld [vmem:[#allocation9 + $0x68] sm:$0xff]
          %v5832 = vld [vmem:[#allocation9 + $0x70] sm:$0xff]
          %v5833 = vld [vmem:[#allocation9 + $0x78] sm:$0xff]
          %v5834 = vld [vmem:[#allocation9 + $0x80] sm:$0xff]
          %v5835 = vld [vmem:[#allocation9 + $0x88] sm:$0xff]
          %v5836 = vld [vmem:[#allocation9 + $0x90] sm:$0xff]
          %v5837 = vld [vmem:[#allocation9 + $0x98] sm:$0xff]
          %v5838 = vld [vmem:[#allocation9 + $0xa0] sm:$0xff]
          %v5839 = vld [vmem:[#allocation9 + $0xa8] sm:$0xff]
          %v5840 = vld [vmem:[#allocation9 + $0xb0] sm:$0xff]
          %v5841 = vld [vmem:[#allocation9 + $0xb8] sm:$0xff]
          %v5842 = vld [vmem:[#allocation9 + $0xc0] sm:$0xff]
          %v5843 = vld [vmem:[#allocation9 + $0xc8] sm:$0xff]
          %v5844 = vld [vmem:[#allocation9 + $0xd0] sm:$0xff]
          %v5845 = vld [vmem:[#allocation9 + $0xd8] sm:$0xff]
          %v5846 = vld [vmem:[#allocation9 + $0xe0] sm:$0xff]
          %v5847 = vld [vmem:[#allocation9 + $0xe8] sm:$0xff]
          %v5848 = vld [vmem:[#allocation9 + $0xf0] sm:$0xff]
          %v5849 = vld [vmem:[#allocation9 + $0xf8] sm:$0xff]
          %v5850 = vld [vmem:[#allocation10] sm:$0x1]
          %v5852 = vperm.slane %v5850, 0
          %5854 = vmatpush.msra.mxu0 %v5833
          %5855 = vmatpush.msra.mxu0 %v5832
          %5856 = vmatpush.msra.mxu0 %v5831
          %5857 = vmatpush.msra.mxu0 %v5830
          %5858 = vmatpush.msra.mxu0 %v5829
          %5859 = vmatpush.msra.mxu0 %v5828
          %5860 = vmatpush.msra.mxu0 %v5827
          %5861 = vmatpush.msra.mxu0 %v5826
          %5862 = vmatpush.msra.mxu0 %v5825
          %5863 = vmatpush.msra.mxu0 %v5824
          %5864 = vmatpush.msra.mxu0 %v5823
          %5865 = vmatpush.msra.mxu0 %v5822
          %5866 = vmatpush.msra.mxu0 %v5821
          %5867 = vmatpush.msra.mxu0 %v5820
          %5868 = vmatpush.msra.mxu0 %v5819
          %5869 = vmatpush.msra.mxu0 %v5818
          %5870 = vmatmul.f32.gmra.mxu0 %v5816
          %v5871 = vpop.f32.mrf.mxu0
          %v5872 = vadd.f32 %v5852, %v5871
          %5873 = vdwg.mxu0
          %5874 = vmatpush.msra.mxu0 %v5849
          %5875 = vmatpush.msra.mxu0 %v5848
          %5876 = vmatpush.msra.mxu0 %v5847
          %5877 = vmatpush.msra.mxu0 %v5846
          %5878 = vmatpush.msra.mxu0 %v5845
          %5879 = vmatpush.msra.mxu0 %v5844
          %5880 = vmatpush.msra.mxu0 %v5843
          %5881 = vmatpush.msra.mxu0 %v5842
          %5882 = vmatpush.msra.mxu0 %v5841
          %5883 = vmatpush.msra.mxu0 %v5840
          %5884 = vmatpush.msra.mxu0 %v5839
          %5885 = vmatpush.msra.mxu0 %v5838
          %5886 = vmatpush.msra.mxu0 %v5837
          %5887 = vmatpush.msra.mxu0 %v5836
          %5888 = vmatpush.msra.mxu0 %v5835
          %5889 = vmatpush.msra.mxu0 %v5834
          %5890 = vmatmul.f32.gmra.mxu0 %v5817
          %v5891 = vpop.f32.mrf.mxu0
          %v5892 = vadd.f32 %v5872, %v5891
          %5893 = vdwg.mxu0
          %5894 = vst [vmem:[%s9] sm:$0xff] %v5892
      $region79: #{orthogonal_gcn_forward.1} parent=35 // pred_fallthru
        _
      // Predicated region
      $region179: #{orthogonal_gcn_forward.1} parent=35 // pred_check
        %p5895 = pneg %p162
      $region180: #{orthogonal_gcn_forward.1} parent=35 // pred_check_branch
        %5897 = sbr.rel (%p5895) target = $region182
      $region181: #{orthogonal_gcn_forward.1} parent=35 // pred_region
        _
      $region182: #{orthogonal_gcn_forward.1} parent=35 // pred_fallthru
        _
      // Predicated region
      $region183: #{orthogonal_gcn_forward.1} parent=35 // pred_check
        %p5898 = pneg %p162
      $region184: #{orthogonal_gcn_forward.1} parent=35 // pred_check_branch
        %5900 = sbr.rel (%p5898) target = $region186
      $region185: #{orthogonal_gcn_forward.1} parent=35 // pred_region
        _
      $region186: #{orthogonal_gcn_forward.1} parent=35 // pred_fallthru
        _
    $region36: #{orthogonal_gcn_forward.1} parent=5 // pred_fallthru
      _
    %p5901 = scmp.le.s32.totalorder 2, %s15
    // Predicated region
    $region187: #{orthogonal_gcn_forward.1} parent=5 // pred_check
      %p5902 = pneg %p5901
    $region188: #{orthogonal_gcn_forward.1} parent=5 // pred_check_branch
      %5904 = sbr.rel (%p5902) target = $region190
    $region189: #{orthogonal_gcn_forward.1} parent=5 // pred_region
      %s5905 = ssub.s32 %s15, 2
    $region190: #{orthogonal_gcn_forward.1} parent=5 // pred_fallthru
      _
  $region6: #{orthogonal_gcn_forward.1} parent=0 // loop_footer
    %s19 = sadd.s32 1, %s15
  $region7: #{orthogonal_gcn_forward.1} parent=0 // loop_footer_branch
    %14 = sbr.rel target = $region3
  $region8: #{orthogonal_gcn_forward.1} parent=0 // loop_exit
    _
  %5906 = vsyncmov [#allocation5]
  %s5907 = vpop.sfrf %5906
  %p5908 = scmp.eq.s32.totalorder %s5907, 0
  %p5909 = pneg %p5908
  %5911 = shalt.err (%p5909)

</llo_original>
